<compile_context>
chip_gen: v7x
topology: tpu7x:2x2x1
jax: 0.10.0
libtpu: 0.0.40
codegen_flags: <defaults>
</compile_context>

<pallas_src>
import jax
import jax.numpy as jnp
from jax.experimental import pallas as pl
from jax.experimental.pallas import tpu as pltpu


def _ru8(n: int) -> int:
    """Round up to a multiple of 8 (sublane alignment for packed rows)."""
    return (n + 7) // 8 * 8


def _lstm_fused_kernel(x_ref, w_ref, out_ref):
    """x_ref: (T, B, D) time-major input.
    w_ref: packed constants (rows, 4H):
        rows [0:D)                -> W_ih^T           (D, 4H)
        rows [ru8(D):ru8(D)+H)    -> W_hh^T           (H, 4H)
        row  ru8(D)+ru8(H)        -> bias_ih+bias_hh  (4H,)
        row  ru8(D)+ru8(H)+8      -> [fc_w (H) | fc_b | 0...]
    out_ref: (B, 1) final regression output.
    """
    T, B, D = x_ref.shape
    G = w_ref.shape[1]          # 4H
    H = G // 4
    off_hh = _ru8(D)
    off_b = off_hh + _ru8(H)
    off_fc = off_b + 8

    w_ih = w_ref[0:D, :]                      # (D, 4H)
    w_hh = w_ref[off_hh:off_hh + H, :]        # (H, 4H)
    bias = w_ref[off_b:off_b + 1, :]          # (1, 4H)
    fc_row = w_ref[off_fc:off_fc + 1, :]      # (1, 4H)
    fc_w = fc_row[:, 0:H]                     # (1, H)
    fc_b = fc_row[:, H:H + 1]                 # (1, 1)

    # ---- Hoisted input projection: ONE MXU matmul, already time-major ----
    x2 = x_ref[...].reshape(T * B, D)
    xw = (jnp.dot(x2, w_ih, preferred_element_type=jnp.float32) + bias
          ).reshape(T, B, G)                  # (T, B, 4H)

    h = jnp.zeros((B, H), jnp.float32)
    c = jnp.zeros((B, H), jnp.float32)

    # ---- Serial recurrence (T small & static -> unrolled Python loop) ----
    # PyTorch gate order [i, f, g, o]; all math stays f32.
    # TODO(synk): for large T switch to a T-tiled grid / lax.fori_loop with
    # h/c carried in VMEM scratch instead of full unroll + resident xw.
    for t in range(T):
        gates = xw[t] + jnp.dot(h, w_hh, preferred_element_type=jnp.float32)
        sig = jax.nn.sigmoid(gates)           # one EUP pass over all 4H lanes
        g_g = jnp.tanh(gates[:, 2 * H:3 * H])  # tanh only on the g-gate slice
        i_g = sig[:, 0:H]
        f_g = sig[:, H:2 * H]
        o_g = sig[:, 3 * H:4 * H]
        c = f_g * c + i_g * g_g
        h = o_g * jnp.tanh(c)

    # ---- Fused fc epilogue: (B, H) x (H,) -> (B, 1) + bias ----
    out_ref[...] = jnp.sum(h * fc_w, axis=1, keepdims=True) + fc_b


def prepare_params(params):
    """Pack all constant operands into one contiguous f32 array (one DMA)."""
    w_ih_t = params["weight_ih_l0"].T.astype(jnp.float32)   # (D, 4H)
    w_hh_t = params["weight_hh_l0"].T.astype(jnp.float32)   # (H, 4H)
    D = w_ih_t.shape[0]
    H = w_hh_t.shape[0]
    G = 4 * H
    off_hh = _ru8(D)
    off_b = off_hh + _ru8(H)
    off_fc = off_b + 8
    rows = off_fc + 8

    w = jnp.zeros((rows, G), jnp.float32)
    w = w.at[0:D, :].set(w_ih_t)
    w = w.at[off_hh:off_hh + H, :].set(w_hh_t)
    w = w.at[off_b, :].set(params["bias_ih_l0"] + params["bias_hh_l0"])
    w = w.at[off_fc, 0:H].set(params["fc_weight"][0])
    w = w.at[off_fc, H].set(params["fc_bias"][0])
    return w


@jax.jit
def lstm_model_forward(x, w_packed):
    """x: (B, T, D) float32 (batch_first, like the PyTorch module).
    w_packed: output of prepare_params(). Returns (B, 1)."""
    B, T, D = x.shape
    # Tiny one-off transpose to time-major so the kernel's per-step gate fetch
    # is a leading-axis index (fused in the same jit executable; ~1 KiB here).
    x_tm = jnp.transpose(x, (1, 0, 2))        # (T, B, D)

    return pl.pallas_call(
        _lstm_fused_kernel,
        out_shape=jax.ShapeDtypeStruct((B, 1), jnp.float32),
        in_specs=[
            pl.BlockSpec(memory_space=pltpu.MemorySpace.VMEM),  # x_tm
            pl.BlockSpec(memory_space=pltpu.MemorySpace.VMEM),  # packed consts
        ],
        out_specs=pl.BlockSpec(memory_space=pltpu.MemorySpace.VMEM),
    )(x_tm, w_packed)


def lstm_model_reference(x, params):
    """Pure-JAX reference mirroring torch.nn.LSTM (1 layer) + Linear."""
    B, T, D = x.shape
    H = params["weight_hh_l0"].shape[1]
    w_ih = params["weight_ih_l0"].T
    w_hh = params["weight_hh_l0"].T
    b = params["bias_ih_l0"] + params["bias_hh_l0"]
    hi = jax.lax.Precision.HIGHEST

    def step(carry, x_t):
        h, c = carry
        gates = (jnp.dot(x_t, w_ih, precision=hi)
                 + jnp.dot(h, w_hh, precision=hi) + b)
        i = jax.nn.sigmoid(gates[:, 0 * H:1 * H])
        f = jax.nn.sigmoid(gates[:, 1 * H:2 * H])
        g = jnp.tanh(gates[:, 2 * H:3 * H])
        o = jax.nn.sigmoid(gates[:, 3 * H:4 * H])
        c = f * c + i * g
        h = o * jnp.tanh(c)
        return (h, c), None

    h0 = jnp.zeros((B, H), jnp.float32)
    c0 = jnp.zeros((B, H), jnp.float32)
    (h_T, _), _ = jax.lax.scan(step, (h0, c0), jnp.transpose(x, (1, 0, 2)))
    return jnp.dot(h_T, params["fc_weight"].T, precision=hi) + params["fc_bias"]


def init_params(key, input_size, hidden_size):
    """Deterministic init mimicking PyTorch's U(-1/sqrt(H), 1/sqrt(H))."""
    H, D = hidden_size, input_size
    k = 1.0 / jnp.sqrt(jnp.float32(H))
    keys = jax.random.split(key, 6)
    u = lambda kk, shp: jax.random.uniform(kk, shp, jnp.float32, -k, k)
    return {
        "weight_ih_l0": u(keys[0], (4 * H, D)),
        "weight_hh_l0": u(keys[1], (4 * H, H)),
        "bias_ih_l0": u(keys[2], (4 * H,)),
        "bias_hh_l0": u(keys[3], (4 * H,)),
        "fc_weight": u(keys[4], (1, H)),
        "fc_bias": u(keys[5], (1,)),
    }


if __name__ == "__main__":
    jax.config.update("jax_default_matmul_precision", "highest")

    B, T, D, H = 2, 8, 16, 32

    key = jax.random.PRNGKey(0)
    k_x, k_p = jax.random.split(key)
    x = jax.random.normal(k_x, (B, T, D), jnp.float32)
    params = init_params(k_p, input_size=D, hidden_size=H)

    w_packed = prepare_params(params)          # packed once, reused per call

    out = jax.block_until_ready(lstm_model_forward(x, w_packed))
    ref = jax.block_until_ready(lstm_model_reference(x, params))

    assert out.shape == (B, 1), out.shape
    assert jnp.allclose(out, ref, atol=1e-4, rtol=1e-4), (out, ref)
    print("KERNEL_OK")
</pallas_src>

<mosaic_0001>
module attributes {stable_mosaic.version = 11 : i64} {
  func.func @_lstm_fused_kernel(%arg0: memref<8x2x16xf32, #tpu.memory_space<vmem>>, %arg1: memref<64x128xf32, #tpu.memory_space<vmem>>, %arg2: memref<2x1xf32, #tpu.memory_space<vmem>>) attributes {dimension_semantics = [], scalar_prefetch = 0 : i64, scratch_operands = 0 : i64, tpu.core_type = #tpu.core_type<tc>} {
    %c0 = arith.constant 0 : index
    %c0_0 = arith.constant 0 : index
    %0 = vector.load %arg1[%c0, %c0_0] : memref<64x128xf32, #tpu.memory_space<vmem>>, vector<16x128xf32>
    %c16 = arith.constant 16 : index
    %c0_1 = arith.constant 0 : index
    %1 = vector.load %arg1[%c16, %c0_1] : memref<64x128xf32, #tpu.memory_space<vmem>>, vector<32x128xf32>
    %c48 = arith.constant 48 : index
    %c0_2 = arith.constant 0 : index
    %2 = vector.load %arg1[%c48, %c0_2] : memref<64x128xf32, #tpu.memory_space<vmem>>, vector<1x128xf32>
    %c56 = arith.constant 56 : index
    %c0_3 = arith.constant 0 : index
    %3 = vector.load %arg1[%c56, %c0_3] : memref<64x128xf32, #tpu.memory_space<vmem>>, vector<1x128xf32>
    %4 = vector.extract_strided_slice %3 {offsets = [0, 0], sizes = [1, 32], strides = [1, 1]} : vector<1x128xf32> to vector<1x32xf32>
    %5 = vector.extract_strided_slice %3 {offsets = [0, 32], sizes = [1, 1], strides = [1, 1]} : vector<1x128xf32> to vector<1x1xf32>
    %c0_4 = arith.constant 0 : index
    %c0_5 = arith.constant 0 : index
    %c0_6 = arith.constant 0 : index
    %6 = vector.load %arg0[%c0_4, %c0_5, %c0_6] : memref<8x2x16xf32, #tpu.memory_space<vmem>>, vector<8x2x16xf32>
    %7 = vector.shape_cast %6 : vector<8x2x16xf32> to vector<16x16xf32>
    %cst = arith.constant dense<0.000000e+00> : vector<16x128xf32>
    %8 = tpu.matmul %7, %0, %cst {dimension_numbers = #tpu.dot_dimension_numbers<[1], [0], [0], [1], [0, 0, 1, 1], [], []>, precision = #tpu.contract_precision<fp32>} : vector<16x16xf32>, vector<16x128xf32>, vector<16x128xf32> -> vector<16x128xf32>
    %9 = vector.broadcast %2 : vector<1x128xf32> to vector<16x128xf32>
    %10 = arith.addf %8, %9 : vector<16x128xf32>
    %11 = vector.shape_cast %10 : vector<16x128xf32> to vector<8x2x128xf32>
    %cst_7 = arith.constant 0.000000e+00 : f32
    %12 = vector.broadcast %cst_7 : f32 to vector<2x32xf32>
    %cst_8 = arith.constant 0.000000e+00 : f32
    %13 = vector.broadcast %cst_8 : f32 to vector<2x32xf32>
    %14 = vector.extract_strided_slice %11 {offsets = [0, 0, 0], sizes = [1, 2, 128], strides = [1, 1, 1]} : vector<8x2x128xf32> to vector<1x2x128xf32>
    %15 = vector.shape_cast %14 : vector<1x2x128xf32> to vector<2x128xf32>
    %cst_9 = arith.constant dense<0.000000e+00> : vector<2x128xf32>
    %16 = tpu.matmul %12, %1, %cst_9 {dimension_numbers = #tpu.dot_dimension_numbers<[1], [0], [0], [1], [0, 0, 1, 1], [], []>, precision = #tpu.contract_precision<fp32>} : vector<2x32xf32>, vector<32x128xf32>, vector<2x128xf32> -> vector<2x128xf32>
    %17 = arith.addf %15, %16 : vector<2x128xf32>
    %18 = arith.negf %17 : vector<2x128xf32>
    %19 = math.exp %18 : vector<2x128xf32>
    %cst_10 = arith.constant 1.000000e+00 : f32
    %20 = vector.broadcast %cst_10 : f32 to vector<2x128xf32>
    %21 = arith.addf %20, %19 : vector<2x128xf32>
    %22 = arith.divf %20, %21 : vector<2x128xf32>
    %23 = vector.extract_strided_slice %17 {offsets = [0, 64], sizes = [2, 32], strides = [1, 1]} : vector<2x128xf32> to vector<2x32xf32>
    %24 = math.tanh %23 : vector<2x32xf32>
    %25 = vector.extract_strided_slice %22 {offsets = [0, 0], sizes = [2, 32], strides = [1, 1]} : vector<2x128xf32> to vector<2x32xf32>
    %26 = vector.extract_strided_slice %22 {offsets = [0, 32], sizes = [2, 32], strides = [1, 1]} : vector<2x128xf32> to vector<2x32xf32>
    %27 = vector.extract_strided_slice %22 {offsets = [0, 96], sizes = [2, 32], strides = [1, 1]} : vector<2x128xf32> to vector<2x32xf32>
    %28 = arith.mulf %26, %13 : vector<2x32xf32>
    %29 = arith.mulf %25, %24 : vector<2x32xf32>
    %30 = arith.addf %28, %29 : vector<2x32xf32>
    %31 = math.tanh %30 : vector<2x32xf32>
    %32 = arith.mulf %27, %31 : vector<2x32xf32>
    %33 = vector.extract_strided_slice %11 {offsets = [1, 0, 0], sizes = [1, 2, 128], strides = [1, 1, 1]} : vector<8x2x128xf32> to vector<1x2x128xf32>
    %34 = vector.shape_cast %33 : vector<1x2x128xf32> to vector<2x128xf32>
    %cst_11 = arith.constant dense<0.000000e+00> : vector<2x128xf32>
    %35 = tpu.matmul %32, %1, %cst_11 {dimension_numbers = #tpu.dot_dimension_numbers<[1], [0], [0], [1], [0, 0, 1, 1], [], []>, precision = #tpu.contract_precision<fp32>} : vector<2x32xf32>, vector<32x128xf32>, vector<2x128xf32> -> vector<2x128xf32>
    %36 = arith.addf %34, %35 : vector<2x128xf32>
    %37 = arith.negf %36 : vector<2x128xf32>
    %38 = math.exp %37 : vector<2x128xf32>
    %cst_12 = arith.constant 1.000000e+00 : f32
    %39 = vector.broadcast %cst_12 : f32 to vector<2x128xf32>
    %40 = arith.addf %39, %38 : vector<2x128xf32>
    %41 = arith.divf %39, %40 : vector<2x128xf32>
    %42 = vector.extract_strided_slice %36 {offsets = [0, 64], sizes = [2, 32], strides = [1, 1]} : vector<2x128xf32> to vector<2x32xf32>
    %43 = math.tanh %42 : vector<2x32xf32>
    %44 = vector.extract_strided_slice %41 {offsets = [0, 0], sizes = [2, 32], strides = [1, 1]} : vector<2x128xf32> to vector<2x32xf32>
    %45 = vector.extract_strided_slice %41 {offsets = [0, 32], sizes = [2, 32], strides = [1, 1]} : vector<2x128xf32> to vector<2x32xf32>
    %46 = vector.extract_strided_slice %41 {offsets = [0, 96], sizes = [2, 32], strides = [1, 1]} : vector<2x128xf32> to vector<2x32xf32>
    %47 = arith.mulf %45, %30 : vector<2x32xf32>
    %48 = arith.mulf %44, %43 : vector<2x32xf32>
    %49 = arith.addf %47, %48 : vector<2x32xf32>
    %50 = math.tanh %49 : vector<2x32xf32>
    %51 = arith.mulf %46, %50 : vector<2x32xf32>
    %52 = vector.extract_strided_slice %11 {offsets = [2, 0, 0], sizes = [1, 2, 128], strides = [1, 1, 1]} : vector<8x2x128xf32> to vector<1x2x128xf32>
    %53 = vector.shape_cast %52 : vector<1x2x128xf32> to vector<2x128xf32>
    %cst_13 = arith.constant dense<0.000000e+00> : vector<2x128xf32>
    %54 = tpu.matmul %51, %1, %cst_13 {dimension_numbers = #tpu.dot_dimension_numbers<[1], [0], [0], [1], [0, 0, 1, 1], [], []>, precision = #tpu.contract_precision<fp32>} : vector<2x32xf32>, vector<32x128xf32>, vector<2x128xf32> -> vector<2x128xf32>
    %55 = arith.addf %53, %54 : vector<2x128xf32>
    %56 = arith.negf %55 : vector<2x128xf32>
    %57 = math.exp %56 : vector<2x128xf32>
    %cst_14 = arith.constant 1.000000e+00 : f32
    %58 = vector.broadcast %cst_14 : f32 to vector<2x128xf32>
    %59 = arith.addf %58, %57 : vector<2x128xf32>
    %60 = arith.divf %58, %59 : vector<2x128xf32>
    %61 = vector.extract_strided_slice %55 {offsets = [0, 64], sizes = [2, 32], strides = [1, 1]} : vector<2x128xf32> to vector<2x32xf32>
    %62 = math.tanh %61 : vector<2x32xf32>
    %63 = vector.extract_strided_slice %60 {offsets = [0, 0], sizes = [2, 32], strides = [1, 1]} : vector<2x128xf32> to vector<2x32xf32>
    %64 = vector.extract_strided_slice %60 {offsets = [0, 32], sizes = [2, 32], strides = [1, 1]} : vector<2x128xf32> to vector<2x32xf32>
    %65 = vector.extract_strided_slice %60 {offsets = [0, 96], sizes = [2, 32], strides = [1, 1]} : vector<2x128xf32> to vector<2x32xf32>
    %66 = arith.mulf %64, %49 : vector<2x32xf32>
    %67 = arith.mulf %63, %62 : vector<2x32xf32>
    %68 = arith.addf %66, %67 : vector<2x32xf32>
    %69 = math.tanh %68 : vector<2x32xf32>
    %70 = arith.mulf %65, %69 : vector<2x32xf32>
    %71 = vector.extract_strided_slice %11 {offsets = [3, 0, 0], sizes = [1, 2, 128], strides = [1, 1, 1]} : vector<8x2x128xf32> to vector<1x2x128xf32>
    %72 = vector.shape_cast %71 : vector<1x2x128xf32> to vector<2x128xf32>
    %cst_15 = arith.constant dense<0.000000e+00> : vector<2x128xf32>
    %73 = tpu.matmul %70, %1, %cst_15 {dimension_numbers = #tpu.dot_dimension_numbers<[1], [0], [0], [1], [0, 0, 1, 1], [], []>, precision = #tpu.contract_precision<fp32>} : vector<2x32xf32>, vector<32x128xf32>, vector<2x128xf32> -> vector<2x128xf32>
    %74 = arith.addf %72, %73 : vector<2x128xf32>
    %75 = arith.negf %74 : vector<2x128xf32>
    %76 = math.exp %75 : vector<2x128xf32>
    %cst_16 = arith.constant 1.000000e+00 : f32
    %77 = vector.broadcast %cst_16 : f32 to vector<2x128xf32>
    %78 = arith.addf %77, %76 : vector<2x128xf32>
    %79 = arith.divf %77, %78 : vector<2x128xf32>
    %80 = vector.extract_strided_slice %74 {offsets = [0, 64], sizes = [2, 32], strides = [1, 1]} : vector<2x128xf32> to vector<2x32xf32>
    %81 = math.tanh %80 : vector<2x32xf32>
    %82 = vector.extract_strided_slice %79 {offsets = [0, 0], sizes = [2, 32], strides = [1, 1]} : vector<2x128xf32> to vector<2x32xf32>
    %83 = vector.extract_strided_slice %79 {offsets = [0, 32], sizes = [2, 32], strides = [1, 1]} : vector<2x128xf32> to vector<2x32xf32>
    %84 = vector.extract_strided_slice %79 {offsets = [0, 96], sizes = [2, 32], strides = [1, 1]} : vector<2x128xf32> to vector<2x32xf32>
    %85 = arith.mulf %83, %68 : vector<2x32xf32>
    %86 = arith.mulf %82, %81 : vector<2x32xf32>
    %87 = arith.addf %85, %86 : vector<2x32xf32>
    %88 = math.tanh %87 : vector<2x32xf32>
    %89 = arith.mulf %84, %88 : vector<2x32xf32>
    %90 = vector.extract_strided_slice %11 {offsets = [4, 0, 0], sizes = [1, 2, 128], strides = [1, 1, 1]} : vector<8x2x128xf32> to vector<1x2x128xf32>
    %91 = vector.shape_cast %90 : vector<1x2x128xf32> to vector<2x128xf32>
    %cst_17 = arith.constant dense<0.000000e+00> : vector<2x128xf32>
    %92 = tpu.matmul %89, %1, %cst_17 {dimension_numbers = #tpu.dot_dimension_numbers<[1], [0], [0], [1], [0, 0, 1, 1], [], []>, precision = #tpu.contract_precision<fp32>} : vector<2x32xf32>, vector<32x128xf32>, vector<2x128xf32> -> vector<2x128xf32>
    %93 = arith.addf %91, %92 : vector<2x128xf32>
    %94 = arith.negf %93 : vector<2x128xf32>
    %95 = math.exp %94 : vector<2x128xf32>
    %cst_18 = arith.constant 1.000000e+00 : f32
    %96 = vector.broadcast %cst_18 : f32 to vector<2x128xf32>
    %97 = arith.addf %96, %95 : vector<2x128xf32>
    %98 = arith.divf %96, %97 : vector<2x128xf32>
    %99 = vector.extract_strided_slice %93 {offsets = [0, 64], sizes = [2, 32], strides = [1, 1]} : vector<2x128xf32> to vector<2x32xf32>
    %100 = math.tanh %99 : vector<2x32xf32>
    %101 = vector.extract_strided_slice %98 {offsets = [0, 0], sizes = [2, 32], strides = [1, 1]} : vector<2x128xf32> to vector<2x32xf32>
    %102 = vector.extract_strided_slice %98 {offsets = [0, 32], sizes = [2, 32], strides = [1, 1]} : vector<2x128xf32> to vector<2x32xf32>
    %103 = vector.extract_strided_slice %98 {offsets = [0, 96], sizes = [2, 32], strides = [1, 1]} : vector<2x128xf32> to vector<2x32xf32>
    %104 = arith.mulf %102, %87 : vector<2x32xf32>
    %105 = arith.mulf %101, %100 : vector<2x32xf32>
    %106 = arith.addf %104, %105 : vector<2x32xf32>
    %107 = math.tanh %106 : vector<2x32xf32>
    %108 = arith.mulf %103, %107 : vector<2x32xf32>
    %109 = vector.extract_strided_slice %11 {offsets = [5, 0, 0], sizes = [1, 2, 128], strides = [1, 1, 1]} : vector<8x2x128xf32> to vector<1x2x128xf32>
    %110 = vector.shape_cast %109 : vector<1x2x128xf32> to vector<2x128xf32>
    %cst_19 = arith.constant dense<0.000000e+00> : vector<2x128xf32>
    %111 = tpu.matmul %108, %1, %cst_19 {dimension_numbers = #tpu.dot_dimension_numbers<[1], [0], [0], [1], [0, 0, 1, 1], [], []>, precision = #tpu.contract_precision<fp32>} : vector<2x32xf32>, vector<32x128xf32>, vector<2x128xf32> -> vector<2x128xf32>
    %112 = arith.addf %110, %111 : vector<2x128xf32>
    %113 = arith.negf %112 : vector<2x128xf32>
    %114 = math.exp %113 : vector<2x128xf32>
    %cst_20 = arith.constant 1.000000e+00 : f32
    %115 = vector.broadcast %cst_20 : f32 to vector<2x128xf32>
    %116 = arith.addf %115, %114 : vector<2x128xf32>
    %117 = arith.divf %115, %116 : vector<2x128xf32>
    %118 = vector.extract_strided_slice %112 {offsets = [0, 64], sizes = [2, 32], strides = [1, 1]} : vector<2x128xf32> to vector<2x32xf32>
    %119 = math.tanh %118 : vector<2x32xf32>
    %120 = vector.extract_strided_slice %117 {offsets = [0, 0], sizes = [2, 32], strides = [1, 1]} : vector<2x128xf32> to vector<2x32xf32>
    %121 = vector.extract_strided_slice %117 {offsets = [0, 32], sizes = [2, 32], strides = [1, 1]} : vector<2x128xf32> to vector<2x32xf32>
    %122 = vector.extract_strided_slice %117 {offsets = [0, 96], sizes = [2, 32], strides = [1, 1]} : vector<2x128xf32> to vector<2x32xf32>
    %123 = arith.mulf %121, %106 : vector<2x32xf32>
    %124 = arith.mulf %120, %119 : vector<2x32xf32>
    %125 = arith.addf %123, %124 : vector<2x32xf32>
    %126 = math.tanh %125 : vector<2x32xf32>
    %127 = arith.mulf %122, %126 : vector<2x32xf32>
    %128 = vector.extract_strided_slice %11 {offsets = [6, 0, 0], sizes = [1, 2, 128], strides = [1, 1, 1]} : vector<8x2x128xf32> to vector<1x2x128xf32>
    %129 = vector.shape_cast %128 : vector<1x2x128xf32> to vector<2x128xf32>
    %cst_21 = arith.constant dense<0.000000e+00> : vector<2x128xf32>
    %130 = tpu.matmul %127, %1, %cst_21 {dimension_numbers = #tpu.dot_dimension_numbers<[1], [0], [0], [1], [0, 0, 1, 1], [], []>, precision = #tpu.contract_precision<fp32>} : vector<2x32xf32>, vector<32x128xf32>, vector<2x128xf32> -> vector<2x128xf32>
    %131 = arith.addf %129, %130 : vector<2x128xf32>
    %132 = arith.negf %131 : vector<2x128xf32>
    %133 = math.exp %132 : vector<2x128xf32>
    %cst_22 = arith.constant 1.000000e+00 : f32
    %134 = vector.broadcast %cst_22 : f32 to vector<2x128xf32>
    %135 = arith.addf %134, %133 : vector<2x128xf32>
    %136 = arith.divf %134, %135 : vector<2x128xf32>
    %137 = vector.extract_strided_slice %131 {offsets = [0, 64], sizes = [2, 32], strides = [1, 1]} : vector<2x128xf32> to vector<2x32xf32>
    %138 = math.tanh %137 : vector<2x32xf32>
    %139 = vector.extract_strided_slice %136 {offsets = [0, 0], sizes = [2, 32], strides = [1, 1]} : vector<2x128xf32> to vector<2x32xf32>
    %140 = vector.extract_strided_slice %136 {offsets = [0, 32], sizes = [2, 32], strides = [1, 1]} : vector<2x128xf32> to vector<2x32xf32>
    %141 = vector.extract_strided_slice %136 {offsets = [0, 96], sizes = [2, 32], strides = [1, 1]} : vector<2x128xf32> to vector<2x32xf32>
    %142 = arith.mulf %140, %125 : vector<2x32xf32>
    %143 = arith.mulf %139, %138 : vector<2x32xf32>
    %144 = arith.addf %142, %143 : vector<2x32xf32>
    %145 = math.tanh %144 : vector<2x32xf32>
    %146 = arith.mulf %141, %145 : vector<2x32xf32>
    %147 = vector.extract_strided_slice %11 {offsets = [7, 0, 0], sizes = [1, 2, 128], strides = [1, 1, 1]} : vector<8x2x128xf32> to vector<1x2x128xf32>
    %148 = vector.shape_cast %147 : vector<1x2x128xf32> to vector<2x128xf32>
    %cst_23 = arith.constant dense<0.000000e+00> : vector<2x128xf32>
    %149 = tpu.matmul %146, %1, %cst_23 {dimension_numbers = #tpu.dot_dimension_numbers<[1], [0], [0], [1], [0, 0, 1, 1], [], []>, precision = #tpu.contract_precision<fp32>} : vector<2x32xf32>, vector<32x128xf32>, vector<2x128xf32> -> vector<2x128xf32>
    %150 = arith.addf %148, %149 : vector<2x128xf32>
    %151 = arith.negf %150 : vector<2x128xf32>
    %152 = math.exp %151 : vector<2x128xf32>
    %cst_24 = arith.constant 1.000000e+00 : f32
    %153 = vector.broadcast %cst_24 : f32 to vector<2x128xf32>
    %154 = arith.addf %153, %152 : vector<2x128xf32>
    %155 = arith.divf %153, %154 : vector<2x128xf32>
    %156 = vector.extract_strided_slice %150 {offsets = [0, 64], sizes = [2, 32], strides = [1, 1]} : vector<2x128xf32> to vector<2x32xf32>
    %157 = math.tanh %156 : vector<2x32xf32>
    %158 = vector.extract_strided_slice %155 {offsets = [0, 0], sizes = [2, 32], strides = [1, 1]} : vector<2x128xf32> to vector<2x32xf32>
    %159 = vector.extract_strided_slice %155 {offsets = [0, 32], sizes = [2, 32], strides = [1, 1]} : vector<2x128xf32> to vector<2x32xf32>
    %160 = vector.extract_strided_slice %155 {offsets = [0, 96], sizes = [2, 32], strides = [1, 1]} : vector<2x128xf32> to vector<2x32xf32>
    %161 = arith.mulf %159, %144 : vector<2x32xf32>
    %162 = arith.mulf %158, %157 : vector<2x32xf32>
    %163 = arith.addf %161, %162 : vector<2x32xf32>
    %164 = math.tanh %163 : vector<2x32xf32>
    %165 = arith.mulf %160, %164 : vector<2x32xf32>
    %166 = vector.broadcast %4 : vector<1x32xf32> to vector<2x32xf32>
    %167 = arith.mulf %165, %166 : vector<2x32xf32>
    %cst_25 = arith.constant dense<0.000000e+00> : vector<2xf32>
    %168 = vector.multi_reduction <add>, %167, %cst_25 [1] : vector<2x32xf32> to vector<2xf32>
    %169 = vector.shape_cast %168 : vector<2xf32> to vector<2x1xf32>
    %170 = vector.broadcast %5 : vector<1x1xf32> to vector<2x1xf32>
    %171 = arith.addf %169, %170 : vector<2x1xf32>
    %c0_26 = arith.constant 0 : index
    %c0_27 = arith.constant 0 : index
    %172 = vector.load %arg2[%c0_26, %c0_27] : memref<2x1xf32, #tpu.memory_space<vmem>>, vector<2x1xf32>
    tpu.vector_store %arg2[%c0_26, %c0_27], %171 {strides = array<i32>} : memref<2x1xf32, #tpu.memory_space<vmem>>, vector<2x1xf32>,
    return
  }
}

</mosaic_0001>

<llo_original>
// kernel: lstm_model_forward.1
$region0: #{lstm_model_forward.1}
  #allocation0 [shape = 'u32[]', space=smem, size = 0x4, offset = 0x4, fixed_abs, tag = 'smem constant byte address 0x4 - core index']
  #allocation1 [shape = 'u32[144,128]{1,0:T(1,128)}', space=vmem, size = 0x12000, scoped, tag = 'internal scratch']
  %s0 = inlined_call_operand.vmem [shape: f32[8,2,16], index: 0, kind: input, shape index: {}]
  %s1 = inlined_call_operand.hbm [shape: f32[64,128], index: 1, kind: input, shape index: {}]
  %s2 = inlined_call_operand.vmem [shape: f32[2,1], index: 2, kind: output, shape index: {}]
  %s3 = sld [smem:[#allocation0]]
  $region22: #{lstm_model_forward.1} parent=0
    _
  %s5 = ssub.s32 1, %s3
  %s6 = scalar_select 0, %s5, %s3
  $region1: #{lstm_model_forward.1} parent=0
    #allocation2 [shape = 'u8[32768]{0}', space=vmem, size = 0x8000, scoped, tag = 'input window, operand 1, single buffered']
    #allocation3 [shape = 's32[1]{0}', space=sflag, size = 0x4, scoped, tag = 'scoped memory for lstm_model_forward.1']
    %7 = vsyncpa [#allocation3], 0
    // Predicated region
    $region2: #{lstm_model_forward.1} parent=1 // pred_check
      _
    $region3: #{lstm_model_forward.1} parent=1 // pred_check_branch
      %9 = sbr.rel (0) target = $region5
    $region4: #{lstm_model_forward.1} parent=1 // pred_region
      _
    $region5: #{lstm_model_forward.1} parent=1 // pred_fallthru
      _
    // Predicated region
    $region6: #{lstm_model_forward.1} parent=1 // pred_check
      _
    $region7: #{lstm_model_forward.1} parent=1 // pred_check_branch
      %11 = sbr.rel (0) target = $region9
    $region8: #{lstm_model_forward.1} parent=1 // pred_region
      %s13 = ssub.s32 1024, 1024
      %14 = vsyncadd [#allocation3], %s13
      %s15 = sshll.u32 [#allocation2], 4
      %s16 = int_to_ptr.vmem [resolvable:$true] %s15
      %21 = dma.hbm_to_vmem [thread:$0]  %s1, 1024, %s16, [#allocation3], 128, 128, 8
    $region9: #{lstm_model_forward.1} parent=1 // pred_fallthru
      _
    // Predicated region
    $region10: #{lstm_model_forward.1} parent=1 // pred_check
      _
    $region11: #{lstm_model_forward.1} parent=1 // pred_check_branch
      %23 = sbr.rel (0) target = $region13
    $region12: #{lstm_model_forward.1} parent=1 // pred_region
      %24 = dma.done [#allocation3], 1024
    $region13: #{lstm_model_forward.1} parent=1 // pred_fallthru
      _
    %v25 = vld [vmem:[#allocation2] sm:$0xff]
    %v26 = vld [vmem:[#allocation2 + $0x8] sm:$0xff]
    %v27 = vld [vmem:[#allocation2 + $0x10] sm:$0xff]
    %v28 = vld [vmem:[#allocation2 + $0x18] sm:$0xff]
    %v29 = vld [vmem:[#allocation2 + $0x20] sm:$0xff]
    %v30 = vld [vmem:[#allocation2 + $0x28] sm:$0xff]
    %v31 = vld [vmem:[#allocation2 + $0x30] sm:$0x1]
    %v32 = vld [vmem:[#allocation2 + $0x38] sm:$0x1]
    %v33 = vld [vmem:[%s0] sm:$0x3]
    %v34 = vld [vmem:[%s0 + $0x2] sm:$0x3]
    %v35 = vld [vmem:[%s0 + $0x4] sm:$0x3]
    %v36 = vld [vmem:[%s0 + $0x6] sm:$0x3]
    %v37 = vld [vmem:[%s0 + $0x8] sm:$0x3]
    %v38 = vld [vmem:[%s0 + $0xa] sm:$0x3]
    %v39 = vld [vmem:[%s0 + $0xc] sm:$0x3]
    %v40 = vld [vmem:[%s0 + $0xe] sm:$0x3]
    %v41 = vlaneseq
    %v42 = vshrl.u32 %v41, 7
    %v43 = vsub.s32 0, %v42
    %v44 = vrot.slane %v31, %v43
    %v53 = vcombine.low %v33, %v34
    %v54 = vcombine.low %v35, %v36
    %v56 = vunpack.c.l.s4 1983009808
    %v57 = vunpack.c.0.s8 %v56
    %v58 = vlaneseq
    %v59 = vshrl.u32 %v58, 7
    %v60 = vsub.s32 %v57, %v59
    %v61 = vrot.slane %v53, %v60
    %v63 = vunpack.c.l.s4 1983009808
    %v64 = vunpack.c.0.s8 %v63
    %v65 = vlaneseq
    %v66 = vshrl.u32 %v65, 7
    %v67 = vsub.s32 %v64, %v66
    %v68 = vrot.slane %v54, %v67
    %v69 = vcombine.low %v61, %v68
    %v70 = vcombine.low %v37, %v38
    %v71 = vcombine.low %v39, %v40
    %v73 = vunpack.c.l.s4 1983009808
    %v74 = vunpack.c.0.s8 %v73
    %v75 = vlaneseq
    %v76 = vshrl.u32 %v75, 7
    %v77 = vsub.s32 %v74, %v76
    %v78 = vrot.slane %v70, %v77
    %v80 = vunpack.c.l.s4 1983009808
    %v81 = vunpack.c.0.s8 %v80
    %v82 = vlaneseq
    %v83 = vshrl.u32 %v82, 7
    %v84 = vsub.s32 %v81, %v83
    %v85 = vrot.slane %v71, %v84
    %v86 = vcombine.low %v78, %v85
    %vm87 = vcmask 130048
    %v88 = vsel %vm87, %v69, 0
    %v90 = vsel %vm87, %v86, 0
    %92 = vmatprep.subr.mxu0 0.0
    %v93 = vand.u32 %v25, 4294901760
    %94 = vmatpush1.msra.mxu0 %v93
    %95 = vmatprep.subr.mxu0 0.0
    %v96 = vand.u32 %v26, 4294901760
    %97 = vmatpush1.msra.mxu0 %v96
    %98 = vmatprep.subr.mxu0 0.0
    %99 = vmatpush1.msra.mxu0 0.0
    %100 = vmatprep.subr.mxu0 0.0
    %101 = vmatpush1.msra.mxu0 0.0
    %102 = vmatprep.subr.mxu0 0.0
    %103 = vmatpush1.msra.mxu0 0.0
    %104 = vmatprep.subr.mxu0 0.0
    %105 = vmatpush1.msra.mxu0 0.0
    %106 = vmatprep.subr.mxu0 0.0
    %107 = vmatpush1.msra.mxu0 0.0
    %108 = vmatprep.subr.mxu0 0.0
    %109 = vmatpush1.msra.mxu0 0.0
    %110 = vmatprep.subr.mxu0 0.0
    %111 = vmatpush1.msra.mxu0 0.0
    %112 = vmatprep.subr.mxu0 0.0
    %113 = vmatpush1.msra.mxu0 0.0
    %114 = vmatprep.subr.mxu0 0.0
    %115 = vmatpush1.msra.mxu0 0.0
    %116 = vmatprep.subr.mxu0 0.0
    %117 = vmatpush1.msra.mxu0 0.0
    %118 = vmatprep.subr.mxu0 0.0
    %119 = vmatpush1.msra.mxu0 0.0
    %120 = vmatprep.subr.mxu0 0.0
    %121 = vmatpush1.msra.mxu0 0.0
    %122 = vmatprep.subr.mxu0 0.0
    %123 = vmatpush1.msra.mxu0 0.0
    %124 = vmatprep.subr.mxu0 0.0
    %125 = vmatpush1.msra.mxu0 0.0
    %126 = vmatprep.subr.mxu0 0.0
    %127 = vmatpush1.msra.mxu0 0.0
    %128 = vmatprep.subr.mxu0 0.0
    %129 = vmatpush1.msra.mxu0 0.0
    %130 = vmatprep.subr.mxu0 0.0
    %131 = vmatpush1.msra.mxu0 0.0
    %132 = vmatprep.subr.mxu0 0.0
    %133 = vmatpush1.msra.mxu0 0.0
    %134 = vmatprep.subr.mxu0 0.0
    %135 = vmatpush1.msra.mxu0 0.0
    %136 = vmatprep.subr.mxu0 0.0
    %137 = vmatpush1.msra.mxu0 0.0
    %138 = vmatprep.subr.mxu0 0.0
    %139 = vmatpush1.msra.mxu0 0.0
    %140 = vmatprep.subr.mxu0 0.0
    %141 = vmatpush1.msra.mxu0 0.0
    %142 = vmatprep.subr.mxu0 0.0
    %143 = vmatpush1.msra.mxu0 0.0
    %144 = vmatprep.subr.mxu0 0.0
    %145 = vmatpush1.msra.mxu0 0.0
    %146 = vmatprep.subr.mxu0 0.0
    %147 = vmatpush1.msra.mxu0 0.0
    %148 = vmatprep.subr.mxu0 0.0
    %149 = vmatpush1.msra.mxu0 0.0
    %150 = vmatprep.subr.mxu0 0.0
    %151 = vmatpush1.msra.mxu0 0.0
    %152 = vmatprep.subr.mxu0 0.0
    %153 = vmatpush1.msra.mxu0 0.0
    %154 = vmatprep.subr.mxu0 0.0
    %155 = vmatpush1.msra.mxu0 0.0
    %156 = vmatprep.subr.mxu0 0.0
    %157 = vmatpush1.msra.mxu0 0.0
    %158 = vmatprep.mubr.f32.mxu0 0.0
    %v159 = vand.u32 %v88, 4294901760
    %v160 = vsub.f32 %v88, %v159
    %v161 = vand.u32 %v160, 4294901760
    %v162 = vsub.f32 %v160, %v161
    %v163 = vand.u32 %v162, 4294901760
    %164 = vmatmul.mubr.f32.gmra.mrb[0].mxu0 %v163
    %v165 = vpop.f32.mrb[0].mxu0
    %v166 = vadd.f32 %v44, %v165
    %v167 = vpop.f32.mrb[0].mxu0
    %168 = vmatprep.mubr.f32.mxu0 0.0
    %v169 = vand.u32 %v90, 4294901760
    %v170 = vsub.f32 %v90, %v169
    %v171 = vand.u32 %v170, 4294901760
    %v172 = vsub.f32 %v170, %v171
    %v173 = vand.u32 %v172, 4294901760
    %174 = vmatmul.mubr.f32.gmra.mrb[0].mxu0 %v173
    %v175 = vpop.f32.mrb[0].mxu0
    %v176 = vadd.f32 %v44, %v175
    %v177 = vpop.f32.mrb[0].mxu0
    %178 = vdwg.mxu0
    %179 = vmatprep.subr.mxu0 0.0
    %v180 = vand.u32 %v25, 4294901760
    %v181 = vsub.f32 %v25, %v180
    %v182 = vand.u32 %v181, 4294901760
    %v183 = vsub.f32 %v181, %v182
    %v184 = vand.u32 %v183, 4294901760
    %185 = vmatpush1.msra.mxu0 %v184
    %186 = vmatprep.subr.mxu0 0.0
    %v187 = vand.u32 %v26, 4294901760
    %v188 = vsub.f32 %v26, %v187
    %v189 = vand.u32 %v188, 4294901760
    %v190 = vsub.f32 %v188, %v189
    %v191 = vand.u32 %v190, 4294901760
    %192 = vmatpush1.msra.mxu0 %v191
    %193 = vmatprep.subr.mxu0 0.0
    %194 = vmatpush1.msra.mxu0 0.0
    %195 = vmatprep.subr.mxu0 0.0
    %196 = vmatpush1.msra.mxu0 0.0
    %197 = vmatprep.subr.mxu0 0.0
    %198 = vmatpush1.msra.mxu0 0.0
    %199 = vmatprep.subr.mxu0 0.0
    %200 = vmatpush1.msra.mxu0 0.0
    %201 = vmatprep.subr.mxu0 0.0
    %202 = vmatpush1.msra.mxu0 0.0
    %203 = vmatprep.subr.mxu0 0.0
    %204 = vmatpush1.msra.mxu0 0.0
    %205 = vmatprep.subr.mxu0 0.0
    %206 = vmatpush1.msra.mxu0 0.0
    %207 = vmatprep.subr.mxu0 0.0
    %208 = vmatpush1.msra.mxu0 0.0
    %209 = vmatprep.subr.mxu0 0.0
    %210 = vmatpush1.msra.mxu0 0.0
    %211 = vmatprep.subr.mxu0 0.0
    %212 = vmatpush1.msra.mxu0 0.0
    %213 = vmatprep.subr.mxu0 0.0
    %214 = vmatpush1.msra.mxu0 0.0
    %215 = vmatprep.subr.mxu0 0.0
    %216 = vmatpush1.msra.mxu0 0.0
    %217 = vmatprep.subr.mxu0 0.0
    %218 = vmatpush1.msra.mxu0 0.0
    %219 = vmatprep.subr.mxu0 0.0
    %220 = vmatpush1.msra.mxu0 0.0
    %221 = vmatprep.subr.mxu0 0.0
    %222 = vmatpush1.msra.mxu0 0.0
    %223 = vmatprep.subr.mxu0 0.0
    %224 = vmatpush1.msra.mxu0 0.0
    %225 = vmatprep.subr.mxu0 0.0
    %226 = vmatpush1.msra.mxu0 0.0
    %227 = vmatprep.subr.mxu0 0.0
    %228 = vmatpush1.msra.mxu0 0.0
    %229 = vmatprep.subr.mxu0 0.0
    %230 = vmatpush1.msra.mxu0 0.0
    %231 = vmatprep.subr.mxu0 0.0
    %232 = vmatpush1.msra.mxu0 0.0
    %233 = vmatprep.subr.mxu0 0.0
    %234 = vmatpush1.msra.mxu0 0.0
    %235 = vmatprep.subr.mxu0 0.0
    %236 = vmatpush1.msra.mxu0 0.0
    %237 = vmatprep.subr.mxu0 0.0
    %238 = vmatpush1.msra.mxu0 0.0
    %239 = vmatprep.subr.mxu0 0.0
    %240 = vmatpush1.msra.mxu0 0.0
    %241 = vmatprep.subr.mxu0 0.0
    %242 = vmatpush1.msra.mxu0 0.0
    %243 = vmatprep.subr.mxu0 0.0
    %244 = vmatpush1.msra.mxu0 0.0
    %245 = vmatprep.subr.mxu0 0.0
    %246 = vmatpush1.msra.mxu0 0.0
    %247 = vmatprep.subr.mxu0 0.0
    %248 = vmatpush1.msra.mxu0 0.0
    %249 = vmatprep.subr.mxu0 0.0
    %250 = vmatpush1.msra.mxu0 0.0
    %251 = vmatprep.subr.mxu0 0.0
    %252 = vmatpush1.msra.mxu0 0.0
    %253 = vmatprep.mubr.f32.mxu0 0.0
    %v254 = vand.u32 %v88, 4294901760
    %255 = vmatmul.mubr.f32.gmra.mrb[0].mxu0 %v254
    %v256 = vpop.f32.mrb[0].mxu0
    %v257 = vadd.f32 %v166, %v256
    %v258 = vpop.f32.mrb[0].mxu0
    %259 = vmatprep.mubr.f32.mxu0 0.0
    %v260 = vand.u32 %v90, 4294901760
    %261 = vmatmul.mubr.f32.gmra.mrb[0].mxu0 %v260
    %v262 = vpop.f32.mrb[0].mxu0
    %v263 = vadd.f32 %v176, %v262
    %v264 = vpop.f32.mrb[0].mxu0
    %265 = vdwg.mxu0
    %266 = vmatprep.subr.mxu0 0.0
    %v267 = vand.u32 %v25, 4294901760
    %v268 = vsub.f32 %v25, %v267
    %269 = vmatpush1.msra.mxu0 %v268
    %270 = vmatprep.subr.mxu0 0.0
    %v271 = vand.u32 %v26, 4294901760
    %v272 = vsub.f32 %v26, %v271
    %273 = vmatpush1.msra.mxu0 %v272
    %274 = vmatprep.subr.mxu0 0.0
    %275 = vmatpush1.msra.mxu0 0.0
    %276 = vmatprep.subr.mxu0 0.0
    %277 = vmatpush1.msra.mxu0 0.0
    %278 = vmatprep.subr.mxu0 0.0
    %279 = vmatpush1.msra.mxu0 0.0
    %280 = vmatprep.subr.mxu0 0.0
    %281 = vmatpush1.msra.mxu0 0.0
    %282 = vmatprep.subr.mxu0 0.0
    %283 = vmatpush1.msra.mxu0 0.0
    %284 = vmatprep.subr.mxu0 0.0
    %285 = vmatpush1.msra.mxu0 0.0
    %286 = vmatprep.subr.mxu0 0.0
    %287 = vmatpush1.msra.mxu0 0.0
    %288 = vmatprep.subr.mxu0 0.0
    %289 = vmatpush1.msra.mxu0 0.0
    %290 = vmatprep.subr.mxu0 0.0
    %291 = vmatpush1.msra.mxu0 0.0
    %292 = vmatprep.subr.mxu0 0.0
    %293 = vmatpush1.msra.mxu0 0.0
    %294 = vmatprep.subr.mxu0 0.0
    %295 = vmatpush1.msra.mxu0 0.0
    %296 = vmatprep.subr.mxu0 0.0
    %297 = vmatpush1.msra.mxu0 0.0
    %298 = vmatprep.subr.mxu0 0.0
    %299 = vmatpush1.msra.mxu0 0.0
    %300 = vmatprep.subr.mxu0 0.0
    %301 = vmatpush1.msra.mxu0 0.0
    %302 = vmatprep.subr.mxu0 0.0
    %303 = vmatpush1.msra.mxu0 0.0
    %304 = vmatprep.subr.mxu0 0.0
    %305 = vmatpush1.msra.mxu0 0.0
    %306 = vmatprep.subr.mxu0 0.0
    %307 = vmatpush1.msra.mxu0 0.0
    %308 = vmatprep.subr.mxu0 0.0
    %309 = vmatpush1.msra.mxu0 0.0
    %310 = vmatprep.subr.mxu0 0.0
    %311 = vmatpush1.msra.mxu0 0.0
    %312 = vmatprep.subr.mxu0 0.0
    %313 = vmatpush1.msra.mxu0 0.0
    %314 = vmatprep.subr.mxu0 0.0
    %315 = vmatpush1.msra.mxu0 0.0
    %316 = vmatprep.subr.mxu0 0.0
    %317 = vmatpush1.msra.mxu0 0.0
    %318 = vmatprep.subr.mxu0 0.0
    %319 = vmatpush1.msra.mxu0 0.0
    %320 = vmatprep.subr.mxu0 0.0
    %321 = vmatpush1.msra.mxu0 0.0
    %322 = vmatprep.subr.mxu0 0.0
    %323 = vmatpush1.msra.mxu0 0.0
    %324 = vmatprep.subr.mxu0 0.0
    %325 = vmatpush1.msra.mxu0 0.0
    %326 = vmatprep.subr.mxu0 0.0
    %327 = vmatpush1.msra.mxu0 0.0
    %328 = vmatprep.subr.mxu0 0.0
    %329 = vmatpush1.msra.mxu0 0.0
    %330 = vmatprep.subr.mxu0 0.0
    %331 = vmatpush1.msra.mxu0 0.0
    %332 = vmatprep.subr.mxu0 0.0
    %333 = vmatpush1.msra.mxu0 0.0
    %334 = vmatprep.mubr.f32.mxu0 0.0
    %v335 = vand.u32 %v88, 4294901760
    %v336 = vsub.f32 %v88, %v335
    %337 = vmatmul.mubr.f32.gmra.mrb[0].mxu0 %v336
    %v338 = vpop.f32.mrb[0].mxu0
    %v339 = vadd.f32 %v257, %v338
    %v340 = vpop.f32.mrb[0].mxu0
    %341 = vmatprep.mubr.f32.mxu0 0.0
    %v342 = vand.u32 %v90, 4294901760
    %v343 = vsub.f32 %v90, %v342
    %344 = vmatmul.mubr.f32.gmra.mrb[0].mxu0 %v343
    %v345 = vpop.f32.mrb[0].mxu0
    %v346 = vadd.f32 %v263, %v345
    %v347 = vpop.f32.mrb[0].mxu0
    %348 = vdwg.mxu0
    %349 = vmatprep.subr.mxu0 0.0
    %v350 = vand.u32 %v25, 4294901760
    %351 = vmatpush1.msra.mxu0 %v350
    %352 = vmatprep.subr.mxu0 0.0
    %v353 = vand.u32 %v26, 4294901760
    %354 = vmatpush1.msra.mxu0 %v353
    %355 = vmatprep.subr.mxu0 0.0
    %356 = vmatpush1.msra.mxu0 0.0
    %357 = vmatprep.subr.mxu0 0.0
    %358 = vmatpush1.msra.mxu0 0.0
    %359 = vmatprep.subr.mxu0 0.0
    %360 = vmatpush1.msra.mxu0 0.0
    %361 = vmatprep.subr.mxu0 0.0
    %362 = vmatpush1.msra.mxu0 0.0
    %363 = vmatprep.subr.mxu0 0.0
    %364 = vmatpush1.msra.mxu0 0.0
    %365 = vmatprep.subr.mxu0 0.0
    %366 = vmatpush1.msra.mxu0 0.0
    %367 = vmatprep.subr.mxu0 0.0
    %368 = vmatpush1.msra.mxu0 0.0
    %369 = vmatprep.subr.mxu0 0.0
    %370 = vmatpush1.msra.mxu0 0.0
    %371 = vmatprep.subr.mxu0 0.0
    %372 = vmatpush1.msra.mxu0 0.0
    %373 = vmatprep.subr.mxu0 0.0
    %374 = vmatpush1.msra.mxu0 0.0
    %375 = vmatprep.subr.mxu0 0.0
    %376 = vmatpush1.msra.mxu0 0.0
    %377 = vmatprep.subr.mxu0 0.0
    %378 = vmatpush1.msra.mxu0 0.0
    %379 = vmatprep.subr.mxu0 0.0
    %380 = vmatpush1.msra.mxu0 0.0
    %381 = vmatprep.subr.mxu0 0.0
    %382 = vmatpush1.msra.mxu0 0.0
    %383 = vmatprep.subr.mxu0 0.0
    %384 = vmatpush1.msra.mxu0 0.0
    %385 = vmatprep.subr.mxu0 0.0
    %386 = vmatpush1.msra.mxu0 0.0
    %387 = vmatprep.subr.mxu0 0.0
    %388 = vmatpush1.msra.mxu0 0.0
    %389 = vmatprep.subr.mxu0 0.0
    %390 = vmatpush1.msra.mxu0 0.0
    %391 = vmatprep.subr.mxu0 0.0
    %392 = vmatpush1.msra.mxu0 0.0
    %393 = vmatprep.subr.mxu0 0.0
    %394 = vmatpush1.msra.mxu0 0.0
    %395 = vmatprep.subr.mxu0 0.0
    %396 = vmatpush1.msra.mxu0 0.0
    %397 = vmatprep.subr.mxu0 0.0
    %398 = vmatpush1.msra.mxu0 0.0
    %399 = vmatprep.subr.mxu0 0.0
    %400 = vmatpush1.msra.mxu0 0.0
    %401 = vmatprep.subr.mxu0 0.0
    %402 = vmatpush1.msra.mxu0 0.0
    %403 = vmatprep.subr.mxu0 0.0
    %404 = vmatpush1.msra.mxu0 0.0
    %405 = vmatprep.subr.mxu0 0.0
    %406 = vmatpush1.msra.mxu0 0.0
    %407 = vmatprep.subr.mxu0 0.0
    %408 = vmatpush1.msra.mxu0 0.0
    %409 = vmatprep.subr.mxu0 0.0
    %410 = vmatpush1.msra.mxu0 0.0
    %411 = vmatprep.subr.mxu0 0.0
    %412 = vmatpush1.msra.mxu0 0.0
    %413 = vmatprep.subr.mxu0 0.0
    %414 = vmatpush1.msra.mxu0 0.0
    %415 = vmatprep.mubr.f32.mxu0 0.0
    %v416 = vand.u32 %v88, 4294901760
    %v417 = vsub.f32 %v88, %v416
    %v418 = vand.u32 %v417, 4294901760
    %419 = vmatmul.mubr.f32.gmra.mrb[0].mxu0 %v418
    %v420 = vpop.f32.mrb[0].mxu0
    %v421 = vadd.f32 %v339, %v420
    %v422 = vpop.f32.mrb[0].mxu0
    %423 = vmatprep.mubr.f32.mxu0 0.0
    %v424 = vand.u32 %v90, 4294901760
    %v425 = vsub.f32 %v90, %v424
    %v426 = vand.u32 %v425, 4294901760
    %427 = vmatmul.mubr.f32.gmra.mrb[0].mxu0 %v426
    %v428 = vpop.f32.mrb[0].mxu0
    %v429 = vadd.f32 %v346, %v428
    %v430 = vpop.f32.mrb[0].mxu0
    %431 = vdwg.mxu0
    %432 = vmatprep.subr.mxu0 0.0
    %v433 = vand.u32 %v25, 4294901760
    %v434 = vsub.f32 %v25, %v433
    %v435 = vand.u32 %v434, 4294901760
    %436 = vmatpush1.msra.mxu0 %v435
    %437 = vmatprep.subr.mxu0 0.0
    %v438 = vand.u32 %v26, 4294901760
    %v439 = vsub.f32 %v26, %v438
    %v440 = vand.u32 %v439, 4294901760
    %441 = vmatpush1.msra.mxu0 %v440
    %442 = vmatprep.subr.mxu0 0.0
    %443 = vmatpush1.msra.mxu0 0.0
    %444 = vmatprep.subr.mxu0 0.0
    %445 = vmatpush1.msra.mxu0 0.0
    %446 = vmatprep.subr.mxu0 0.0
    %447 = vmatpush1.msra.mxu0 0.0
    %448 = vmatprep.subr.mxu0 0.0
    %449 = vmatpush1.msra.mxu0 0.0
    %450 = vmatprep.subr.mxu0 0.0
    %451 = vmatpush1.msra.mxu0 0.0
    %452 = vmatprep.subr.mxu0 0.0
    %453 = vmatpush1.msra.mxu0 0.0
    %454 = vmatprep.subr.mxu0 0.0
    %455 = vmatpush1.msra.mxu0 0.0
    %456 = vmatprep.subr.mxu0 0.0
    %457 = vmatpush1.msra.mxu0 0.0
    %458 = vmatprep.subr.mxu0 0.0
    %459 = vmatpush1.msra.mxu0 0.0
    %460 = vmatprep.subr.mxu0 0.0
    %461 = vmatpush1.msra.mxu0 0.0
    %462 = vmatprep.subr.mxu0 0.0
    %463 = vmatpush1.msra.mxu0 0.0
    %464 = vmatprep.subr.mxu0 0.0
    %465 = vmatpush1.msra.mxu0 0.0
    %466 = vmatprep.subr.mxu0 0.0
    %467 = vmatpush1.msra.mxu0 0.0
    %468 = vmatprep.subr.mxu0 0.0
    %469 = vmatpush1.msra.mxu0 0.0
    %470 = vmatprep.subr.mxu0 0.0
    %471 = vmatpush1.msra.mxu0 0.0
    %472 = vmatprep.subr.mxu0 0.0
    %473 = vmatpush1.msra.mxu0 0.0
    %474 = vmatprep.subr.mxu0 0.0
    %475 = vmatpush1.msra.mxu0 0.0
    %476 = vmatprep.subr.mxu0 0.0
    %477 = vmatpush1.msra.mxu0 0.0
    %478 = vmatprep.subr.mxu0 0.0
    %479 = vmatpush1.msra.mxu0 0.0
    %480 = vmatprep.subr.mxu0 0.0
    %481 = vmatpush1.msra.mxu0 0.0
    %482 = vmatprep.subr.mxu0 0.0
    %483 = vmatpush1.msra.mxu0 0.0
    %484 = vmatprep.subr.mxu0 0.0
    %485 = vmatpush1.msra.mxu0 0.0
    %486 = vmatprep.subr.mxu0 0.0
    %487 = vmatpush1.msra.mxu0 0.0
    %488 = vmatprep.subr.mxu0 0.0
    %489 = vmatpush1.msra.mxu0 0.0
    %490 = vmatprep.subr.mxu0 0.0
    %491 = vmatpush1.msra.mxu0 0.0
    %492 = vmatprep.subr.mxu0 0.0
    %493 = vmatpush1.msra.mxu0 0.0
    %494 = vmatprep.subr.mxu0 0.0
    %495 = vmatpush1.msra.mxu0 0.0
    %496 = vmatprep.subr.mxu0 0.0
    %497 = vmatpush1.msra.mxu0 0.0
    %498 = vmatprep.subr.mxu0 0.0
    %499 = vmatpush1.msra.mxu0 0.0
    %500 = vmatprep.subr.mxu0 0.0
    %501 = vmatpush1.msra.mxu0 0.0
    %502 = vmatprep.mubr.f32.mxu0 0.0
    %v503 = vand.u32 %v88, 4294901760
    %504 = vmatmul.mubr.f32.gmra.mrb[0].mxu0 %v503
    %v505 = vpop.f32.mrb[0].mxu0
    %v506 = vadd.f32 %v421, %v505
    %v507 = vpop.f32.mrb[0].mxu0
    %508 = vmatprep.mubr.f32.mxu0 0.0
    %v509 = vand.u32 %v90, 4294901760
    %510 = vmatmul.mubr.f32.gmra.mrb[0].mxu0 %v509
    %v511 = vpop.f32.mrb[0].mxu0
    %v512 = vadd.f32 %v429, %v511
    %v513 = vpop.f32.mrb[0].mxu0
    %514 = vdwg.mxu0
    %515 = vmatprep.subr.mxu0 0.0
    %v516 = vand.u32 %v25, 4294901760
    %517 = vmatpush1.msra.mxu0 %v516
    %518 = vmatprep.subr.mxu0 0.0
    %v519 = vand.u32 %v26, 4294901760
    %520 = vmatpush1.msra.mxu0 %v519
    %521 = vmatprep.subr.mxu0 0.0
    %522 = vmatpush1.msra.mxu0 0.0
    %523 = vmatprep.subr.mxu0 0.0
    %524 = vmatpush1.msra.mxu0 0.0
    %525 = vmatprep.subr.mxu0 0.0
    %526 = vmatpush1.msra.mxu0 0.0
    %527 = vmatprep.subr.mxu0 0.0
    %528 = vmatpush1.msra.mxu0 0.0
    %529 = vmatprep.subr.mxu0 0.0
    %530 = vmatpush1.msra.mxu0 0.0
    %531 = vmatprep.subr.mxu0 0.0
    %532 = vmatpush1.msra.mxu0 0.0
    %533 = vmatprep.subr.mxu0 0.0
    %534 = vmatpush1.msra.mxu0 0.0
    %535 = vmatprep.subr.mxu0 0.0
    %536 = vmatpush1.msra.mxu0 0.0
    %537 = vmatprep.subr.mxu0 0.0
    %538 = vmatpush1.msra.mxu0 0.0
    %539 = vmatprep.subr.mxu0 0.0
    %540 = vmatpush1.msra.mxu0 0.0
    %541 = vmatprep.subr.mxu0 0.0
    %542 = vmatpush1.msra.mxu0 0.0
    %543 = vmatprep.subr.mxu0 0.0
    %544 = vmatpush1.msra.mxu0 0.0
    %545 = vmatprep.subr.mxu0 0.0
    %546 = vmatpush1.msra.mxu0 0.0
    %547 = vmatprep.subr.mxu0 0.0
    %548 = vmatpush1.msra.mxu0 0.0
    %549 = vmatprep.subr.mxu0 0.0
    %550 = vmatpush1.msra.mxu0 0.0
    %551 = vmatprep.subr.mxu0 0.0
    %552 = vmatpush1.msra.mxu0 0.0
    %553 = vmatprep.subr.mxu0 0.0
    %554 = vmatpush1.msra.mxu0 0.0
    %555 = vmatprep.subr.mxu0 0.0
    %556 = vmatpush1.msra.mxu0 0.0
    %557 = vmatprep.subr.mxu0 0.0
    %558 = vmatpush1.msra.mxu0 0.0
    %559 = vmatprep.subr.mxu0 0.0
    %560 = vmatpush1.msra.mxu0 0.0
    %561 = vmatprep.subr.mxu0 0.0
    %562 = vmatpush1.msra.mxu0 0.0
    %563 = vmatprep.subr.mxu0 0.0
    %564 = vmatpush1.msra.mxu0 0.0
    %565 = vmatprep.subr.mxu0 0.0
    %566 = vmatpush1.msra.mxu0 0.0
    %567 = vmatprep.subr.mxu0 0.0
    %568 = vmatpush1.msra.mxu0 0.0
    %569 = vmatprep.subr.mxu0 0.0
    %570 = vmatpush1.msra.mxu0 0.0
    %571 = vmatprep.subr.mxu0 0.0
    %572 = vmatpush1.msra.mxu0 0.0
    %573 = vmatprep.subr.mxu0 0.0
    %574 = vmatpush1.msra.mxu0 0.0
    %575 = vmatprep.subr.mxu0 0.0
    %576 = vmatpush1.msra.mxu0 0.0
    %577 = vmatprep.subr.mxu0 0.0
    %578 = vmatpush1.msra.mxu0 0.0
    %579 = vmatprep.subr.mxu0 0.0
    %580 = vmatpush1.msra.mxu0 0.0
    %581 = vmatprep.mubr.f32.mxu0 0.0
    %v582 = vand.u32 %v88, 4294901760
    %583 = vmatmul.mubr.f32.gmra.mrb[0].mxu0 %v582
    %v584 = vpop.f32.mrb[0].mxu0
    %v585 = vadd.f32 %v506, %v584
    %v586 = vpop.f32.mrb[0].mxu0
    %587 = vmatprep.mubr.f32.mxu0 0.0
    %v588 = vand.u32 %v90, 4294901760
    %589 = vmatmul.mubr.f32.gmra.mrb[0].mxu0 %v588
    %v590 = vpop.f32.mrb[0].mxu0
    %v591 = vadd.f32 %v512, %v590
    %v592 = vpop.f32.mrb[0].mxu0
    %593 = vdwg.mxu0
    %v596 = vcombine.high %v585, %v585
    %v598 = vunpack.c.l.s4 1983009808
    %v599 = vunpack.c.0.s8 %v598
    %v600 = vlaneseq
    %v601 = vshrl.u32 %v600, 7
    %v602 = vsub.s32 %v599, %v601
    %v603 = vrot.slane %v585, %v602
    %v605 = vunpack.c.l.s4 1983009808
    %v606 = vunpack.c.0.s8 %v605
    %v607 = vlaneseq
    %v608 = vshrl.u32 %v607, 7
    %v609 = vsub.s32 %v606, %v608
    %v610 = vrot.slane %v596, %v609
    %v611 = vcombine.high %v603, %v603
    %v612 = vcombine.high %v610, %v610
    %v613 = vcombine.high %v591, %v591
    %v615 = vunpack.c.l.s4 1983009808
    %v616 = vunpack.c.0.s8 %v615
    %v617 = vlaneseq
    %v618 = vshrl.u32 %v617, 7
    %v619 = vsub.s32 %v616, %v618
    %v620 = vrot.slane %v591, %v619
    %v622 = vunpack.c.l.s4 1983009808
    %v623 = vunpack.c.0.s8 %v622
    %v624 = vlaneseq
    %v625 = vshrl.u32 %v624, 7
    %v626 = vsub.s32 %v623, %v625
    %v627 = vrot.slane %v613, %v626
    %v628 = vcombine.high %v620, %v620
    %v629 = vcombine.high %v627, %v627
    %vm638 = vcmask 261120
    %v640 = vsel %vm638, 0.0, 0
    %642 = vmatprep.subr.mxu0 0.0
    %v643 = vand.u32 %v27, 4294901760
    %644 = vmatpush1.msra.mxu0 %v643
    %645 = vmatprep.subr.mxu0 0.0
    %v646 = vand.u32 %v28, 4294901760
    %647 = vmatpush1.msra.mxu0 %v646
    %648 = vmatprep.subr.mxu0 0.0
    %v649 = vand.u32 %v29, 4294901760
    %650 = vmatpush1.msra.mxu0 %v649
    %651 = vmatprep.subr.mxu0 0.0
    %v652 = vand.u32 %v30, 4294901760
    %653 = vmatpush1.msra.mxu0 %v652
    %654 = vmatprep.subr.mxu0 0.0
    %655 = vmatpush1.msra.mxu0 0.0
    %656 = vmatprep.subr.mxu0 0.0
    %657 = vmatpush1.msra.mxu0 0.0
    %658 = vmatprep.subr.mxu0 0.0
    %659 = vmatpush1.msra.mxu0 0.0
    %660 = vmatprep.subr.mxu0 0.0
    %661 = vmatpush1.msra.mxu0 0.0
    %662 = vmatprep.subr.mxu0 0.0
    %663 = vmatpush1.msra.mxu0 0.0
    %664 = vmatprep.subr.mxu0 0.0
    %665 = vmatpush1.msra.mxu0 0.0
    %666 = vmatprep.subr.mxu0 0.0
    %667 = vmatpush1.msra.mxu0 0.0
    %668 = vmatprep.subr.mxu0 0.0
    %669 = vmatpush1.msra.mxu0 0.0
    %670 = vmatprep.subr.mxu0 0.0
    %671 = vmatpush1.msra.mxu0 0.0
    %672 = vmatprep.subr.mxu0 0.0
    %673 = vmatpush1.msra.mxu0 0.0
    %674 = vmatprep.subr.mxu0 0.0
    %675 = vmatpush1.msra.mxu0 0.0
    %676 = vmatprep.subr.mxu0 0.0
    %677 = vmatpush1.msra.mxu0 0.0
    %678 = vmatprep.subr.mxu0 0.0
    %679 = vmatpush1.msra.mxu0 0.0
    %680 = vmatprep.subr.mxu0 0.0
    %681 = vmatpush1.msra.mxu0 0.0
    %682 = vmatprep.subr.mxu0 0.0
    %683 = vmatpush1.msra.mxu0 0.0
    %684 = vmatprep.subr.mxu0 0.0
    %685 = vmatpush1.msra.mxu0 0.0
    %686 = vmatprep.subr.mxu0 0.0
    %687 = vmatpush1.msra.mxu0 0.0
    %688 = vmatprep.subr.mxu0 0.0
    %689 = vmatpush1.msra.mxu0 0.0
    %690 = vmatprep.subr.mxu0 0.0
    %691 = vmatpush1.msra.mxu0 0.0
    %692 = vmatprep.subr.mxu0 0.0
    %693 = vmatpush1.msra.mxu0 0.0
    %694 = vmatprep.subr.mxu0 0.0
    %695 = vmatpush1.msra.mxu0 0.0
    %696 = vmatprep.subr.mxu0 0.0
    %697 = vmatpush1.msra.mxu0 0.0
    %698 = vmatprep.subr.mxu0 0.0
    %699 = vmatpush1.msra.mxu0 0.0
    %700 = vmatprep.subr.mxu0 0.0
    %701 = vmatpush1.msra.mxu0 0.0
    %702 = vmatprep.subr.mxu0 0.0
    %703 = vmatpush1.msra.mxu0 0.0
    %704 = vmatprep.subr.mxu0 0.0
    %705 = vmatpush1.msra.mxu0 0.0
    %706 = vmatprep.subr.mxu0 0.0
    %707 = vmatpush1.msra.mxu0 0.0
    %708 = vmatprep.subr.mxu0 0.0
    %709 = vmatpush1.msra.mxu0 0.0
    %710 = vmatprep.mubr.f32.mxu0 0.0
    %v711 = vand.u32 %v640, 4294901760
    %v712 = vsub.f32 %v640, %v711
    %v713 = vand.u32 %v712, 4294901760
    %v714 = vsub.f32 %v712, %v713
    %v715 = vand.u32 %v714, 4294901760
    %716 = vmatmul.mubr.f32.gmra.mrb[0].mxu0 %v715
    %v717 = vpop.f32.mrb[0].mxu0
    %v718 = vadd.f32 0.0, %v717
    %v719 = vpop.f32.mrb[0].mxu0
    %720 = vdwg.mxu0
    %721 = vmatprep.subr.mxu0 0.0
    %v722 = vand.u32 %v27, 4294901760
    %v723 = vsub.f32 %v27, %v722
    %v724 = vand.u32 %v723, 4294901760
    %v725 = vsub.f32 %v723, %v724
    %v726 = vand.u32 %v725, 4294901760
    %727 = vmatpush1.msra.mxu0 %v726
    %728 = vmatprep.subr.mxu0 0.0
    %v729 = vand.u32 %v28, 4294901760
    %v730 = vsub.f32 %v28, %v729
    %v731 = vand.u32 %v730, 4294901760
    %v732 = vsub.f32 %v730, %v731
    %v733 = vand.u32 %v732, 4294901760
    %734 = vmatpush1.msra.mxu0 %v733
    %735 = vmatprep.subr.mxu0 0.0
    %v736 = vand.u32 %v29, 4294901760
    %v737 = vsub.f32 %v29, %v736
    %v738 = vand.u32 %v737, 4294901760
    %v739 = vsub.f32 %v737, %v738
    %v740 = vand.u32 %v739, 4294901760
    %741 = vmatpush1.msra.mxu0 %v740
    %742 = vmatprep.subr.mxu0 0.0
    %v743 = vand.u32 %v30, 4294901760
    %v744 = vsub.f32 %v30, %v743
    %v745 = vand.u32 %v744, 4294901760
    %v746 = vsub.f32 %v744, %v745
    %v747 = vand.u32 %v746, 4294901760
    %748 = vmatpush1.msra.mxu0 %v747
    %749 = vmatprep.subr.mxu0 0.0
    %750 = vmatpush1.msra.mxu0 0.0
    %751 = vmatprep.subr.mxu0 0.0
    %752 = vmatpush1.msra.mxu0 0.0
    %753 = vmatprep.subr.mxu0 0.0
    %754 = vmatpush1.msra.mxu0 0.0
    %755 = vmatprep.subr.mxu0 0.0
    %756 = vmatpush1.msra.mxu0 0.0
    %757 = vmatprep.subr.mxu0 0.0
    %758 = vmatpush1.msra.mxu0 0.0
    %759 = vmatprep.subr.mxu0 0.0
    %760 = vmatpush1.msra.mxu0 0.0
    %761 = vmatprep.subr.mxu0 0.0
    %762 = vmatpush1.msra.mxu0 0.0
    %763 = vmatprep.subr.mxu0 0.0
    %764 = vmatpush1.msra.mxu0 0.0
    %765 = vmatprep.subr.mxu0 0.0
    %766 = vmatpush1.msra.mxu0 0.0
    %767 = vmatprep.subr.mxu0 0.0
    %768 = vmatpush1.msra.mxu0 0.0
    %769 = vmatprep.subr.mxu0 0.0
    %770 = vmatpush1.msra.mxu0 0.0
    %771 = vmatprep.subr.mxu0 0.0
    %772 = vmatpush1.msra.mxu0 0.0
    %773 = vmatprep.subr.mxu0 0.0
    %774 = vmatpush1.msra.mxu0 0.0
    %775 = vmatprep.subr.mxu0 0.0
    %776 = vmatpush1.msra.mxu0 0.0
    %777 = vmatprep.subr.mxu0 0.0
    %778 = vmatpush1.msra.mxu0 0.0
    %779 = vmatprep.subr.mxu0 0.0
    %780 = vmatpush1.msra.mxu0 0.0
    %781 = vmatprep.subr.mxu0 0.0
    %782 = vmatpush1.msra.mxu0 0.0
    %783 = vmatprep.subr.mxu0 0.0
    %784 = vmatpush1.msra.mxu0 0.0
    %785 = vmatprep.subr.mxu0 0.0
    %786 = vmatpush1.msra.mxu0 0.0
    %787 = vmatprep.subr.mxu0 0.0
    %788 = vmatpush1.msra.mxu0 0.0
    %789 = vmatprep.subr.mxu0 0.0
    %790 = vmatpush1.msra.mxu0 0.0
    %791 = vmatprep.subr.mxu0 0.0
    %792 = vmatpush1.msra.mxu0 0.0
    %793 = vmatprep.subr.mxu0 0.0
    %794 = vmatpush1.msra.mxu0 0.0
    %795 = vmatprep.subr.mxu0 0.0
    %796 = vmatpush1.msra.mxu0 0.0
    %797 = vmatprep.subr.mxu0 0.0
    %798 = vmatpush1.msra.mxu0 0.0
    %799 = vmatprep.subr.mxu0 0.0
    %800 = vmatpush1.msra.mxu0 0.0
    %801 = vmatprep.subr.mxu0 0.0
    %802 = vmatpush1.msra.mxu0 0.0
    %803 = vmatprep.subr.mxu0 0.0
    %804 = vmatpush1.msra.mxu0 0.0
    %805 = vmatprep.mubr.f32.mxu0 0.0
    %v806 = vand.u32 %v640, 4294901760
    %807 = vmatmul.mubr.f32.gmra.mrb[0].mxu0 %v806
    %v808 = vpop.f32.mrb[0].mxu0
    %v809 = vadd.f32 %v718, %v808
    %v810 = vpop.f32.mrb[0].mxu0
    %811 = vdwg.mxu0
    %812 = vmatprep.subr.mxu0 0.0
    %v813 = vand.u32 %v27, 4294901760
    %v814 = vsub.f32 %v27, %v813
    %815 = vmatpush1.msra.mxu0 %v814
    %816 = vmatprep.subr.mxu0 0.0
    %v817 = vand.u32 %v28, 4294901760
    %v818 = vsub.f32 %v28, %v817
    %819 = vmatpush1.msra.mxu0 %v818
    %820 = vmatprep.subr.mxu0 0.0
    %v821 = vand.u32 %v29, 4294901760
    %v822 = vsub.f32 %v29, %v821
    %823 = vmatpush1.msra.mxu0 %v822
    %824 = vmatprep.subr.mxu0 0.0
    %v825 = vand.u32 %v30, 4294901760
    %v826 = vsub.f32 %v30, %v825
    %827 = vmatpush1.msra.mxu0 %v826
    %828 = vmatprep.subr.mxu0 0.0
    %829 = vmatpush1.msra.mxu0 0.0
    %830 = vmatprep.subr.mxu0 0.0
    %831 = vmatpush1.msra.mxu0 0.0
    %832 = vmatprep.subr.mxu0 0.0
    %833 = vmatpush1.msra.mxu0 0.0
    %834 = vmatprep.subr.mxu0 0.0
    %835 = vmatpush1.msra.mxu0 0.0
    %836 = vmatprep.subr.mxu0 0.0
    %837 = vmatpush1.msra.mxu0 0.0
    %838 = vmatprep.subr.mxu0 0.0
    %839 = vmatpush1.msra.mxu0 0.0
    %840 = vmatprep.subr.mxu0 0.0
    %841 = vmatpush1.msra.mxu0 0.0
    %842 = vmatprep.subr.mxu0 0.0
    %843 = vmatpush1.msra.mxu0 0.0
    %844 = vmatprep.subr.mxu0 0.0
    %845 = vmatpush1.msra.mxu0 0.0
    %846 = vmatprep.subr.mxu0 0.0
    %847 = vmatpush1.msra.mxu0 0.0
    %848 = vmatprep.subr.mxu0 0.0
    %849 = vmatpush1.msra.mxu0 0.0
    %850 = vmatprep.subr.mxu0 0.0
    %851 = vmatpush1.msra.mxu0 0.0
    %852 = vmatprep.subr.mxu0 0.0
    %853 = vmatpush1.msra.mxu0 0.0
    %854 = vmatprep.subr.mxu0 0.0
    %855 = vmatpush1.msra.mxu0 0.0
    %856 = vmatprep.subr.mxu0 0.0
    %857 = vmatpush1.msra.mxu0 0.0
    %858 = vmatprep.subr.mxu0 0.0
    %859 = vmatpush1.msra.mxu0 0.0
    %860 = vmatprep.subr.mxu0 0.0
    %861 = vmatpush1.msra.mxu0 0.0
    %862 = vmatprep.subr.mxu0 0.0
    %863 = vmatpush1.msra.mxu0 0.0
    %864 = vmatprep.subr.mxu0 0.0
    %865 = vmatpush1.msra.mxu0 0.0
    %866 = vmatprep.subr.mxu0 0.0
    %867 = vmatpush1.msra.mxu0 0.0
    %868 = vmatprep.subr.mxu0 0.0
    %869 = vmatpush1.msra.mxu0 0.0
    %870 = vmatprep.subr.mxu0 0.0
    %871 = vmatpush1.msra.mxu0 0.0
    %872 = vmatprep.subr.mxu0 0.0
    %873 = vmatpush1.msra.mxu0 0.0
    %874 = vmatprep.subr.mxu0 0.0
    %875 = vmatpush1.msra.mxu0 0.0
    %876 = vmatprep.subr.mxu0 0.0
    %877 = vmatpush1.msra.mxu0 0.0
    %878 = vmatprep.subr.mxu0 0.0
    %879 = vmatpush1.msra.mxu0 0.0
    %880 = vmatprep.subr.mxu0 0.0
    %881 = vmatpush1.msra.mxu0 0.0
    %882 = vmatprep.subr.mxu0 0.0
    %883 = vmatpush1.msra.mxu0 0.0
    %884 = vmatprep.mubr.f32.mxu0 0.0
    %v885 = vand.u32 %v640, 4294901760
    %v886 = vsub.f32 %v640, %v885
    %887 = vmatmul.mubr.f32.gmra.mrb[0].mxu0 %v886
    %v888 = vpop.f32.mrb[0].mxu0
    %v889 = vadd.f32 %v809, %v888
    %v890 = vpop.f32.mrb[0].mxu0
    %891 = vdwg.mxu0
    %892 = vmatprep.subr.mxu0 0.0
    %v893 = vand.u32 %v27, 4294901760
    %894 = vmatpush1.msra.mxu0 %v893
    %895 = vmatprep.subr.mxu0 0.0
    %v896 = vand.u32 %v28, 4294901760
    %897 = vmatpush1.msra.mxu0 %v896
    %898 = vmatprep.subr.mxu0 0.0
    %v899 = vand.u32 %v29, 4294901760
    %900 = vmatpush1.msra.mxu0 %v899
    %901 = vmatprep.subr.mxu0 0.0
    %v902 = vand.u32 %v30, 4294901760
    %903 = vmatpush1.msra.mxu0 %v902
    %904 = vmatprep.subr.mxu0 0.0
    %905 = vmatpush1.msra.mxu0 0.0
    %906 = vmatprep.subr.mxu0 0.0
    %907 = vmatpush1.msra.mxu0 0.0
    %908 = vmatprep.subr.mxu0 0.0
    %909 = vmatpush1.msra.mxu0 0.0
    %910 = vmatprep.subr.mxu0 0.0
    %911 = vmatpush1.msra.mxu0 0.0
    %912 = vmatprep.subr.mxu0 0.0
    %913 = vmatpush1.msra.mxu0 0.0
    %914 = vmatprep.subr.mxu0 0.0
    %915 = vmatpush1.msra.mxu0 0.0
    %916 = vmatprep.subr.mxu0 0.0
    %917 = vmatpush1.msra.mxu0 0.0
    %918 = vmatprep.subr.mxu0 0.0
    %919 = vmatpush1.msra.mxu0 0.0
    %920 = vmatprep.subr.mxu0 0.0
    %921 = vmatpush1.msra.mxu0 0.0
    %922 = vmatprep.subr.mxu0 0.0
    %923 = vmatpush1.msra.mxu0 0.0
    %924 = vmatprep.subr.mxu0 0.0
    %925 = vmatpush1.msra.mxu0 0.0
    %926 = vmatprep.subr.mxu0 0.0
    %927 = vmatpush1.msra.mxu0 0.0
    %928 = vmatprep.subr.mxu0 0.0
    %929 = vmatpush1.msra.mxu0 0.0
    %930 = vmatprep.subr.mxu0 0.0
    %931 = vmatpush1.msra.mxu0 0.0
    %932 = vmatprep.subr.mxu0 0.0
    %933 = vmatpush1.msra.mxu0 0.0
    %934 = vmatprep.subr.mxu0 0.0
    %935 = vmatpush1.msra.mxu0 0.0
    %936 = vmatprep.subr.mxu0 0.0
    %937 = vmatpush1.msra.mxu0 0.0
    %938 = vmatprep.subr.mxu0 0.0
    %939 = vmatpush1.msra.mxu0 0.0
    %940 = vmatprep.subr.mxu0 0.0
    %941 = vmatpush1.msra.mxu0 0.0
    %942 = vmatprep.subr.mxu0 0.0
    %943 = vmatpush1.msra.mxu0 0.0
    %944 = vmatprep.subr.mxu0 0.0
    %945 = vmatpush1.msra.mxu0 0.0
    %946 = vmatprep.subr.mxu0 0.0
    %947 = vmatpush1.msra.mxu0 0.0
    %948 = vmatprep.subr.mxu0 0.0
    %949 = vmatpush1.msra.mxu0 0.0
    %950 = vmatprep.subr.mxu0 0.0
    %951 = vmatpush1.msra.mxu0 0.0
    %952 = vmatprep.subr.mxu0 0.0
    %953 = vmatpush1.msra.mxu0 0.0
    %954 = vmatprep.subr.mxu0 0.0
    %955 = vmatpush1.msra.mxu0 0.0
    %956 = vmatprep.subr.mxu0 0.0
    %957 = vmatpush1.msra.mxu0 0.0
    %958 = vmatprep.subr.mxu0 0.0
    %959 = vmatpush1.msra.mxu0 0.0
    %960 = vmatprep.mubr.f32.mxu0 0.0
    %v961 = vand.u32 %v640, 4294901760
    %v962 = vsub.f32 %v640, %v961
    %v963 = vand.u32 %v962, 4294901760
    %964 = vmatmul.mubr.f32.gmra.mrb[0].mxu0 %v963
    %v965 = vpop.f32.mrb[0].mxu0
    %v966 = vadd.f32 %v889, %v965
    %v967 = vpop.f32.mrb[0].mxu0
    %968 = vdwg.mxu0
    %969 = vmatprep.subr.mxu0 0.0
    %v970 = vand.u32 %v27, 4294901760
    %v971 = vsub.f32 %v27, %v970
    %v972 = vand.u32 %v971, 4294901760
    %973 = vmatpush1.msra.mxu0 %v972
    %974 = vmatprep.subr.mxu0 0.0
    %v975 = vand.u32 %v28, 4294901760
    %v976 = vsub.f32 %v28, %v975
    %v977 = vand.u32 %v976, 4294901760
    %978 = vmatpush1.msra.mxu0 %v977
    %979 = vmatprep.subr.mxu0 0.0
    %v980 = vand.u32 %v29, 4294901760
    %v981 = vsub.f32 %v29, %v980
    %v982 = vand.u32 %v981, 4294901760
    %983 = vmatpush1.msra.mxu0 %v982
    %984 = vmatprep.subr.mxu0 0.0
    %v985 = vand.u32 %v30, 4294901760
    %v986 = vsub.f32 %v30, %v985
    %v987 = vand.u32 %v986, 4294901760
    %988 = vmatpush1.msra.mxu0 %v987
    %989 = vmatprep.subr.mxu0 0.0
    %990 = vmatpush1.msra.mxu0 0.0
    %991 = vmatprep.subr.mxu0 0.0
    %992 = vmatpush1.msra.mxu0 0.0
    %993 = vmatprep.subr.mxu0 0.0
    %994 = vmatpush1.msra.mxu0 0.0
    %995 = vmatprep.subr.mxu0 0.0
    %996 = vmatpush1.msra.mxu0 0.0
    %997 = vmatprep.subr.mxu0 0.0
    %998 = vmatpush1.msra.mxu0 0.0
    %999 = vmatprep.subr.mxu0 0.0
    %1000 = vmatpush1.msra.mxu0 0.0
    %1001 = vmatprep.subr.mxu0 0.0
    %1002 = vmatpush1.msra.mxu0 0.0
    %1003 = vmatprep.subr.mxu0 0.0
    %1004 = vmatpush1.msra.mxu0 0.0
    %1005 = vmatprep.subr.mxu0 0.0
    %1006 = vmatpush1.msra.mxu0 0.0
    %1007 = vmatprep.subr.mxu0 0.0
    %1008 = vmatpush1.msra.mxu0 0.0
    %1009 = vmatprep.subr.mxu0 0.0
    %1010 = vmatpush1.msra.mxu0 0.0
    %1011 = vmatprep.subr.mxu0 0.0
    %1012 = vmatpush1.msra.mxu0 0.0
    %1013 = vmatprep.subr.mxu0 0.0
    %1014 = vmatpush1.msra.mxu0 0.0
    %1015 = vmatprep.subr.mxu0 0.0
    %1016 = vmatpush1.msra.mxu0 0.0
    %1017 = vmatprep.subr.mxu0 0.0
    %1018 = vmatpush1.msra.mxu0 0.0
    %1019 = vmatprep.subr.mxu0 0.0
    %1020 = vmatpush1.msra.mxu0 0.0
    %1021 = vmatprep.subr.mxu0 0.0
    %1022 = vmatpush1.msra.mxu0 0.0
    %1023 = vmatprep.subr.mxu0 0.0
    %1024 = vmatpush1.msra.mxu0 0.0
    %1025 = vmatprep.subr.mxu0 0.0
    %1026 = vmatpush1.msra.mxu0 0.0
    %1027 = vmatprep.subr.mxu0 0.0
    %1028 = vmatpush1.msra.mxu0 0.0
    %1029 = vmatprep.subr.mxu0 0.0
    %1030 = vmatpush1.msra.mxu0 0.0
    %1031 = vmatprep.subr.mxu0 0.0
    %1032 = vmatpush1.msra.mxu0 0.0
    %1033 = vmatprep.subr.mxu0 0.0
    %1034 = vmatpush1.msra.mxu0 0.0
    %1035 = vmatprep.subr.mxu0 0.0
    %1036 = vmatpush1.msra.mxu0 0.0
    %1037 = vmatprep.subr.mxu0 0.0
    %1038 = vmatpush1.msra.mxu0 0.0
    %1039 = vmatprep.subr.mxu0 0.0
    %1040 = vmatpush1.msra.mxu0 0.0
    %1041 = vmatprep.subr.mxu0 0.0
    %1042 = vmatpush1.msra.mxu0 0.0
    %1043 = vmatprep.subr.mxu0 0.0
    %1044 = vmatpush1.msra.mxu0 0.0
    %1045 = vmatprep.mubr.f32.mxu0 0.0
    %v1046 = vand.u32 %v640, 4294901760
    %1047 = vmatmul.mubr.f32.gmra.mrb[0].mxu0 %v1046
    %v1048 = vpop.f32.mrb[0].mxu0
    %v1049 = vadd.f32 %v966, %v1048
    %v1050 = vpop.f32.mrb[0].mxu0
    %1051 = vdwg.mxu0
    %1052 = vmatprep.subr.mxu0 0.0
    %v1053 = vand.u32 %v27, 4294901760
    %1054 = vmatpush1.msra.mxu0 %v1053
    %1055 = vmatprep.subr.mxu0 0.0
    %v1056 = vand.u32 %v28, 4294901760
    %1057 = vmatpush1.msra.mxu0 %v1056
    %1058 = vmatprep.subr.mxu0 0.0
    %v1059 = vand.u32 %v29, 4294901760
    %1060 = vmatpush1.msra.mxu0 %v1059
    %1061 = vmatprep.subr.mxu0 0.0
    %v1062 = vand.u32 %v30, 4294901760
    %1063 = vmatpush1.msra.mxu0 %v1062
    %1064 = vmatprep.subr.mxu0 0.0
    %1065 = vmatpush1.msra.mxu0 0.0
    %1066 = vmatprep.subr.mxu0 0.0
    %1067 = vmatpush1.msra.mxu0 0.0
    %1068 = vmatprep.subr.mxu0 0.0
    %1069 = vmatpush1.msra.mxu0 0.0
    %1070 = vmatprep.subr.mxu0 0.0
    %1071 = vmatpush1.msra.mxu0 0.0
    %1072 = vmatprep.subr.mxu0 0.0
    %1073 = vmatpush1.msra.mxu0 0.0
    %1074 = vmatprep.subr.mxu0 0.0
    %1075 = vmatpush1.msra.mxu0 0.0
    %1076 = vmatprep.subr.mxu0 0.0
    %1077 = vmatpush1.msra.mxu0 0.0
    %1078 = vmatprep.subr.mxu0 0.0
    %1079 = vmatpush1.msra.mxu0 0.0
    %1080 = vmatprep.subr.mxu0 0.0
    %1081 = vmatpush1.msra.mxu0 0.0
    %1082 = vmatprep.subr.mxu0 0.0
    %1083 = vmatpush1.msra.mxu0 0.0
    %1084 = vmatprep.subr.mxu0 0.0
    %1085 = vmatpush1.msra.mxu0 0.0
    %1086 = vmatprep.subr.mxu0 0.0
    %1087 = vmatpush1.msra.mxu0 0.0
    %1088 = vmatprep.subr.mxu0 0.0
    %1089 = vmatpush1.msra.mxu0 0.0
    %1090 = vmatprep.subr.mxu0 0.0
    %1091 = vmatpush1.msra.mxu0 0.0
    %1092 = vmatprep.subr.mxu0 0.0
    %1093 = vmatpush1.msra.mxu0 0.0
    %1094 = vmatprep.subr.mxu0 0.0
    %1095 = vmatpush1.msra.mxu0 0.0
    %1096 = vmatprep.subr.mxu0 0.0
    %1097 = vmatpush1.msra.mxu0 0.0
    %1098 = vmatprep.subr.mxu0 0.0
    %1099 = vmatpush1.msra.mxu0 0.0
    %1100 = vmatprep.subr.mxu0 0.0
    %1101 = vmatpush1.msra.mxu0 0.0
    %1102 = vmatprep.subr.mxu0 0.0
    %1103 = vmatpush1.msra.mxu0 0.0
    %1104 = vmatprep.subr.mxu0 0.0
    %1105 = vmatpush1.msra.mxu0 0.0
    %1106 = vmatprep.subr.mxu0 0.0
    %1107 = vmatpush1.msra.mxu0 0.0
    %1108 = vmatprep.subr.mxu0 0.0
    %1109 = vmatpush1.msra.mxu0 0.0
    %1110 = vmatprep.subr.mxu0 0.0
    %1111 = vmatpush1.msra.mxu0 0.0
    %1112 = vmatprep.subr.mxu0 0.0
    %1113 = vmatpush1.msra.mxu0 0.0
    %1114 = vmatprep.subr.mxu0 0.0
    %1115 = vmatpush1.msra.mxu0 0.0
    %1116 = vmatprep.subr.mxu0 0.0
    %1117 = vmatpush1.msra.mxu0 0.0
    %1118 = vmatprep.subr.mxu0 0.0
    %1119 = vmatpush1.msra.mxu0 0.0
    %1120 = vmatprep.mubr.f32.mxu0 0.0
    %v1121 = vand.u32 %v640, 4294901760
    %1122 = vmatmul.mubr.f32.gmra.mrb[0].mxu0 %v1121
    %v1123 = vpop.f32.mrb[0].mxu0
    %v1124 = vadd.f32 %v1049, %v1123
    %v1125 = vpop.f32.mrb[0].mxu0
    %1126 = vdwg.mxu0
    %v1127 = vadd.f32 %v603, %v1124
    %v1128 = vxor.u32 %v1127, 2147483648
    %v1129 = vmul.f32 %v1128, 1.442695
    %v1130 = vpow.pop %v1129
    %v1131 = vadd.f32 %v1130, 1.0
    %v1132 = vrcp.pop %v1131
    %v1133 = vmul.f32 1.0, %v1132
    %v1134 = vtanh.pop %v1127
    %v1135 = vmul.f32 %v1133, 0.0
    %1137 = vrot.lane.b32.xlu0 %v1134, 64
    %v1138 = vpop.permute.xlu0 %1137
    %v1140 = vmul.f32 %v1133, %v1138
    %1142 = vrot.lane.b32.xlu0 %v1140, 32
    %v1143 = vpop.permute.xlu0 %1142
    %v1145 = vadd.f32 %v1135, %v1143
    %v1146 = vtanh.pop %v1145
    %1148 = vrot.lane.b32.xlu0 %v1146, 64
    %v1149 = vpop.permute.xlu0 %1148
    %v1151 = vmul.f32 %v1133, %v1149
    %v1154 = vunpack.c.l.s4 1983009808
    %v1155 = vunpack.c.0.s8 %v1154
    %v1156 = vlaneseq
    %v1157 = vshrl.u32 %v1156, 7
    %v1158 = vsub.s32 %v1155, %v1157
    %v1159 = vrot.slane %v1151, %v1158
    %1160 = vrot.lane.b32.xlu0 %v1159, 32
    %v1161 = vpop.permute.xlu0 %1160
    %v1162 = vsel %vm638, %v1161, 0
    %1164 = vmatprep.subr.mxu0 0.0
    %v1165 = vand.u32 %v27, 4294901760
    %1166 = vmatpush1.msra.mxu0 %v1165
    %1167 = vmatprep.subr.mxu0 0.0
    %v1168 = vand.u32 %v28, 4294901760
    %1169 = vmatpush1.msra.mxu0 %v1168
    %1170 = vmatprep.subr.mxu0 0.0
    %v1171 = vand.u32 %v29, 4294901760
    %1172 = vmatpush1.msra.mxu0 %v1171
    %1173 = vmatprep.subr.mxu0 0.0
    %v1174 = vand.u32 %v30, 4294901760
    %1175 = vmatpush1.msra.mxu0 %v1174
    %1176 = vmatprep.subr.mxu0 0.0
    %1177 = vmatpush1.msra.mxu0 0.0
    %1178 = vmatprep.subr.mxu0 0.0
    %1179 = vmatpush1.msra.mxu0 0.0
    %1180 = vmatprep.subr.mxu0 0.0
    %1181 = vmatpush1.msra.mxu0 0.0
    %1182 = vmatprep.subr.mxu0 0.0
    %1183 = vmatpush1.msra.mxu0 0.0
    %1184 = vmatprep.subr.mxu0 0.0
    %1185 = vmatpush1.msra.mxu0 0.0
    %1186 = vmatprep.subr.mxu0 0.0
    %1187 = vmatpush1.msra.mxu0 0.0
    %1188 = vmatprep.subr.mxu0 0.0
    %1189 = vmatpush1.msra.mxu0 0.0
    %1190 = vmatprep.subr.mxu0 0.0
    %1191 = vmatpush1.msra.mxu0 0.0
    %1192 = vmatprep.subr.mxu0 0.0
    %1193 = vmatpush1.msra.mxu0 0.0
    %1194 = vmatprep.subr.mxu0 0.0
    %1195 = vmatpush1.msra.mxu0 0.0
    %1196 = vmatprep.subr.mxu0 0.0
    %1197 = vmatpush1.msra.mxu0 0.0
    %1198 = vmatprep.subr.mxu0 0.0
    %1199 = vmatpush1.msra.mxu0 0.0
    %1200 = vmatprep.subr.mxu0 0.0
    %1201 = vmatpush1.msra.mxu0 0.0
    %1202 = vmatprep.subr.mxu0 0.0
    %1203 = vmatpush1.msra.mxu0 0.0
    %1204 = vmatprep.subr.mxu0 0.0
    %1205 = vmatpush1.msra.mxu0 0.0
    %1206 = vmatprep.subr.mxu0 0.0
    %1207 = vmatpush1.msra.mxu0 0.0
    %1208 = vmatprep.subr.mxu0 0.0
    %1209 = vmatpush1.msra.mxu0 0.0
    %1210 = vmatprep.subr.mxu0 0.0
    %1211 = vmatpush1.msra.mxu0 0.0
    %1212 = vmatprep.subr.mxu0 0.0
    %1213 = vmatpush1.msra.mxu0 0.0
    %1214 = vmatprep.subr.mxu0 0.0
    %1215 = vmatpush1.msra.mxu0 0.0
    %1216 = vmatprep.subr.mxu0 0.0
    %1217 = vmatpush1.msra.mxu0 0.0
    %1218 = vmatprep.subr.mxu0 0.0
    %1219 = vmatpush1.msra.mxu0 0.0
    %1220 = vmatprep.subr.mxu0 0.0
    %1221 = vmatpush1.msra.mxu0 0.0
    %1222 = vmatprep.subr.mxu0 0.0
    %1223 = vmatpush1.msra.mxu0 0.0
    %1224 = vmatprep.subr.mxu0 0.0
    %1225 = vmatpush1.msra.mxu0 0.0
    %1226 = vmatprep.subr.mxu0 0.0
    %1227 = vmatpush1.msra.mxu0 0.0
    %1228 = vmatprep.subr.mxu0 0.0
    %1229 = vmatpush1.msra.mxu0 0.0
    %1230 = vmatprep.subr.mxu0 0.0
    %1231 = vmatpush1.msra.mxu0 0.0
    %1232 = vmatprep.mubr.f32.mxu0 0.0
    %v1233 = vand.u32 %v1162, 4294901760
    %v1234 = vsub.f32 %v1162, %v1233
    %v1235 = vand.u32 %v1234, 4294901760
    %v1236 = vsub.f32 %v1234, %v1235
    %v1237 = vand.u32 %v1236, 4294901760
    %1238 = vmatmul.mubr.f32.gmra.mrb[0].mxu0 %v1237
    %v1239 = vpop.f32.mrb[0].mxu0
    %v1240 = vadd.f32 0.0, %v1239
    %v1241 = vpop.f32.mrb[0].mxu0
    %1242 = vdwg.mxu0
    %1243 = vmatprep.subr.mxu0 0.0
    %v1244 = vand.u32 %v27, 4294901760
    %v1245 = vsub.f32 %v27, %v1244
    %v1246 = vand.u32 %v1245, 4294901760
    %v1247 = vsub.f32 %v1245, %v1246
    %v1248 = vand.u32 %v1247, 4294901760
    %1249 = vmatpush1.msra.mxu0 %v1248
    %1250 = vmatprep.subr.mxu0 0.0
    %v1251 = vand.u32 %v28, 4294901760
    %v1252 = vsub.f32 %v28, %v1251
    %v1253 = vand.u32 %v1252, 4294901760
    %v1254 = vsub.f32 %v1252, %v1253
    %v1255 = vand.u32 %v1254, 4294901760
    %1256 = vmatpush1.msra.mxu0 %v1255
    %1257 = vmatprep.subr.mxu0 0.0
    %v1258 = vand.u32 %v29, 4294901760
    %v1259 = vsub.f32 %v29, %v1258
    %v1260 = vand.u32 %v1259, 4294901760
    %v1261 = vsub.f32 %v1259, %v1260
    %v1262 = vand.u32 %v1261, 4294901760
    %1263 = vmatpush1.msra.mxu0 %v1262
    %1264 = vmatprep.subr.mxu0 0.0
    %v1265 = vand.u32 %v30, 4294901760
    %v1266 = vsub.f32 %v30, %v1265
    %v1267 = vand.u32 %v1266, 4294901760
    %v1268 = vsub.f32 %v1266, %v1267
    %v1269 = vand.u32 %v1268, 4294901760
    %1270 = vmatpush1.msra.mxu0 %v1269
    %1271 = vmatprep.subr.mxu0 0.0
    %1272 = vmatpush1.msra.mxu0 0.0
    %1273 = vmatprep.subr.mxu0 0.0
    %1274 = vmatpush1.msra.mxu0 0.0
    %1275 = vmatprep.subr.mxu0 0.0
    %1276 = vmatpush1.msra.mxu0 0.0
    %1277 = vmatprep.subr.mxu0 0.0
    %1278 = vmatpush1.msra.mxu0 0.0
    %1279 = vmatprep.subr.mxu0 0.0
    %1280 = vmatpush1.msra.mxu0 0.0
    %1281 = vmatprep.subr.mxu0 0.0
    %1282 = vmatpush1.msra.mxu0 0.0
    %1283 = vmatprep.subr.mxu0 0.0
    %1284 = vmatpush1.msra.mxu0 0.0
    %1285 = vmatprep.subr.mxu0 0.0
    %1286 = vmatpush1.msra.mxu0 0.0
    %1287 = vmatprep.subr.mxu0 0.0
    %1288 = vmatpush1.msra.mxu0 0.0
    %1289 = vmatprep.subr.mxu0 0.0
    %1290 = vmatpush1.msra.mxu0 0.0
    %1291 = vmatprep.subr.mxu0 0.0
    %1292 = vmatpush1.msra.mxu0 0.0
    %1293 = vmatprep.subr.mxu0 0.0
    %1294 = vmatpush1.msra.mxu0 0.0
    %1295 = vmatprep.subr.mxu0 0.0
    %1296 = vmatpush1.msra.mxu0 0.0
    %1297 = vmatprep.subr.mxu0 0.0
    %1298 = vmatpush1.msra.mxu0 0.0
    %1299 = vmatprep.subr.mxu0 0.0
    %1300 = vmatpush1.msra.mxu0 0.0
    %1301 = vmatprep.subr.mxu0 0.0
    %1302 = vmatpush1.msra.mxu0 0.0
    %1303 = vmatprep.subr.mxu0 0.0
    %1304 = vmatpush1.msra.mxu0 0.0
    %1305 = vmatprep.subr.mxu0 0.0
    %1306 = vmatpush1.msra.mxu0 0.0
    %1307 = vmatprep.subr.mxu0 0.0
    %1308 = vmatpush1.msra.mxu0 0.0
    %1309 = vmatprep.subr.mxu0 0.0
    %1310 = vmatpush1.msra.mxu0 0.0
    %1311 = vmatprep.subr.mxu0 0.0
    %1312 = vmatpush1.msra.mxu0 0.0
    %1313 = vmatprep.subr.mxu0 0.0
    %1314 = vmatpush1.msra.mxu0 0.0
    %1315 = vmatprep.subr.mxu0 0.0
    %1316 = vmatpush1.msra.mxu0 0.0
    %1317 = vmatprep.subr.mxu0 0.0
    %1318 = vmatpush1.msra.mxu0 0.0
    %1319 = vmatprep.subr.mxu0 0.0
    %1320 = vmatpush1.msra.mxu0 0.0
    %1321 = vmatprep.subr.mxu0 0.0
    %1322 = vmatpush1.msra.mxu0 0.0
    %1323 = vmatprep.subr.mxu0 0.0
    %1324 = vmatpush1.msra.mxu0 0.0
    %1325 = vmatprep.subr.mxu0 0.0
    %1326 = vmatpush1.msra.mxu0 0.0
    %1327 = vmatprep.mubr.f32.mxu0 0.0
    %v1328 = vand.u32 %v1162, 4294901760
    %1329 = vmatmul.mubr.f32.gmra.mrb[0].mxu0 %v1328
    %v1330 = vpop.f32.mrb[0].mxu0
    %v1331 = vadd.f32 %v1240, %v1330
    %v1332 = vpop.f32.mrb[0].mxu0
    %1333 = vdwg.mxu0
    %1334 = vmatprep.subr.mxu0 0.0
    %v1335 = vand.u32 %v27, 4294901760
    %v1336 = vsub.f32 %v27, %v1335
    %1337 = vmatpush1.msra.mxu0 %v1336
    %1338 = vmatprep.subr.mxu0 0.0
    %v1339 = vand.u32 %v28, 4294901760
    %v1340 = vsub.f32 %v28, %v1339
    %1341 = vmatpush1.msra.mxu0 %v1340
    %1342 = vmatprep.subr.mxu0 0.0
    %v1343 = vand.u32 %v29, 4294901760
    %v1344 = vsub.f32 %v29, %v1343
    %1345 = vmatpush1.msra.mxu0 %v1344
    %1346 = vmatprep.subr.mxu0 0.0
    %v1347 = vand.u32 %v30, 4294901760
    %v1348 = vsub.f32 %v30, %v1347
    %1349 = vmatpush1.msra.mxu0 %v1348
    %1350 = vmatprep.subr.mxu0 0.0
    %1351 = vmatpush1.msra.mxu0 0.0
    %1352 = vmatprep.subr.mxu0 0.0
    %1353 = vmatpush1.msra.mxu0 0.0
    %1354 = vmatprep.subr.mxu0 0.0
    %1355 = vmatpush1.msra.mxu0 0.0
    %1356 = vmatprep.subr.mxu0 0.0
    %1357 = vmatpush1.msra.mxu0 0.0
    %1358 = vmatprep.subr.mxu0 0.0
    %1359 = vmatpush1.msra.mxu0 0.0
    %1360 = vmatprep.subr.mxu0 0.0
    %1361 = vmatpush1.msra.mxu0 0.0
    %1362 = vmatprep.subr.mxu0 0.0
    %1363 = vmatpush1.msra.mxu0 0.0
    %1364 = vmatprep.subr.mxu0 0.0
    %1365 = vmatpush1.msra.mxu0 0.0
    %1366 = vmatprep.subr.mxu0 0.0
    %1367 = vmatpush1.msra.mxu0 0.0
    %1368 = vmatprep.subr.mxu0 0.0
    %1369 = vmatpush1.msra.mxu0 0.0
    %1370 = vmatprep.subr.mxu0 0.0
    %1371 = vmatpush1.msra.mxu0 0.0
    %1372 = vmatprep.subr.mxu0 0.0
    %1373 = vmatpush1.msra.mxu0 0.0
    %1374 = vmatprep.subr.mxu0 0.0
    %1375 = vmatpush1.msra.mxu0 0.0
    %1376 = vmatprep.subr.mxu0 0.0
    %1377 = vmatpush1.msra.mxu0 0.0
    %1378 = vmatprep.subr.mxu0 0.0
    %1379 = vmatpush1.msra.mxu0 0.0
    %1380 = vmatprep.subr.mxu0 0.0
    %1381 = vmatpush1.msra.mxu0 0.0
    %1382 = vmatprep.subr.mxu0 0.0
    %1383 = vmatpush1.msra.mxu0 0.0
    %1384 = vmatprep.subr.mxu0 0.0
    %1385 = vmatpush1.msra.mxu0 0.0
    %1386 = vmatprep.subr.mxu0 0.0
    %1387 = vmatpush1.msra.mxu0 0.0
    %1388 = vmatprep.subr.mxu0 0.0
    %1389 = vmatpush1.msra.mxu0 0.0
    %1390 = vmatprep.subr.mxu0 0.0
    %1391 = vmatpush1.msra.mxu0 0.0
    %1392 = vmatprep.subr.mxu0 0.0
    %1393 = vmatpush1.msra.mxu0 0.0
    %1394 = vmatprep.subr.mxu0 0.0
    %1395 = vmatpush1.msra.mxu0 0.0
    %1396 = vmatprep.subr.mxu0 0.0
    %1397 = vmatpush1.msra.mxu0 0.0
    %1398 = vmatprep.subr.mxu0 0.0
    %1399 = vmatpush1.msra.mxu0 0.0
    %1400 = vmatprep.subr.mxu0 0.0
    %1401 = vmatpush1.msra.mxu0 0.0
    %1402 = vmatprep.subr.mxu0 0.0
    %1403 = vmatpush1.msra.mxu0 0.0
    %1404 = vmatprep.subr.mxu0 0.0
    %1405 = vmatpush1.msra.mxu0 0.0
    %1406 = vmatprep.mubr.f32.mxu0 0.0
    %v1407 = vand.u32 %v1162, 4294901760
    %v1408 = vsub.f32 %v1162, %v1407
    %1409 = vmatmul.mubr.f32.gmra.mrb[0].mxu0 %v1408
    %v1410 = vpop.f32.mrb[0].mxu0
    %v1411 = vadd.f32 %v1331, %v1410
    %v1412 = vpop.f32.mrb[0].mxu0
    %1413 = vdwg.mxu0
    %1414 = vmatprep.subr.mxu0 0.0
    %v1415 = vand.u32 %v27, 4294901760
    %1416 = vmatpush1.msra.mxu0 %v1415
    %1417 = vmatprep.subr.mxu0 0.0
    %v1418 = vand.u32 %v28, 4294901760
    %1419 = vmatpush1.msra.mxu0 %v1418
    %1420 = vmatprep.subr.mxu0 0.0
    %v1421 = vand.u32 %v29, 4294901760
    %1422 = vmatpush1.msra.mxu0 %v1421
    %1423 = vmatprep.subr.mxu0 0.0
    %v1424 = vand.u32 %v30, 4294901760
    %1425 = vmatpush1.msra.mxu0 %v1424
    %1426 = vmatprep.subr.mxu0 0.0
    %1427 = vmatpush1.msra.mxu0 0.0
    %1428 = vmatprep.subr.mxu0 0.0
    %1429 = vmatpush1.msra.mxu0 0.0
    %1430 = vmatprep.subr.mxu0 0.0
    %1431 = vmatpush1.msra.mxu0 0.0
    %1432 = vmatprep.subr.mxu0 0.0
    %1433 = vmatpush1.msra.mxu0 0.0
    %1434 = vmatprep.subr.mxu0 0.0
    %1435 = vmatpush1.msra.mxu0 0.0
    %1436 = vmatprep.subr.mxu0 0.0
    %1437 = vmatpush1.msra.mxu0 0.0
    %1438 = vmatprep.subr.mxu0 0.0
    %1439 = vmatpush1.msra.mxu0 0.0
    %1440 = vmatprep.subr.mxu0 0.0
    %1441 = vmatpush1.msra.mxu0 0.0
    %1442 = vmatprep.subr.mxu0 0.0
    %1443 = vmatpush1.msra.mxu0 0.0
    %1444 = vmatprep.subr.mxu0 0.0
    %1445 = vmatpush1.msra.mxu0 0.0
    %1446 = vmatprep.subr.mxu0 0.0
    %1447 = vmatpush1.msra.mxu0 0.0
    %1448 = vmatprep.subr.mxu0 0.0
    %1449 = vmatpush1.msra.mxu0 0.0
    %1450 = vmatprep.subr.mxu0 0.0
    %1451 = vmatpush1.msra.mxu0 0.0
    %1452 = vmatprep.subr.mxu0 0.0
    %1453 = vmatpush1.msra.mxu0 0.0
    %1454 = vmatprep.subr.mxu0 0.0
    %1455 = vmatpush1.msra.mxu0 0.0
    %1456 = vmatprep.subr.mxu0 0.0
    %1457 = vmatpush1.msra.mxu0 0.0
    %1458 = vmatprep.subr.mxu0 0.0
    %1459 = vmatpush1.msra.mxu0 0.0
    %1460 = vmatprep.subr.mxu0 0.0
    %1461 = vmatpush1.msra.mxu0 0.0
    %1462 = vmatprep.subr.mxu0 0.0
    %1463 = vmatpush1.msra.mxu0 0.0
    %1464 = vmatprep.subr.mxu0 0.0
    %1465 = vmatpush1.msra.mxu0 0.0
    %1466 = vmatprep.subr.mxu0 0.0
    %1467 = vmatpush1.msra.mxu0 0.0
    %1468 = vmatprep.subr.mxu0 0.0
    %1469 = vmatpush1.msra.mxu0 0.0
    %1470 = vmatprep.subr.mxu0 0.0
    %1471 = vmatpush1.msra.mxu0 0.0
    %1472 = vmatprep.subr.mxu0 0.0
    %1473 = vmatpush1.msra.mxu0 0.0
    %1474 = vmatprep.subr.mxu0 0.0
    %1475 = vmatpush1.msra.mxu0 0.0
    %1476 = vmatprep.subr.mxu0 0.0
    %1477 = vmatpush1.msra.mxu0 0.0
    %1478 = vmatprep.subr.mxu0 0.0
    %1479 = vmatpush1.msra.mxu0 0.0
    %1480 = vmatprep.subr.mxu0 0.0
    %1481 = vmatpush1.msra.mxu0 0.0
    %1482 = vmatprep.mubr.f32.mxu0 0.0
    %v1483 = vand.u32 %v1162, 4294901760
    %v1484 = vsub.f32 %v1162, %v1483
    %v1485 = vand.u32 %v1484, 4294901760
    %1486 = vmatmul.mubr.f32.gmra.mrb[0].mxu0 %v1485
    %v1487 = vpop.f32.mrb[0].mxu0
    %v1488 = vadd.f32 %v1411, %v1487
    %v1489 = vpop.f32.mrb[0].mxu0
    %1490 = vdwg.mxu0
    %1491 = vmatprep.subr.mxu0 0.0
    %v1492 = vand.u32 %v27, 4294901760
    %v1493 = vsub.f32 %v27, %v1492
    %v1494 = vand.u32 %v1493, 4294901760
    %1495 = vmatpush1.msra.mxu0 %v1494
    %1496 = vmatprep.subr.mxu0 0.0
    %v1497 = vand.u32 %v28, 4294901760
    %v1498 = vsub.f32 %v28, %v1497
    %v1499 = vand.u32 %v1498, 4294901760
    %1500 = vmatpush1.msra.mxu0 %v1499
    %1501 = vmatprep.subr.mxu0 0.0
    %v1502 = vand.u32 %v29, 4294901760
    %v1503 = vsub.f32 %v29, %v1502
    %v1504 = vand.u32 %v1503, 4294901760
    %1505 = vmatpush1.msra.mxu0 %v1504
    %1506 = vmatprep.subr.mxu0 0.0
    %v1507 = vand.u32 %v30, 4294901760
    %v1508 = vsub.f32 %v30, %v1507
    %v1509 = vand.u32 %v1508, 4294901760
    %1510 = vmatpush1.msra.mxu0 %v1509
    %1511 = vmatprep.subr.mxu0 0.0
    %1512 = vmatpush1.msra.mxu0 0.0
    %1513 = vmatprep.subr.mxu0 0.0
    %1514 = vmatpush1.msra.mxu0 0.0
    %1515 = vmatprep.subr.mxu0 0.0
    %1516 = vmatpush1.msra.mxu0 0.0
    %1517 = vmatprep.subr.mxu0 0.0
    %1518 = vmatpush1.msra.mxu0 0.0
    %1519 = vmatprep.subr.mxu0 0.0
    %1520 = vmatpush1.msra.mxu0 0.0
    %1521 = vmatprep.subr.mxu0 0.0
    %1522 = vmatpush1.msra.mxu0 0.0
    %1523 = vmatprep.subr.mxu0 0.0
    %1524 = vmatpush1.msra.mxu0 0.0
    %1525 = vmatprep.subr.mxu0 0.0
    %1526 = vmatpush1.msra.mxu0 0.0
    %1527 = vmatprep.subr.mxu0 0.0
    %1528 = vmatpush1.msra.mxu0 0.0
    %1529 = vmatprep.subr.mxu0 0.0
    %1530 = vmatpush1.msra.mxu0 0.0
    %1531 = vmatprep.subr.mxu0 0.0
    %1532 = vmatpush1.msra.mxu0 0.0
    %1533 = vmatprep.subr.mxu0 0.0
    %1534 = vmatpush1.msra.mxu0 0.0
    %1535 = vmatprep.subr.mxu0 0.0
    %1536 = vmatpush1.msra.mxu0 0.0
    %1537 = vmatprep.subr.mxu0 0.0
    %1538 = vmatpush1.msra.mxu0 0.0
    %1539 = vmatprep.subr.mxu0 0.0
    %1540 = vmatpush1.msra.mxu0 0.0
    %1541 = vmatprep.subr.mxu0 0.0
    %1542 = vmatpush1.msra.mxu0 0.0
    %1543 = vmatprep.subr.mxu0 0.0
    %1544 = vmatpush1.msra.mxu0 0.0
    %1545 = vmatprep.subr.mxu0 0.0
    %1546 = vmatpush1.msra.mxu0 0.0
    %1547 = vmatprep.subr.mxu0 0.0
    %1548 = vmatpush1.msra.mxu0 0.0
    %1549 = vmatprep.subr.mxu0 0.0
    %1550 = vmatpush1.msra.mxu0 0.0
    %1551 = vmatprep.subr.mxu0 0.0
    %1552 = vmatpush1.msra.mxu0 0.0
    %1553 = vmatprep.subr.mxu0 0.0
    %1554 = vmatpush1.msra.mxu0 0.0
    %1555 = vmatprep.subr.mxu0 0.0
    %1556 = vmatpush1.msra.mxu0 0.0
    %1557 = vmatprep.subr.mxu0 0.0
    %1558 = vmatpush1.msra.mxu0 0.0
    %1559 = vmatprep.subr.mxu0 0.0
    %1560 = vmatpush1.msra.mxu0 0.0
    %1561 = vmatprep.subr.mxu0 0.0
    %1562 = vmatpush1.msra.mxu0 0.0
    %1563 = vmatprep.subr.mxu0 0.0
    %1564 = vmatpush1.msra.mxu0 0.0
    %1565 = vmatprep.subr.mxu0 0.0
    %1566 = vmatpush1.msra.mxu0 0.0
    %1567 = vmatprep.mubr.f32.mxu0 0.0
    %v1568 = vand.u32 %v1162, 4294901760
    %1569 = vmatmul.mubr.f32.gmra.mrb[0].mxu0 %v1568
    %v1570 = vpop.f32.mrb[0].mxu0
    %v1571 = vadd.f32 %v1488, %v1570
    %v1572 = vpop.f32.mrb[0].mxu0
    %1573 = vdwg.mxu0
    %1574 = vmatprep.subr.mxu0 0.0
    %v1575 = vand.u32 %v27, 4294901760
    %1576 = vmatpush1.msra.mxu0 %v1575
    %1577 = vmatprep.subr.mxu0 0.0
    %v1578 = vand.u32 %v28, 4294901760
    %1579 = vmatpush1.msra.mxu0 %v1578
    %1580 = vmatprep.subr.mxu0 0.0
    %v1581 = vand.u32 %v29, 4294901760
    %1582 = vmatpush1.msra.mxu0 %v1581
    %1583 = vmatprep.subr.mxu0 0.0
    %v1584 = vand.u32 %v30, 4294901760
    %1585 = vmatpush1.msra.mxu0 %v1584
    %1586 = vmatprep.subr.mxu0 0.0
    %1587 = vmatpush1.msra.mxu0 0.0
    %1588 = vmatprep.subr.mxu0 0.0
    %1589 = vmatpush1.msra.mxu0 0.0
    %1590 = vmatprep.subr.mxu0 0.0
    %1591 = vmatpush1.msra.mxu0 0.0
    %1592 = vmatprep.subr.mxu0 0.0
    %1593 = vmatpush1.msra.mxu0 0.0
    %1594 = vmatprep.subr.mxu0 0.0
    %1595 = vmatpush1.msra.mxu0 0.0
    %1596 = vmatprep.subr.mxu0 0.0
    %1597 = vmatpush1.msra.mxu0 0.0
    %1598 = vmatprep.subr.mxu0 0.0
    %1599 = vmatpush1.msra.mxu0 0.0
    %1600 = vmatprep.subr.mxu0 0.0
    %1601 = vmatpush1.msra.mxu0 0.0
    %1602 = vmatprep.subr.mxu0 0.0
    %1603 = vmatpush1.msra.mxu0 0.0
    %1604 = vmatprep.subr.mxu0 0.0
    %1605 = vmatpush1.msra.mxu0 0.0
    %1606 = vmatprep.subr.mxu0 0.0
    %1607 = vmatpush1.msra.mxu0 0.0
    %1608 = vmatprep.subr.mxu0 0.0
    %1609 = vmatpush1.msra.mxu0 0.0
    %1610 = vmatprep.subr.mxu0 0.0
    %1611 = vmatpush1.msra.mxu0 0.0
    %1612 = vmatprep.subr.mxu0 0.0
    %1613 = vmatpush1.msra.mxu0 0.0
    %1614 = vmatprep.subr.mxu0 0.0
    %1615 = vmatpush1.msra.mxu0 0.0
    %1616 = vmatprep.subr.mxu0 0.0
    %1617 = vmatpush1.msra.mxu0 0.0
    %1618 = vmatprep.subr.mxu0 0.0
    %1619 = vmatpush1.msra.mxu0 0.0
    %1620 = vmatprep.subr.mxu0 0.0
    %1621 = vmatpush1.msra.mxu0 0.0
    %1622 = vmatprep.subr.mxu0 0.0
    %1623 = vmatpush1.msra.mxu0 0.0
    %1624 = vmatprep.subr.mxu0 0.0
    %1625 = vmatpush1.msra.mxu0 0.0
    %1626 = vmatprep.subr.mxu0 0.0
    %1627 = vmatpush1.msra.mxu0 0.0
    %1628 = vmatprep.subr.mxu0 0.0
    %1629 = vmatpush1.msra.mxu0 0.0
    %1630 = vmatprep.subr.mxu0 0.0
    %1631 = vmatpush1.msra.mxu0 0.0
    %1632 = vmatprep.subr.mxu0 0.0
    %1633 = vmatpush1.msra.mxu0 0.0
    %1634 = vmatprep.subr.mxu0 0.0
    %1635 = vmatpush1.msra.mxu0 0.0
    %1636 = vmatprep.subr.mxu0 0.0
    %1637 = vmatpush1.msra.mxu0 0.0
    %1638 = vmatprep.subr.mxu0 0.0
    %1639 = vmatpush1.msra.mxu0 0.0
    %1640 = vmatprep.subr.mxu0 0.0
    %1641 = vmatpush1.msra.mxu0 0.0
    %1642 = vmatprep.mubr.f32.mxu0 0.0
    %v1643 = vand.u32 %v1162, 4294901760
    %1644 = vmatmul.mubr.f32.gmra.mrb[0].mxu0 %v1643
    %v1645 = vpop.f32.mrb[0].mxu0
    %v1646 = vadd.f32 %v1571, %v1645
    %v1647 = vpop.f32.mrb[0].mxu0
    %1648 = vdwg.mxu0
    %v1649 = vadd.f32 %v611, %v1646
    %v1650 = vxor.u32 %v1649, 2147483648
    %v1651 = vmul.f32 %v1650, 1.442695
    %v1652 = vpow.pop %v1651
    %v1653 = vadd.f32 %v1652, 1.0
    %v1654 = vrcp.pop %v1653
    %v1655 = vmul.f32 1.0, %v1654
    %v1656 = vtanh.pop %v1649
    %v1657 = vmul.f32 %v1655, %v1145
    %1659 = vrot.lane.b32.xlu0 %v1656, 64
    %v1660 = vpop.permute.xlu0 %1659
    %v1662 = vmul.f32 %v1655, %v1660
    %1664 = vrot.lane.b32.xlu0 %v1662, 32
    %v1665 = vpop.permute.xlu0 %1664
    %v1667 = vadd.f32 %v1657, %v1665
    %v1668 = vtanh.pop %v1667
    %1670 = vrot.lane.b32.xlu0 %v1668, 64
    %v1671 = vpop.permute.xlu0 %1670
    %v1673 = vmul.f32 %v1655, %v1671
    %v1676 = vunpack.c.l.s4 1983009808
    %v1677 = vunpack.c.0.s8 %v1676
    %v1678 = vlaneseq
    %v1679 = vshrl.u32 %v1678, 7
    %v1680 = vsub.s32 %v1677, %v1679
    %v1681 = vrot.slane %v1673, %v1680
    %1682 = vrot.lane.b32.xlu0 %v1681, 32
    %v1683 = vpop.permute.xlu0 %1682
    %v1684 = vsel %vm638, %v1683, 0
    %1686 = vmatprep.subr.mxu0 0.0
    %v1687 = vand.u32 %v27, 4294901760
    %1688 = vmatpush1.msra.mxu0 %v1687
    %1689 = vmatprep.subr.mxu0 0.0
    %v1690 = vand.u32 %v28, 4294901760
    %1691 = vmatpush1.msra.mxu0 %v1690
    %1692 = vmatprep.subr.mxu0 0.0
    %v1693 = vand.u32 %v29, 4294901760
    %1694 = vmatpush1.msra.mxu0 %v1693
    %1695 = vmatprep.subr.mxu0 0.0
    %v1696 = vand.u32 %v30, 4294901760
    %1697 = vmatpush1.msra.mxu0 %v1696
    %1698 = vmatprep.subr.mxu0 0.0
    %1699 = vmatpush1.msra.mxu0 0.0
    %1700 = vmatprep.subr.mxu0 0.0
    %1701 = vmatpush1.msra.mxu0 0.0
    %1702 = vmatprep.subr.mxu0 0.0
    %1703 = vmatpush1.msra.mxu0 0.0
    %1704 = vmatprep.subr.mxu0 0.0
    %1705 = vmatpush1.msra.mxu0 0.0
    %1706 = vmatprep.subr.mxu0 0.0
    %1707 = vmatpush1.msra.mxu0 0.0
    %1708 = vmatprep.subr.mxu0 0.0
    %1709 = vmatpush1.msra.mxu0 0.0
    %1710 = vmatprep.subr.mxu0 0.0
    %1711 = vmatpush1.msra.mxu0 0.0
    %1712 = vmatprep.subr.mxu0 0.0
    %1713 = vmatpush1.msra.mxu0 0.0
    %1714 = vmatprep.subr.mxu0 0.0
    %1715 = vmatpush1.msra.mxu0 0.0
    %1716 = vmatprep.subr.mxu0 0.0
    %1717 = vmatpush1.msra.mxu0 0.0
    %1718 = vmatprep.subr.mxu0 0.0
    %1719 = vmatpush1.msra.mxu0 0.0
    %1720 = vmatprep.subr.mxu0 0.0
    %1721 = vmatpush1.msra.mxu0 0.0
    %1722 = vmatprep.subr.mxu0 0.0
    %1723 = vmatpush1.msra.mxu0 0.0
    %1724 = vmatprep.subr.mxu0 0.0
    %1725 = vmatpush1.msra.mxu0 0.0
    %1726 = vmatprep.subr.mxu0 0.0
    %1727 = vmatpush1.msra.mxu0 0.0
    %1728 = vmatprep.subr.mxu0 0.0
    %1729 = vmatpush1.msra.mxu0 0.0
    %1730 = vmatprep.subr.mxu0 0.0
    %1731 = vmatpush1.msra.mxu0 0.0
    %1732 = vmatprep.subr.mxu0 0.0
    %1733 = vmatpush1.msra.mxu0 0.0
    %1734 = vmatprep.subr.mxu0 0.0
    %1735 = vmatpush1.msra.mxu0 0.0
    %1736 = vmatprep.subr.mxu0 0.0
    %1737 = vmatpush1.msra.mxu0 0.0
    %1738 = vmatprep.subr.mxu0 0.0
    %1739 = vmatpush1.msra.mxu0 0.0
    %1740 = vmatprep.subr.mxu0 0.0
    %1741 = vmatpush1.msra.mxu0 0.0
    %1742 = vmatprep.subr.mxu0 0.0
    %1743 = vmatpush1.msra.mxu0 0.0
    %1744 = vmatprep.subr.mxu0 0.0
    %1745 = vmatpush1.msra.mxu0 0.0
    %1746 = vmatprep.subr.mxu0 0.0
    %1747 = vmatpush1.msra.mxu0 0.0
    %1748 = vmatprep.subr.mxu0 0.0
    %1749 = vmatpush1.msra.mxu0 0.0
    %1750 = vmatprep.subr.mxu0 0.0
    %1751 = vmatpush1.msra.mxu0 0.0
    %1752 = vmatprep.subr.mxu0 0.0
    %1753 = vmatpush1.msra.mxu0 0.0
    %1754 = vmatprep.mubr.f32.mxu0 0.0
    %v1755 = vand.u32 %v1684, 4294901760
    %v1756 = vsub.f32 %v1684, %v1755
    %v1757 = vand.u32 %v1756, 4294901760
    %v1758 = vsub.f32 %v1756, %v1757
    %v1759 = vand.u32 %v1758, 4294901760
    %1760 = vmatmul.mubr.f32.gmra.mrb[0].mxu0 %v1759
    %v1761 = vpop.f32.mrb[0].mxu0
    %v1762 = vadd.f32 0.0, %v1761
    %v1763 = vpop.f32.mrb[0].mxu0
    %1764 = vdwg.mxu0
    %1765 = vmatprep.subr.mxu0 0.0
    %v1766 = vand.u32 %v27, 4294901760
    %v1767 = vsub.f32 %v27, %v1766
    %v1768 = vand.u32 %v1767, 4294901760
    %v1769 = vsub.f32 %v1767, %v1768
    %v1770 = vand.u32 %v1769, 4294901760
    %1771 = vmatpush1.msra.mxu0 %v1770
    %1772 = vmatprep.subr.mxu0 0.0
    %v1773 = vand.u32 %v28, 4294901760
    %v1774 = vsub.f32 %v28, %v1773
    %v1775 = vand.u32 %v1774, 4294901760
    %v1776 = vsub.f32 %v1774, %v1775
    %v1777 = vand.u32 %v1776, 4294901760
    %1778 = vmatpush1.msra.mxu0 %v1777
    %1779 = vmatprep.subr.mxu0 0.0
    %v1780 = vand.u32 %v29, 4294901760
    %v1781 = vsub.f32 %v29, %v1780
    %v1782 = vand.u32 %v1781, 4294901760
    %v1783 = vsub.f32 %v1781, %v1782
    %v1784 = vand.u32 %v1783, 4294901760
    %1785 = vmatpush1.msra.mxu0 %v1784
    %1786 = vmatprep.subr.mxu0 0.0
    %v1787 = vand.u32 %v30, 4294901760
    %v1788 = vsub.f32 %v30, %v1787
    %v1789 = vand.u32 %v1788, 4294901760
    %v1790 = vsub.f32 %v1788, %v1789
    %v1791 = vand.u32 %v1790, 4294901760
    %1792 = vmatpush1.msra.mxu0 %v1791
    %1793 = vmatprep.subr.mxu0 0.0
    %1794 = vmatpush1.msra.mxu0 0.0
    %1795 = vmatprep.subr.mxu0 0.0
    %1796 = vmatpush1.msra.mxu0 0.0
    %1797 = vmatprep.subr.mxu0 0.0
    %1798 = vmatpush1.msra.mxu0 0.0
    %1799 = vmatprep.subr.mxu0 0.0
    %1800 = vmatpush1.msra.mxu0 0.0
    %1801 = vmatprep.subr.mxu0 0.0
    %1802 = vmatpush1.msra.mxu0 0.0
    %1803 = vmatprep.subr.mxu0 0.0
    %1804 = vmatpush1.msra.mxu0 0.0
    %1805 = vmatprep.subr.mxu0 0.0
    %1806 = vmatpush1.msra.mxu0 0.0
    %1807 = vmatprep.subr.mxu0 0.0
    %1808 = vmatpush1.msra.mxu0 0.0
    %1809 = vmatprep.subr.mxu0 0.0
    %1810 = vmatpush1.msra.mxu0 0.0
    %1811 = vmatprep.subr.mxu0 0.0
    %1812 = vmatpush1.msra.mxu0 0.0
    %1813 = vmatprep.subr.mxu0 0.0
    %1814 = vmatpush1.msra.mxu0 0.0
    %1815 = vmatprep.subr.mxu0 0.0
    %1816 = vmatpush1.msra.mxu0 0.0
    %1817 = vmatprep.subr.mxu0 0.0
    %1818 = vmatpush1.msra.mxu0 0.0
    %1819 = vmatprep.subr.mxu0 0.0
    %1820 = vmatpush1.msra.mxu0 0.0
    %1821 = vmatprep.subr.mxu0 0.0
    %1822 = vmatpush1.msra.mxu0 0.0
    %1823 = vmatprep.subr.mxu0 0.0
    %1824 = vmatpush1.msra.mxu0 0.0
    %1825 = vmatprep.subr.mxu0 0.0
    %1826 = vmatpush1.msra.mxu0 0.0
    %1827 = vmatprep.subr.mxu0 0.0
    %1828 = vmatpush1.msra.mxu0 0.0
    %1829 = vmatprep.subr.mxu0 0.0
    %1830 = vmatpush1.msra.mxu0 0.0
    %1831 = vmatprep.subr.mxu0 0.0
    %1832 = vmatpush1.msra.mxu0 0.0
    %1833 = vmatprep.subr.mxu0 0.0
    %1834 = vmatpush1.msra.mxu0 0.0
    %1835 = vmatprep.subr.mxu0 0.0
    %1836 = vmatpush1.msra.mxu0 0.0
    %1837 = vmatprep.subr.mxu0 0.0
    %1838 = vmatpush1.msra.mxu0 0.0
    %1839 = vmatprep.subr.mxu0 0.0
    %1840 = vmatpush1.msra.mxu0 0.0
    %1841 = vmatprep.subr.mxu0 0.0
    %1842 = vmatpush1.msra.mxu0 0.0
    %1843 = vmatprep.subr.mxu0 0.0
    %1844 = vmatpush1.msra.mxu0 0.0
    %1845 = vmatprep.subr.mxu0 0.0
    %1846 = vmatpush1.msra.mxu0 0.0
    %1847 = vmatprep.subr.mxu0 0.0
    %1848 = vmatpush1.msra.mxu0 0.0
    %1849 = vmatprep.mubr.f32.mxu0 0.0
    %v1850 = vand.u32 %v1684, 4294901760
    %1851 = vmatmul.mubr.f32.gmra.mrb[0].mxu0 %v1850
    %v1852 = vpop.f32.mrb[0].mxu0
    %v1853 = vadd.f32 %v1762, %v1852
    %v1854 = vpop.f32.mrb[0].mxu0
    %1855 = vdwg.mxu0
    %1856 = vmatprep.subr.mxu0 0.0
    %v1857 = vand.u32 %v27, 4294901760
    %v1858 = vsub.f32 %v27, %v1857
    %1859 = vmatpush1.msra.mxu0 %v1858
    %1860 = vmatprep.subr.mxu0 0.0
    %v1861 = vand.u32 %v28, 4294901760
    %v1862 = vsub.f32 %v28, %v1861
    %1863 = vmatpush1.msra.mxu0 %v1862
    %1864 = vmatprep.subr.mxu0 0.0
    %v1865 = vand.u32 %v29, 4294901760
    %v1866 = vsub.f32 %v29, %v1865
    %1867 = vmatpush1.msra.mxu0 %v1866
    %1868 = vmatprep.subr.mxu0 0.0
    %v1869 = vand.u32 %v30, 4294901760
    %v1870 = vsub.f32 %v30, %v1869
    %1871 = vmatpush1.msra.mxu0 %v1870
    %1872 = vmatprep.subr.mxu0 0.0
    %1873 = vmatpush1.msra.mxu0 0.0
    %1874 = vmatprep.subr.mxu0 0.0
    %1875 = vmatpush1.msra.mxu0 0.0
    %1876 = vmatprep.subr.mxu0 0.0
    %1877 = vmatpush1.msra.mxu0 0.0
    %1878 = vmatprep.subr.mxu0 0.0
    %1879 = vmatpush1.msra.mxu0 0.0
    %1880 = vmatprep.subr.mxu0 0.0
    %1881 = vmatpush1.msra.mxu0 0.0
    %1882 = vmatprep.subr.mxu0 0.0
    %1883 = vmatpush1.msra.mxu0 0.0
    %1884 = vmatprep.subr.mxu0 0.0
    %1885 = vmatpush1.msra.mxu0 0.0
    %1886 = vmatprep.subr.mxu0 0.0
    %1887 = vmatpush1.msra.mxu0 0.0
    %1888 = vmatprep.subr.mxu0 0.0
    %1889 = vmatpush1.msra.mxu0 0.0
    %1890 = vmatprep.subr.mxu0 0.0
    %1891 = vmatpush1.msra.mxu0 0.0
    %1892 = vmatprep.subr.mxu0 0.0
    %1893 = vmatpush1.msra.mxu0 0.0
    %1894 = vmatprep.subr.mxu0 0.0
    %1895 = vmatpush1.msra.mxu0 0.0
    %1896 = vmatprep.subr.mxu0 0.0
    %1897 = vmatpush1.msra.mxu0 0.0
    %1898 = vmatprep.subr.mxu0 0.0
    %1899 = vmatpush1.msra.mxu0 0.0
    %1900 = vmatprep.subr.mxu0 0.0
    %1901 = vmatpush1.msra.mxu0 0.0
    %1902 = vmatprep.subr.mxu0 0.0
    %1903 = vmatpush1.msra.mxu0 0.0
    %1904 = vmatprep.subr.mxu0 0.0
    %1905 = vmatpush1.msra.mxu0 0.0
    %1906 = vmatprep.subr.mxu0 0.0
    %1907 = vmatpush1.msra.mxu0 0.0
    %1908 = vmatprep.subr.mxu0 0.0
    %1909 = vmatpush1.msra.mxu0 0.0
    %1910 = vmatprep.subr.mxu0 0.0
    %1911 = vmatpush1.msra.mxu0 0.0
    %1912 = vmatprep.subr.mxu0 0.0
    %1913 = vmatpush1.msra.mxu0 0.0
    %1914 = vmatprep.subr.mxu0 0.0
    %1915 = vmatpush1.msra.mxu0 0.0
    %1916 = vmatprep.subr.mxu0 0.0
    %1917 = vmatpush1.msra.mxu0 0.0
    %1918 = vmatprep.subr.mxu0 0.0
    %1919 = vmatpush1.msra.mxu0 0.0
    %1920 = vmatprep.subr.mxu0 0.0
    %1921 = vmatpush1.msra.mxu0 0.0
    %1922 = vmatprep.subr.mxu0 0.0
    %1923 = vmatpush1.msra.mxu0 0.0
    %1924 = vmatprep.subr.mxu0 0.0
    %1925 = vmatpush1.msra.mxu0 0.0
    %1926 = vmatprep.subr.mxu0 0.0
    %1927 = vmatpush1.msra.mxu0 0.0
    %1928 = vmatprep.mubr.f32.mxu0 0.0
    %v1929 = vand.u32 %v1684, 4294901760
    %v1930 = vsub.f32 %v1684, %v1929
    %1931 = vmatmul.mubr.f32.gmra.mrb[0].mxu0 %v1930
    %v1932 = vpop.f32.mrb[0].mxu0
    %v1933 = vadd.f32 %v1853, %v1932
    %v1934 = vpop.f32.mrb[0].mxu0
    %1935 = vdwg.mxu0
    %1936 = vmatprep.subr.mxu0 0.0
    %v1937 = vand.u32 %v27, 4294901760
    %1938 = vmatpush1.msra.mxu0 %v1937
    %1939 = vmatprep.subr.mxu0 0.0
    %v1940 = vand.u32 %v28, 4294901760
    %1941 = vmatpush1.msra.mxu0 %v1940
    %1942 = vmatprep.subr.mxu0 0.0
    %v1943 = vand.u32 %v29, 4294901760
    %1944 = vmatpush1.msra.mxu0 %v1943
    %1945 = vmatprep.subr.mxu0 0.0
    %v1946 = vand.u32 %v30, 4294901760
    %1947 = vmatpush1.msra.mxu0 %v1946
    %1948 = vmatprep.subr.mxu0 0.0
    %1949 = vmatpush1.msra.mxu0 0.0
    %1950 = vmatprep.subr.mxu0 0.0
    %1951 = vmatpush1.msra.mxu0 0.0
    %1952 = vmatprep.subr.mxu0 0.0
    %1953 = vmatpush1.msra.mxu0 0.0
    %1954 = vmatprep.subr.mxu0 0.0
    %1955 = vmatpush1.msra.mxu0 0.0
    %1956 = vmatprep.subr.mxu0 0.0
    %1957 = vmatpush1.msra.mxu0 0.0
    %1958 = vmatprep.subr.mxu0 0.0
    %1959 = vmatpush1.msra.mxu0 0.0
    %1960 = vmatprep.subr.mxu0 0.0
    %1961 = vmatpush1.msra.mxu0 0.0
    %1962 = vmatprep.subr.mxu0 0.0
    %1963 = vmatpush1.msra.mxu0 0.0
    %1964 = vmatprep.subr.mxu0 0.0
    %1965 = vmatpush1.msra.mxu0 0.0
    %1966 = vmatprep.subr.mxu0 0.0
    %1967 = vmatpush1.msra.mxu0 0.0
    %1968 = vmatprep.subr.mxu0 0.0
    %1969 = vmatpush1.msra.mxu0 0.0
    %1970 = vmatprep.subr.mxu0 0.0
    %1971 = vmatpush1.msra.mxu0 0.0
    %1972 = vmatprep.subr.mxu0 0.0
    %1973 = vmatpush1.msra.mxu0 0.0
    %1974 = vmatprep.subr.mxu0 0.0
    %1975 = vmatpush1.msra.mxu0 0.0
    %1976 = vmatprep.subr.mxu0 0.0
    %1977 = vmatpush1.msra.mxu0 0.0
    %1978 = vmatprep.subr.mxu0 0.0
    %1979 = vmatpush1.msra.mxu0 0.0
    %1980 = vmatprep.subr.mxu0 0.0
    %1981 = vmatpush1.msra.mxu0 0.0
    %1982 = vmatprep.subr.mxu0 0.0
    %1983 = vmatpush1.msra.mxu0 0.0
    %1984 = vmatprep.subr.mxu0 0.0
    %1985 = vmatpush1.msra.mxu0 0.0
    %1986 = vmatprep.subr.mxu0 0.0
    %1987 = vmatpush1.msra.mxu0 0.0
    %1988 = vmatprep.subr.mxu0 0.0
    %1989 = vmatpush1.msra.mxu0 0.0
    %1990 = vmatprep.subr.mxu0 0.0
    %1991 = vmatpush1.msra.mxu0 0.0
    %1992 = vmatprep.subr.mxu0 0.0
    %1993 = vmatpush1.msra.mxu0 0.0
    %1994 = vmatprep.subr.mxu0 0.0
    %1995 = vmatpush1.msra.mxu0 0.0
    %1996 = vmatprep.subr.mxu0 0.0
    %1997 = vmatpush1.msra.mxu0 0.0
    %1998 = vmatprep.subr.mxu0 0.0
    %1999 = vmatpush1.msra.mxu0 0.0
    %2000 = vmatprep.subr.mxu0 0.0
    %2001 = vmatpush1.msra.mxu0 0.0
    %2002 = vmatprep.subr.mxu0 0.0
    %2003 = vmatpush1.msra.mxu0 0.0
    %2004 = vmatprep.mubr.f32.mxu0 0.0
    %v2005 = vand.u32 %v1684, 4294901760
    %v2006 = vsub.f32 %v1684, %v2005
    %v2007 = vand.u32 %v2006, 4294901760
    %2008 = vmatmul.mubr.f32.gmra.mrb[0].mxu0 %v2007
    %v2009 = vpop.f32.mrb[0].mxu0
    %v2010 = vadd.f32 %v1933, %v2009
    %v2011 = vpop.f32.mrb[0].mxu0
    %2012 = vdwg.mxu0
    %2013 = vmatprep.subr.mxu0 0.0
    %v2014 = vand.u32 %v27, 4294901760
    %v2015 = vsub.f32 %v27, %v2014
    %v2016 = vand.u32 %v2015, 4294901760
    %2017 = vmatpush1.msra.mxu0 %v2016
    %2018 = vmatprep.subr.mxu0 0.0
    %v2019 = vand.u32 %v28, 4294901760
    %v2020 = vsub.f32 %v28, %v2019
    %v2021 = vand.u32 %v2020, 4294901760
    %2022 = vmatpush1.msra.mxu0 %v2021
    %2023 = vmatprep.subr.mxu0 0.0
    %v2024 = vand.u32 %v29, 4294901760
    %v2025 = vsub.f32 %v29, %v2024
    %v2026 = vand.u32 %v2025, 4294901760
    %2027 = vmatpush1.msra.mxu0 %v2026
    %2028 = vmatprep.subr.mxu0 0.0
    %v2029 = vand.u32 %v30, 4294901760
    %v2030 = vsub.f32 %v30, %v2029
    %v2031 = vand.u32 %v2030, 4294901760
    %2032 = vmatpush1.msra.mxu0 %v2031
    %2033 = vmatprep.subr.mxu0 0.0
    %2034 = vmatpush1.msra.mxu0 0.0
    %2035 = vmatprep.subr.mxu0 0.0
    %2036 = vmatpush1.msra.mxu0 0.0
    %2037 = vmatprep.subr.mxu0 0.0
    %2038 = vmatpush1.msra.mxu0 0.0
    %2039 = vmatprep.subr.mxu0 0.0
    %2040 = vmatpush1.msra.mxu0 0.0
    %2041 = vmatprep.subr.mxu0 0.0
    %2042 = vmatpush1.msra.mxu0 0.0
    %2043 = vmatprep.subr.mxu0 0.0
    %2044 = vmatpush1.msra.mxu0 0.0
    %2045 = vmatprep.subr.mxu0 0.0
    %2046 = vmatpush1.msra.mxu0 0.0
    %2047 = vmatprep.subr.mxu0 0.0
    %2048 = vmatpush1.msra.mxu0 0.0
    %2049 = vmatprep.subr.mxu0 0.0
    %2050 = vmatpush1.msra.mxu0 0.0
    %2051 = vmatprep.subr.mxu0 0.0
    %2052 = vmatpush1.msra.mxu0 0.0
    %2053 = vmatprep.subr.mxu0 0.0
    %2054 = vmatpush1.msra.mxu0 0.0
    %2055 = vmatprep.subr.mxu0 0.0
    %2056 = vmatpush1.msra.mxu0 0.0
    %2057 = vmatprep.subr.mxu0 0.0
    %2058 = vmatpush1.msra.mxu0 0.0
    %2059 = vmatprep.subr.mxu0 0.0
    %2060 = vmatpush1.msra.mxu0 0.0
    %2061 = vmatprep.subr.mxu0 0.0
    %2062 = vmatpush1.msra.mxu0 0.0
    %2063 = vmatprep.subr.mxu0 0.0
    %2064 = vmatpush1.msra.mxu0 0.0
    %2065 = vmatprep.subr.mxu0 0.0
    %2066 = vmatpush1.msra.mxu0 0.0
    %2067 = vmatprep.subr.mxu0 0.0
    %2068 = vmatpush1.msra.mxu0 0.0
    %2069 = vmatprep.subr.mxu0 0.0
    %2070 = vmatpush1.msra.mxu0 0.0
    %2071 = vmatprep.subr.mxu0 0.0
    %2072 = vmatpush1.msra.mxu0 0.0
    %2073 = vmatprep.subr.mxu0 0.0
    %2074 = vmatpush1.msra.mxu0 0.0
    %2075 = vmatprep.subr.mxu0 0.0
    %2076 = vmatpush1.msra.mxu0 0.0
    %2077 = vmatprep.subr.mxu0 0.0
    %2078 = vmatpush1.msra.mxu0 0.0
    %2079 = vmatprep.subr.mxu0 0.0
    %2080 = vmatpush1.msra.mxu0 0.0
    %2081 = vmatprep.subr.mxu0 0.0
    %2082 = vmatpush1.msra.mxu0 0.0
    %2083 = vmatprep.subr.mxu0 0.0
    %2084 = vmatpush1.msra.mxu0 0.0
    %2085 = vmatprep.subr.mxu0 0.0
    %2086 = vmatpush1.msra.mxu0 0.0
    %2087 = vmatprep.subr.mxu0 0.0
    %2088 = vmatpush1.msra.mxu0 0.0
    %2089 = vmatprep.mubr.f32.mxu0 0.0
    %v2090 = vand.u32 %v1684, 4294901760
    %2091 = vmatmul.mubr.f32.gmra.mrb[0].mxu0 %v2090
    %v2092 = vpop.f32.mrb[0].mxu0
    %v2093 = vadd.f32 %v2010, %v2092
    %v2094 = vpop.f32.mrb[0].mxu0
    %2095 = vdwg.mxu0
    %2096 = vmatprep.subr.mxu0 0.0
    %v2097 = vand.u32 %v27, 4294901760
    %2098 = vmatpush1.msra.mxu0 %v2097
    %2099 = vmatprep.subr.mxu0 0.0
    %v2100 = vand.u32 %v28, 4294901760
    %2101 = vmatpush1.msra.mxu0 %v2100
    %2102 = vmatprep.subr.mxu0 0.0
    %v2103 = vand.u32 %v29, 4294901760
    %2104 = vmatpush1.msra.mxu0 %v2103
    %2105 = vmatprep.subr.mxu0 0.0
    %v2106 = vand.u32 %v30, 4294901760
    %2107 = vmatpush1.msra.mxu0 %v2106
    %2108 = vmatprep.subr.mxu0 0.0
    %2109 = vmatpush1.msra.mxu0 0.0
    %2110 = vmatprep.subr.mxu0 0.0
    %2111 = vmatpush1.msra.mxu0 0.0
    %2112 = vmatprep.subr.mxu0 0.0
    %2113 = vmatpush1.msra.mxu0 0.0
    %2114 = vmatprep.subr.mxu0 0.0
    %2115 = vmatpush1.msra.mxu0 0.0
    %2116 = vmatprep.subr.mxu0 0.0
    %2117 = vmatpush1.msra.mxu0 0.0
    %2118 = vmatprep.subr.mxu0 0.0
    %2119 = vmatpush1.msra.mxu0 0.0
    %2120 = vmatprep.subr.mxu0 0.0
    %2121 = vmatpush1.msra.mxu0 0.0
    %2122 = vmatprep.subr.mxu0 0.0
    %2123 = vmatpush1.msra.mxu0 0.0
    %2124 = vmatprep.subr.mxu0 0.0
    %2125 = vmatpush1.msra.mxu0 0.0
    %2126 = vmatprep.subr.mxu0 0.0
    %2127 = vmatpush1.msra.mxu0 0.0
    %2128 = vmatprep.subr.mxu0 0.0
    %2129 = vmatpush1.msra.mxu0 0.0
    %2130 = vmatprep.subr.mxu0 0.0
    %2131 = vmatpush1.msra.mxu0 0.0
    %2132 = vmatprep.subr.mxu0 0.0
    %2133 = vmatpush1.msra.mxu0 0.0
    %2134 = vmatprep.subr.mxu0 0.0
    %2135 = vmatpush1.msra.mxu0 0.0
    %2136 = vmatprep.subr.mxu0 0.0
    %2137 = vmatpush1.msra.mxu0 0.0
    %2138 = vmatprep.subr.mxu0 0.0
    %2139 = vmatpush1.msra.mxu0 0.0
    %2140 = vmatprep.subr.mxu0 0.0
    %2141 = vmatpush1.msra.mxu0 0.0
    %2142 = vmatprep.subr.mxu0 0.0
    %2143 = vmatpush1.msra.mxu0 0.0
    %2144 = vmatprep.subr.mxu0 0.0
    %2145 = vmatpush1.msra.mxu0 0.0
    %2146 = vmatprep.subr.mxu0 0.0
    %2147 = vmatpush1.msra.mxu0 0.0
    %2148 = vmatprep.subr.mxu0 0.0
    %2149 = vmatpush1.msra.mxu0 0.0
    %2150 = vmatprep.subr.mxu0 0.0
    %2151 = vmatpush1.msra.mxu0 0.0
    %2152 = vmatprep.subr.mxu0 0.0
    %2153 = vmatpush1.msra.mxu0 0.0
    %2154 = vmatprep.subr.mxu0 0.0
    %2155 = vmatpush1.msra.mxu0 0.0
    %2156 = vmatprep.subr.mxu0 0.0
    %2157 = vmatpush1.msra.mxu0 0.0
    %2158 = vmatprep.subr.mxu0 0.0
    %2159 = vmatpush1.msra.mxu0 0.0
    %2160 = vmatprep.subr.mxu0 0.0
    %2161 = vmatpush1.msra.mxu0 0.0
    %2162 = vmatprep.subr.mxu0 0.0
    %2163 = vmatpush1.msra.mxu0 0.0
    %2164 = vmatprep.mubr.f32.mxu0 0.0
    %v2165 = vand.u32 %v1684, 4294901760
    %2166 = vmatmul.mubr.f32.gmra.mrb[0].mxu0 %v2165
    %v2167 = vpop.f32.mrb[0].mxu0
    %v2168 = vadd.f32 %v2093, %v2167
    %v2169 = vpop.f32.mrb[0].mxu0
    %2170 = vdwg.mxu0
    %v2171 = vadd.f32 %v610, %v2168
    %v2172 = vxor.u32 %v2171, 2147483648
    %v2173 = vmul.f32 %v2172, 1.442695
    %v2174 = vpow.pop %v2173
    %v2175 = vadd.f32 %v2174, 1.0
    %v2176 = vrcp.pop %v2175
    %v2177 = vmul.f32 1.0, %v2176
    %v2178 = vtanh.pop %v2171
    %v2179 = vmul.f32 %v2177, %v1667
    %2181 = vrot.lane.b32.xlu0 %v2178, 64
    %v2182 = vpop.permute.xlu0 %2181
    %v2184 = vmul.f32 %v2177, %v2182
    %2186 = vrot.lane.b32.xlu0 %v2184, 32
    %v2187 = vpop.permute.xlu0 %2186
    %v2189 = vadd.f32 %v2179, %v2187
    %v2190 = vtanh.pop %v2189
    %2192 = vrot.lane.b32.xlu0 %v2190, 64
    %v2193 = vpop.permute.xlu0 %2192
    %v2195 = vmul.f32 %v2177, %v2193
    %v2198 = vunpack.c.l.s4 1983009808
    %v2199 = vunpack.c.0.s8 %v2198
    %v2200 = vlaneseq
    %v2201 = vshrl.u32 %v2200, 7
    %v2202 = vsub.s32 %v2199, %v2201
    %v2203 = vrot.slane %v2195, %v2202
    %2204 = vrot.lane.b32.xlu0 %v2203, 32
    %v2205 = vpop.permute.xlu0 %2204
    %v2206 = vsel %vm638, %v2205, 0
    %2208 = vmatprep.subr.mxu0 0.0
    %v2209 = vand.u32 %v27, 4294901760
    %2210 = vmatpush1.msra.mxu0 %v2209
    %2211 = vmatprep.subr.mxu0 0.0
    %v2212 = vand.u32 %v28, 4294901760
    %2213 = vmatpush1.msra.mxu0 %v2212
    %2214 = vmatprep.subr.mxu0 0.0
    %v2215 = vand.u32 %v29, 4294901760
    %2216 = vmatpush1.msra.mxu0 %v2215
    %2217 = vmatprep.subr.mxu0 0.0
    %v2218 = vand.u32 %v30, 4294901760
    %2219 = vmatpush1.msra.mxu0 %v2218
    %2220 = vmatprep.subr.mxu0 0.0
    %2221 = vmatpush1.msra.mxu0 0.0
    %2222 = vmatprep.subr.mxu0 0.0
    %2223 = vmatpush1.msra.mxu0 0.0
    %2224 = vmatprep.subr.mxu0 0.0
    %2225 = vmatpush1.msra.mxu0 0.0
    %2226 = vmatprep.subr.mxu0 0.0
    %2227 = vmatpush1.msra.mxu0 0.0
    %2228 = vmatprep.subr.mxu0 0.0
    %2229 = vmatpush1.msra.mxu0 0.0
    %2230 = vmatprep.subr.mxu0 0.0
    %2231 = vmatpush1.msra.mxu0 0.0
    %2232 = vmatprep.subr.mxu0 0.0
    %2233 = vmatpush1.msra.mxu0 0.0
    %2234 = vmatprep.subr.mxu0 0.0
    %2235 = vmatpush1.msra.mxu0 0.0
    %2236 = vmatprep.subr.mxu0 0.0
    %2237 = vmatpush1.msra.mxu0 0.0
    %2238 = vmatprep.subr.mxu0 0.0
    %2239 = vmatpush1.msra.mxu0 0.0
    %2240 = vmatprep.subr.mxu0 0.0
    %2241 = vmatpush1.msra.mxu0 0.0
    %2242 = vmatprep.subr.mxu0 0.0
    %2243 = vmatpush1.msra.mxu0 0.0
    %2244 = vmatprep.subr.mxu0 0.0
    %2245 = vmatpush1.msra.mxu0 0.0
    %2246 = vmatprep.subr.mxu0 0.0
    %2247 = vmatpush1.msra.mxu0 0.0
    %2248 = vmatprep.subr.mxu0 0.0
    %2249 = vmatpush1.msra.mxu0 0.0
    %2250 = vmatprep.subr.mxu0 0.0
    %2251 = vmatpush1.msra.mxu0 0.0
    %2252 = vmatprep.subr.mxu0 0.0
    %2253 = vmatpush1.msra.mxu0 0.0
    %2254 = vmatprep.subr.mxu0 0.0
    %2255 = vmatpush1.msra.mxu0 0.0
    %2256 = vmatprep.subr.mxu0 0.0
    %2257 = vmatpush1.msra.mxu0 0.0
    %2258 = vmatprep.subr.mxu0 0.0
    %2259 = vmatpush1.msra.mxu0 0.0
    %2260 = vmatprep.subr.mxu0 0.0
    %2261 = vmatpush1.msra.mxu0 0.0
    %2262 = vmatprep.subr.mxu0 0.0
    %2263 = vmatpush1.msra.mxu0 0.0
    %2264 = vmatprep.subr.mxu0 0.0
    %2265 = vmatpush1.msra.mxu0 0.0
    %2266 = vmatprep.subr.mxu0 0.0
    %2267 = vmatpush1.msra.mxu0 0.0
    %2268 = vmatprep.subr.mxu0 0.0
    %2269 = vmatpush1.msra.mxu0 0.0
    %2270 = vmatprep.subr.mxu0 0.0
    %2271 = vmatpush1.msra.mxu0 0.0
    %2272 = vmatprep.subr.mxu0 0.0
    %2273 = vmatpush1.msra.mxu0 0.0
    %2274 = vmatprep.subr.mxu0 0.0
    %2275 = vmatpush1.msra.mxu0 0.0
    %2276 = vmatprep.mubr.f32.mxu0 0.0
    %v2277 = vand.u32 %v2206, 4294901760
    %v2278 = vsub.f32 %v2206, %v2277
    %v2279 = vand.u32 %v2278, 4294901760
    %v2280 = vsub.f32 %v2278, %v2279
    %v2281 = vand.u32 %v2280, 4294901760
    %2282 = vmatmul.mubr.f32.gmra.mrb[0].mxu0 %v2281
    %v2283 = vpop.f32.mrb[0].mxu0
    %v2284 = vadd.f32 0.0, %v2283
    %v2285 = vpop.f32.mrb[0].mxu0
    %2286 = vdwg.mxu0
    %2287 = vmatprep.subr.mxu0 0.0
    %v2288 = vand.u32 %v27, 4294901760
    %v2289 = vsub.f32 %v27, %v2288
    %v2290 = vand.u32 %v2289, 4294901760
    %v2291 = vsub.f32 %v2289, %v2290
    %v2292 = vand.u32 %v2291, 4294901760
    %2293 = vmatpush1.msra.mxu0 %v2292
    %2294 = vmatprep.subr.mxu0 0.0
    %v2295 = vand.u32 %v28, 4294901760
    %v2296 = vsub.f32 %v28, %v2295
    %v2297 = vand.u32 %v2296, 4294901760
    %v2298 = vsub.f32 %v2296, %v2297
    %v2299 = vand.u32 %v2298, 4294901760
    %2300 = vmatpush1.msra.mxu0 %v2299
    %2301 = vmatprep.subr.mxu0 0.0
    %v2302 = vand.u32 %v29, 4294901760
    %v2303 = vsub.f32 %v29, %v2302
    %v2304 = vand.u32 %v2303, 4294901760
    %v2305 = vsub.f32 %v2303, %v2304
    %v2306 = vand.u32 %v2305, 4294901760
    %2307 = vmatpush1.msra.mxu0 %v2306
    %2308 = vmatprep.subr.mxu0 0.0
    %v2309 = vand.u32 %v30, 4294901760
    %v2310 = vsub.f32 %v30, %v2309
    %v2311 = vand.u32 %v2310, 4294901760
    %v2312 = vsub.f32 %v2310, %v2311
    %v2313 = vand.u32 %v2312, 4294901760
    %2314 = vmatpush1.msra.mxu0 %v2313
    %2315 = vmatprep.subr.mxu0 0.0
    %2316 = vmatpush1.msra.mxu0 0.0
    %2317 = vmatprep.subr.mxu0 0.0
    %2318 = vmatpush1.msra.mxu0 0.0
    %2319 = vmatprep.subr.mxu0 0.0
    %2320 = vmatpush1.msra.mxu0 0.0
    %2321 = vmatprep.subr.mxu0 0.0
    %2322 = vmatpush1.msra.mxu0 0.0
    %2323 = vmatprep.subr.mxu0 0.0
    %2324 = vmatpush1.msra.mxu0 0.0
    %2325 = vmatprep.subr.mxu0 0.0
    %2326 = vmatpush1.msra.mxu0 0.0
    %2327 = vmatprep.subr.mxu0 0.0
    %2328 = vmatpush1.msra.mxu0 0.0
    %2329 = vmatprep.subr.mxu0 0.0
    %2330 = vmatpush1.msra.mxu0 0.0
    %2331 = vmatprep.subr.mxu0 0.0
    %2332 = vmatpush1.msra.mxu0 0.0
    %2333 = vmatprep.subr.mxu0 0.0
    %2334 = vmatpush1.msra.mxu0 0.0
    %2335 = vmatprep.subr.mxu0 0.0
    %2336 = vmatpush1.msra.mxu0 0.0
    %2337 = vmatprep.subr.mxu0 0.0
    %2338 = vmatpush1.msra.mxu0 0.0
    %2339 = vmatprep.subr.mxu0 0.0
    %2340 = vmatpush1.msra.mxu0 0.0
    %2341 = vmatprep.subr.mxu0 0.0
    %2342 = vmatpush1.msra.mxu0 0.0
    %2343 = vmatprep.subr.mxu0 0.0
    %2344 = vmatpush1.msra.mxu0 0.0
    %2345 = vmatprep.subr.mxu0 0.0
    %2346 = vmatpush1.msra.mxu0 0.0
    %2347 = vmatprep.subr.mxu0 0.0
    %2348 = vmatpush1.msra.mxu0 0.0
    %2349 = vmatprep.subr.mxu0 0.0
    %2350 = vmatpush1.msra.mxu0 0.0
    %2351 = vmatprep.subr.mxu0 0.0
    %2352 = vmatpush1.msra.mxu0 0.0
    %2353 = vmatprep.subr.mxu0 0.0
    %2354 = vmatpush1.msra.mxu0 0.0
    %2355 = vmatprep.subr.mxu0 0.0
    %2356 = vmatpush1.msra.mxu0 0.0
    %2357 = vmatprep.subr.mxu0 0.0
    %2358 = vmatpush1.msra.mxu0 0.0
    %2359 = vmatprep.subr.mxu0 0.0
    %2360 = vmatpush1.msra.mxu0 0.0
    %2361 = vmatprep.subr.mxu0 0.0
    %2362 = vmatpush1.msra.mxu0 0.0
    %2363 = vmatprep.subr.mxu0 0.0
    %2364 = vmatpush1.msra.mxu0 0.0
    %2365 = vmatprep.subr.mxu0 0.0
    %2366 = vmatpush1.msra.mxu0 0.0
    %2367 = vmatprep.subr.mxu0 0.0
    %2368 = vmatpush1.msra.mxu0 0.0
    %2369 = vmatprep.subr.mxu0 0.0
    %2370 = vmatpush1.msra.mxu0 0.0
    %2371 = vmatprep.mubr.f32.mxu0 0.0
    %v2372 = vand.u32 %v2206, 4294901760
    %2373 = vmatmul.mubr.f32.gmra.mrb[0].mxu0 %v2372
    %v2374 = vpop.f32.mrb[0].mxu0
    %v2375 = vadd.f32 %v2284, %v2374
    %v2376 = vpop.f32.mrb[0].mxu0
    %2377 = vdwg.mxu0
    %2378 = vmatprep.subr.mxu0 0.0
    %v2379 = vand.u32 %v27, 4294901760
    %v2380 = vsub.f32 %v27, %v2379
    %2381 = vmatpush1.msra.mxu0 %v2380
    %2382 = vmatprep.subr.mxu0 0.0
    %v2383 = vand.u32 %v28, 4294901760
    %v2384 = vsub.f32 %v28, %v2383
    %2385 = vmatpush1.msra.mxu0 %v2384
    %2386 = vmatprep.subr.mxu0 0.0
    %v2387 = vand.u32 %v29, 4294901760
    %v2388 = vsub.f32 %v29, %v2387
    %2389 = vmatpush1.msra.mxu0 %v2388
    %2390 = vmatprep.subr.mxu0 0.0
    %v2391 = vand.u32 %v30, 4294901760
    %v2392 = vsub.f32 %v30, %v2391
    %2393 = vmatpush1.msra.mxu0 %v2392
    %2394 = vmatprep.subr.mxu0 0.0
    %2395 = vmatpush1.msra.mxu0 0.0
    %2396 = vmatprep.subr.mxu0 0.0
    %2397 = vmatpush1.msra.mxu0 0.0
    %2398 = vmatprep.subr.mxu0 0.0
    %2399 = vmatpush1.msra.mxu0 0.0
    %2400 = vmatprep.subr.mxu0 0.0
    %2401 = vmatpush1.msra.mxu0 0.0
    %2402 = vmatprep.subr.mxu0 0.0
    %2403 = vmatpush1.msra.mxu0 0.0
    %2404 = vmatprep.subr.mxu0 0.0
    %2405 = vmatpush1.msra.mxu0 0.0
    %2406 = vmatprep.subr.mxu0 0.0
    %2407 = vmatpush1.msra.mxu0 0.0
    %2408 = vmatprep.subr.mxu0 0.0
    %2409 = vmatpush1.msra.mxu0 0.0
    %2410 = vmatprep.subr.mxu0 0.0
    %2411 = vmatpush1.msra.mxu0 0.0
    %2412 = vmatprep.subr.mxu0 0.0
    %2413 = vmatpush1.msra.mxu0 0.0
    %2414 = vmatprep.subr.mxu0 0.0
    %2415 = vmatpush1.msra.mxu0 0.0
    %2416 = vmatprep.subr.mxu0 0.0
    %2417 = vmatpush1.msra.mxu0 0.0
    %2418 = vmatprep.subr.mxu0 0.0
    %2419 = vmatpush1.msra.mxu0 0.0
    %2420 = vmatprep.subr.mxu0 0.0
    %2421 = vmatpush1.msra.mxu0 0.0
    %2422 = vmatprep.subr.mxu0 0.0
    %2423 = vmatpush1.msra.mxu0 0.0
    %2424 = vmatprep.subr.mxu0 0.0
    %2425 = vmatpush1.msra.mxu0 0.0
    %2426 = vmatprep.subr.mxu0 0.0
    %2427 = vmatpush1.msra.mxu0 0.0
    %2428 = vmatprep.subr.mxu0 0.0
    %2429 = vmatpush1.msra.mxu0 0.0
    %2430 = vmatprep.subr.mxu0 0.0
    %2431 = vmatpush1.msra.mxu0 0.0
    %2432 = vmatprep.subr.mxu0 0.0
    %2433 = vmatpush1.msra.mxu0 0.0
    %2434 = vmatprep.subr.mxu0 0.0
    %2435 = vmatpush1.msra.mxu0 0.0
    %2436 = vmatprep.subr.mxu0 0.0
    %2437 = vmatpush1.msra.mxu0 0.0
    %2438 = vmatprep.subr.mxu0 0.0
    %2439 = vmatpush1.msra.mxu0 0.0
    %2440 = vmatprep.subr.mxu0 0.0
    %2441 = vmatpush1.msra.mxu0 0.0
    %2442 = vmatprep.subr.mxu0 0.0
    %2443 = vmatpush1.msra.mxu0 0.0
    %2444 = vmatprep.subr.mxu0 0.0
    %2445 = vmatpush1.msra.mxu0 0.0
    %2446 = vmatprep.subr.mxu0 0.0
    %2447 = vmatpush1.msra.mxu0 0.0
    %2448 = vmatprep.subr.mxu0 0.0
    %2449 = vmatpush1.msra.mxu0 0.0
    %2450 = vmatprep.mubr.f32.mxu0 0.0
    %v2451 = vand.u32 %v2206, 4294901760
    %v2452 = vsub.f32 %v2206, %v2451
    %2453 = vmatmul.mubr.f32.gmra.mrb[0].mxu0 %v2452
    %v2454 = vpop.f32.mrb[0].mxu0
    %v2455 = vadd.f32 %v2375, %v2454
    %v2456 = vpop.f32.mrb[0].mxu0
    %2457 = vdwg.mxu0
    %2458 = vmatprep.subr.mxu0 0.0
    %v2459 = vand.u32 %v27, 4294901760
    %2460 = vmatpush1.msra.mxu0 %v2459
    %2461 = vmatprep.subr.mxu0 0.0
    %v2462 = vand.u32 %v28, 4294901760
    %2463 = vmatpush1.msra.mxu0 %v2462
    %2464 = vmatprep.subr.mxu0 0.0
    %v2465 = vand.u32 %v29, 4294901760
    %2466 = vmatpush1.msra.mxu0 %v2465
    %2467 = vmatprep.subr.mxu0 0.0
    %v2468 = vand.u32 %v30, 4294901760
    %2469 = vmatpush1.msra.mxu0 %v2468
    %2470 = vmatprep.subr.mxu0 0.0
    %2471 = vmatpush1.msra.mxu0 0.0
    %2472 = vmatprep.subr.mxu0 0.0
    %2473 = vmatpush1.msra.mxu0 0.0
    %2474 = vmatprep.subr.mxu0 0.0
    %2475 = vmatpush1.msra.mxu0 0.0
    %2476 = vmatprep.subr.mxu0 0.0
    %2477 = vmatpush1.msra.mxu0 0.0
    %2478 = vmatprep.subr.mxu0 0.0
    %2479 = vmatpush1.msra.mxu0 0.0
    %2480 = vmatprep.subr.mxu0 0.0
    %2481 = vmatpush1.msra.mxu0 0.0
    %2482 = vmatprep.subr.mxu0 0.0
    %2483 = vmatpush1.msra.mxu0 0.0
    %2484 = vmatprep.subr.mxu0 0.0
    %2485 = vmatpush1.msra.mxu0 0.0
    %2486 = vmatprep.subr.mxu0 0.0
    %2487 = vmatpush1.msra.mxu0 0.0
    %2488 = vmatprep.subr.mxu0 0.0
    %2489 = vmatpush1.msra.mxu0 0.0
    %2490 = vmatprep.subr.mxu0 0.0
    %2491 = vmatpush1.msra.mxu0 0.0
    %2492 = vmatprep.subr.mxu0 0.0
    %2493 = vmatpush1.msra.mxu0 0.0
    %2494 = vmatprep.subr.mxu0 0.0
    %2495 = vmatpush1.msra.mxu0 0.0
    %2496 = vmatprep.subr.mxu0 0.0
    %2497 = vmatpush1.msra.mxu0 0.0
    %2498 = vmatprep.subr.mxu0 0.0
    %2499 = vmatpush1.msra.mxu0 0.0
    %2500 = vmatprep.subr.mxu0 0.0
    %2501 = vmatpush1.msra.mxu0 0.0
    %2502 = vmatprep.subr.mxu0 0.0
    %2503 = vmatpush1.msra.mxu0 0.0
    %2504 = vmatprep.subr.mxu0 0.0
    %2505 = vmatpush1.msra.mxu0 0.0
    %2506 = vmatprep.subr.mxu0 0.0
    %2507 = vmatpush1.msra.mxu0 0.0
    %2508 = vmatprep.subr.mxu0 0.0
    %2509 = vmatpush1.msra.mxu0 0.0
    %2510 = vmatprep.subr.mxu0 0.0
    %2511 = vmatpush1.msra.mxu0 0.0
    %2512 = vmatprep.subr.mxu0 0.0
    %2513 = vmatpush1.msra.mxu0 0.0
    %2514 = vmatprep.subr.mxu0 0.0
    %2515 = vmatpush1.msra.mxu0 0.0
    %2516 = vmatprep.subr.mxu0 0.0
    %2517 = vmatpush1.msra.mxu0 0.0
    %2518 = vmatprep.subr.mxu0 0.0
    %2519 = vmatpush1.msra.mxu0 0.0
    %2520 = vmatprep.subr.mxu0 0.0
    %2521 = vmatpush1.msra.mxu0 0.0
    %2522 = vmatprep.subr.mxu0 0.0
    %2523 = vmatpush1.msra.mxu0 0.0
    %2524 = vmatprep.subr.mxu0 0.0
    %2525 = vmatpush1.msra.mxu0 0.0
    %2526 = vmatprep.mubr.f32.mxu0 0.0
    %v2527 = vand.u32 %v2206, 4294901760
    %v2528 = vsub.f32 %v2206, %v2527
    %v2529 = vand.u32 %v2528, 4294901760
    %2530 = vmatmul.mubr.f32.gmra.mrb[0].mxu0 %v2529
    %v2531 = vpop.f32.mrb[0].mxu0
    %v2532 = vadd.f32 %v2455, %v2531
    %v2533 = vpop.f32.mrb[0].mxu0
    %2534 = vdwg.mxu0
    %2535 = vmatprep.subr.mxu0 0.0
    %v2536 = vand.u32 %v27, 4294901760
    %v2537 = vsub.f32 %v27, %v2536
    %v2538 = vand.u32 %v2537, 4294901760
    %2539 = vmatpush1.msra.mxu0 %v2538
    %2540 = vmatprep.subr.mxu0 0.0
    %v2541 = vand.u32 %v28, 4294901760
    %v2542 = vsub.f32 %v28, %v2541
    %v2543 = vand.u32 %v2542, 4294901760
    %2544 = vmatpush1.msra.mxu0 %v2543
    %2545 = vmatprep.subr.mxu0 0.0
    %v2546 = vand.u32 %v29, 4294901760
    %v2547 = vsub.f32 %v29, %v2546
    %v2548 = vand.u32 %v2547, 4294901760
    %2549 = vmatpush1.msra.mxu0 %v2548
    %2550 = vmatprep.subr.mxu0 0.0
    %v2551 = vand.u32 %v30, 4294901760
    %v2552 = vsub.f32 %v30, %v2551
    %v2553 = vand.u32 %v2552, 4294901760
    %2554 = vmatpush1.msra.mxu0 %v2553
    %2555 = vmatprep.subr.mxu0 0.0
    %2556 = vmatpush1.msra.mxu0 0.0
    %2557 = vmatprep.subr.mxu0 0.0
    %2558 = vmatpush1.msra.mxu0 0.0
    %2559 = vmatprep.subr.mxu0 0.0
    %2560 = vmatpush1.msra.mxu0 0.0
    %2561 = vmatprep.subr.mxu0 0.0
    %2562 = vmatpush1.msra.mxu0 0.0
    %2563 = vmatprep.subr.mxu0 0.0
    %2564 = vmatpush1.msra.mxu0 0.0
    %2565 = vmatprep.subr.mxu0 0.0
    %2566 = vmatpush1.msra.mxu0 0.0
    %2567 = vmatprep.subr.mxu0 0.0
    %2568 = vmatpush1.msra.mxu0 0.0
    %2569 = vmatprep.subr.mxu0 0.0
    %2570 = vmatpush1.msra.mxu0 0.0
    %2571 = vmatprep.subr.mxu0 0.0
    %2572 = vmatpush1.msra.mxu0 0.0
    %2573 = vmatprep.subr.mxu0 0.0
    %2574 = vmatpush1.msra.mxu0 0.0
    %2575 = vmatprep.subr.mxu0 0.0
    %2576 = vmatpush1.msra.mxu0 0.0
    %2577 = vmatprep.subr.mxu0 0.0
    %2578 = vmatpush1.msra.mxu0 0.0
    %2579 = vmatprep.subr.mxu0 0.0
    %2580 = vmatpush1.msra.mxu0 0.0
    %2581 = vmatprep.subr.mxu0 0.0
    %2582 = vmatpush1.msra.mxu0 0.0
    %2583 = vmatprep.subr.mxu0 0.0
    %2584 = vmatpush1.msra.mxu0 0.0
    %2585 = vmatprep.subr.mxu0 0.0
    %2586 = vmatpush1.msra.mxu0 0.0
    %2587 = vmatprep.subr.mxu0 0.0
    %2588 = vmatpush1.msra.mxu0 0.0
    %2589 = vmatprep.subr.mxu0 0.0
    %2590 = vmatpush1.msra.mxu0 0.0
    %2591 = vmatprep.subr.mxu0 0.0
    %2592 = vmatpush1.msra.mxu0 0.0
    %2593 = vmatprep.subr.mxu0 0.0
    %2594 = vmatpush1.msra.mxu0 0.0
    %2595 = vmatprep.subr.mxu0 0.0
    %2596 = vmatpush1.msra.mxu0 0.0
    %2597 = vmatprep.subr.mxu0 0.0
    %2598 = vmatpush1.msra.mxu0 0.0
    %2599 = vmatprep.subr.mxu0 0.0
    %2600 = vmatpush1.msra.mxu0 0.0
    %2601 = vmatprep.subr.mxu0 0.0
    %2602 = vmatpush1.msra.mxu0 0.0
    %2603 = vmatprep.subr.mxu0 0.0
    %2604 = vmatpush1.msra.mxu0 0.0
    %2605 = vmatprep.subr.mxu0 0.0
    %2606 = vmatpush1.msra.mxu0 0.0
    %2607 = vmatprep.subr.mxu0 0.0
    %2608 = vmatpush1.msra.mxu0 0.0
    %2609 = vmatprep.subr.mxu0 0.0
    %2610 = vmatpush1.msra.mxu0 0.0
    %2611 = vmatprep.mubr.f32.mxu0 0.0
    %v2612 = vand.u32 %v2206, 4294901760
    %2613 = vmatmul.mubr.f32.gmra.mrb[0].mxu0 %v2612
    %v2614 = vpop.f32.mrb[0].mxu0
    %v2615 = vadd.f32 %v2532, %v2614
    %v2616 = vpop.f32.mrb[0].mxu0
    %2617 = vdwg.mxu0
    %2618 = vmatprep.subr.mxu0 0.0
    %v2619 = vand.u32 %v27, 4294901760
    %2620 = vmatpush1.msra.mxu0 %v2619
    %2621 = vmatprep.subr.mxu0 0.0
    %v2622 = vand.u32 %v28, 4294901760
    %2623 = vmatpush1.msra.mxu0 %v2622
    %2624 = vmatprep.subr.mxu0 0.0
    %v2625 = vand.u32 %v29, 4294901760
    %2626 = vmatpush1.msra.mxu0 %v2625
    %2627 = vmatprep.subr.mxu0 0.0
    %v2628 = vand.u32 %v30, 4294901760
    %2629 = vmatpush1.msra.mxu0 %v2628
    %2630 = vmatprep.subr.mxu0 0.0
    %2631 = vmatpush1.msra.mxu0 0.0
    %2632 = vmatprep.subr.mxu0 0.0
    %2633 = vmatpush1.msra.mxu0 0.0
    %2634 = vmatprep.subr.mxu0 0.0
    %2635 = vmatpush1.msra.mxu0 0.0
    %2636 = vmatprep.subr.mxu0 0.0
    %2637 = vmatpush1.msra.mxu0 0.0
    %2638 = vmatprep.subr.mxu0 0.0
    %2639 = vmatpush1.msra.mxu0 0.0
    %2640 = vmatprep.subr.mxu0 0.0
    %2641 = vmatpush1.msra.mxu0 0.0
    %2642 = vmatprep.subr.mxu0 0.0
    %2643 = vmatpush1.msra.mxu0 0.0
    %2644 = vmatprep.subr.mxu0 0.0
    %2645 = vmatpush1.msra.mxu0 0.0
    %2646 = vmatprep.subr.mxu0 0.0
    %2647 = vmatpush1.msra.mxu0 0.0
    %2648 = vmatprep.subr.mxu0 0.0
    %2649 = vmatpush1.msra.mxu0 0.0
    %2650 = vmatprep.subr.mxu0 0.0
    %2651 = vmatpush1.msra.mxu0 0.0
    %2652 = vmatprep.subr.mxu0 0.0
    %2653 = vmatpush1.msra.mxu0 0.0
    %2654 = vmatprep.subr.mxu0 0.0
    %2655 = vmatpush1.msra.mxu0 0.0
    %2656 = vmatprep.subr.mxu0 0.0
    %2657 = vmatpush1.msra.mxu0 0.0
    %2658 = vmatprep.subr.mxu0 0.0
    %2659 = vmatpush1.msra.mxu0 0.0
    %2660 = vmatprep.subr.mxu0 0.0
    %2661 = vmatpush1.msra.mxu0 0.0
    %2662 = vmatprep.subr.mxu0 0.0
    %2663 = vmatpush1.msra.mxu0 0.0
    %2664 = vmatprep.subr.mxu0 0.0
    %2665 = vmatpush1.msra.mxu0 0.0
    %2666 = vmatprep.subr.mxu0 0.0
    %2667 = vmatpush1.msra.mxu0 0.0
    %2668 = vmatprep.subr.mxu0 0.0
    %2669 = vmatpush1.msra.mxu0 0.0
    %2670 = vmatprep.subr.mxu0 0.0
    %2671 = vmatpush1.msra.mxu0 0.0
    %2672 = vmatprep.subr.mxu0 0.0
    %2673 = vmatpush1.msra.mxu0 0.0
    %2674 = vmatprep.subr.mxu0 0.0
    %2675 = vmatpush1.msra.mxu0 0.0
    %2676 = vmatprep.subr.mxu0 0.0
    %2677 = vmatpush1.msra.mxu0 0.0
    %2678 = vmatprep.subr.mxu0 0.0
    %2679 = vmatpush1.msra.mxu0 0.0
    %2680 = vmatprep.subr.mxu0 0.0
    %2681 = vmatpush1.msra.mxu0 0.0
    %2682 = vmatprep.subr.mxu0 0.0
    %2683 = vmatpush1.msra.mxu0 0.0
    %2684 = vmatprep.subr.mxu0 0.0
    %2685 = vmatpush1.msra.mxu0 0.0
    %2686 = vmatprep.mubr.f32.mxu0 0.0
    %v2687 = vand.u32 %v2206, 4294901760
    %2688 = vmatmul.mubr.f32.gmra.mrb[0].mxu0 %v2687
    %v2689 = vpop.f32.mrb[0].mxu0
    %v2690 = vadd.f32 %v2615, %v2689
    %v2691 = vpop.f32.mrb[0].mxu0
    %2692 = vdwg.mxu0
    %v2693 = vadd.f32 %v612, %v2690
    %v2694 = vxor.u32 %v2693, 2147483648
    %v2695 = vmul.f32 %v2694, 1.442695
    %v2696 = vpow.pop %v2695
    %v2697 = vadd.f32 %v2696, 1.0
    %v2698 = vrcp.pop %v2697
    %v2699 = vmul.f32 1.0, %v2698
    %v2700 = vtanh.pop %v2693
    %v2701 = vmul.f32 %v2699, %v2189
    %2703 = vrot.lane.b32.xlu0 %v2700, 64
    %v2704 = vpop.permute.xlu0 %2703
    %v2706 = vmul.f32 %v2699, %v2704
    %2708 = vrot.lane.b32.xlu0 %v2706, 32
    %v2709 = vpop.permute.xlu0 %2708
    %v2711 = vadd.f32 %v2701, %v2709
    %v2712 = vtanh.pop %v2711
    %2714 = vrot.lane.b32.xlu0 %v2712, 64
    %v2715 = vpop.permute.xlu0 %2714
    %v2717 = vmul.f32 %v2699, %v2715
    %v2720 = vunpack.c.l.s4 1983009808
    %v2721 = vunpack.c.0.s8 %v2720
    %v2722 = vlaneseq
    %v2723 = vshrl.u32 %v2722, 7
    %v2724 = vsub.s32 %v2721, %v2723
    %v2725 = vrot.slane %v2717, %v2724
    %2726 = vrot.lane.b32.xlu0 %v2725, 32
    %v2727 = vpop.permute.xlu0 %2726
    %v2728 = vsel %vm638, %v2727, 0
    %2730 = vmatprep.subr.mxu0 0.0
    %v2731 = vand.u32 %v27, 4294901760
    %2732 = vmatpush1.msra.mxu0 %v2731
    %2733 = vmatprep.subr.mxu0 0.0
    %v2734 = vand.u32 %v28, 4294901760
    %2735 = vmatpush1.msra.mxu0 %v2734
    %2736 = vmatprep.subr.mxu0 0.0
    %v2737 = vand.u32 %v29, 4294901760
    %2738 = vmatpush1.msra.mxu0 %v2737
    %2739 = vmatprep.subr.mxu0 0.0
    %v2740 = vand.u32 %v30, 4294901760
    %2741 = vmatpush1.msra.mxu0 %v2740
    %2742 = vmatprep.subr.mxu0 0.0
    %2743 = vmatpush1.msra.mxu0 0.0
    %2744 = vmatprep.subr.mxu0 0.0
    %2745 = vmatpush1.msra.mxu0 0.0
    %2746 = vmatprep.subr.mxu0 0.0
    %2747 = vmatpush1.msra.mxu0 0.0
    %2748 = vmatprep.subr.mxu0 0.0
    %2749 = vmatpush1.msra.mxu0 0.0
    %2750 = vmatprep.subr.mxu0 0.0
    %2751 = vmatpush1.msra.mxu0 0.0
    %2752 = vmatprep.subr.mxu0 0.0
    %2753 = vmatpush1.msra.mxu0 0.0
    %2754 = vmatprep.subr.mxu0 0.0
    %2755 = vmatpush1.msra.mxu0 0.0
    %2756 = vmatprep.subr.mxu0 0.0
    %2757 = vmatpush1.msra.mxu0 0.0
    %2758 = vmatprep.subr.mxu0 0.0
    %2759 = vmatpush1.msra.mxu0 0.0
    %2760 = vmatprep.subr.mxu0 0.0
    %2761 = vmatpush1.msra.mxu0 0.0
    %2762 = vmatprep.subr.mxu0 0.0
    %2763 = vmatpush1.msra.mxu0 0.0
    %2764 = vmatprep.subr.mxu0 0.0
    %2765 = vmatpush1.msra.mxu0 0.0
    %2766 = vmatprep.subr.mxu0 0.0
    %2767 = vmatpush1.msra.mxu0 0.0
    %2768 = vmatprep.subr.mxu0 0.0
    %2769 = vmatpush1.msra.mxu0 0.0
    %2770 = vmatprep.subr.mxu0 0.0
    %2771 = vmatpush1.msra.mxu0 0.0
    %2772 = vmatprep.subr.mxu0 0.0
    %2773 = vmatpush1.msra.mxu0 0.0
    %2774 = vmatprep.subr.mxu0 0.0
    %2775 = vmatpush1.msra.mxu0 0.0
    %2776 = vmatprep.subr.mxu0 0.0
    %2777 = vmatpush1.msra.mxu0 0.0
    %2778 = vmatprep.subr.mxu0 0.0
    %2779 = vmatpush1.msra.mxu0 0.0
    %2780 = vmatprep.subr.mxu0 0.0
    %2781 = vmatpush1.msra.mxu0 0.0
    %2782 = vmatprep.subr.mxu0 0.0
    %2783 = vmatpush1.msra.mxu0 0.0
    %2784 = vmatprep.subr.mxu0 0.0
    %2785 = vmatpush1.msra.mxu0 0.0
    %2786 = vmatprep.subr.mxu0 0.0
    %2787 = vmatpush1.msra.mxu0 0.0
    %2788 = vmatprep.subr.mxu0 0.0
    %2789 = vmatpush1.msra.mxu0 0.0
    %2790 = vmatprep.subr.mxu0 0.0
    %2791 = vmatpush1.msra.mxu0 0.0
    %2792 = vmatprep.subr.mxu0 0.0
    %2793 = vmatpush1.msra.mxu0 0.0
    %2794 = vmatprep.subr.mxu0 0.0
    %2795 = vmatpush1.msra.mxu0 0.0
    %2796 = vmatprep.subr.mxu0 0.0
    %2797 = vmatpush1.msra.mxu0 0.0
    %2798 = vmatprep.mubr.f32.mxu0 0.0
    %v2799 = vand.u32 %v2728, 4294901760
    %v2800 = vsub.f32 %v2728, %v2799
    %v2801 = vand.u32 %v2800, 4294901760
    %v2802 = vsub.f32 %v2800, %v2801
    %v2803 = vand.u32 %v2802, 4294901760
    %2804 = vmatmul.mubr.f32.gmra.mrb[0].mxu0 %v2803
    %v2805 = vpop.f32.mrb[0].mxu0
    %v2806 = vadd.f32 0.0, %v2805
    %v2807 = vpop.f32.mrb[0].mxu0
    %2808 = vdwg.mxu0
    %2809 = vmatprep.subr.mxu0 0.0
    %v2810 = vand.u32 %v27, 4294901760
    %v2811 = vsub.f32 %v27, %v2810
    %v2812 = vand.u32 %v2811, 4294901760
    %v2813 = vsub.f32 %v2811, %v2812
    %v2814 = vand.u32 %v2813, 4294901760
    %2815 = vmatpush1.msra.mxu0 %v2814
    %2816 = vmatprep.subr.mxu0 0.0
    %v2817 = vand.u32 %v28, 4294901760
    %v2818 = vsub.f32 %v28, %v2817
    %v2819 = vand.u32 %v2818, 4294901760
    %v2820 = vsub.f32 %v2818, %v2819
    %v2821 = vand.u32 %v2820, 4294901760
    %2822 = vmatpush1.msra.mxu0 %v2821
    %2823 = vmatprep.subr.mxu0 0.0
    %v2824 = vand.u32 %v29, 4294901760
    %v2825 = vsub.f32 %v29, %v2824
    %v2826 = vand.u32 %v2825, 4294901760
    %v2827 = vsub.f32 %v2825, %v2826
    %v2828 = vand.u32 %v2827, 4294901760
    %2829 = vmatpush1.msra.mxu0 %v2828
    %2830 = vmatprep.subr.mxu0 0.0
    %v2831 = vand.u32 %v30, 4294901760
    %v2832 = vsub.f32 %v30, %v2831
    %v2833 = vand.u32 %v2832, 4294901760
    %v2834 = vsub.f32 %v2832, %v2833
    %v2835 = vand.u32 %v2834, 4294901760
    %2836 = vmatpush1.msra.mxu0 %v2835
    %2837 = vmatprep.subr.mxu0 0.0
    %2838 = vmatpush1.msra.mxu0 0.0
    %2839 = vmatprep.subr.mxu0 0.0
    %2840 = vmatpush1.msra.mxu0 0.0
    %2841 = vmatprep.subr.mxu0 0.0
    %2842 = vmatpush1.msra.mxu0 0.0
    %2843 = vmatprep.subr.mxu0 0.0
    %2844 = vmatpush1.msra.mxu0 0.0
    %2845 = vmatprep.subr.mxu0 0.0
    %2846 = vmatpush1.msra.mxu0 0.0
    %2847 = vmatprep.subr.mxu0 0.0
    %2848 = vmatpush1.msra.mxu0 0.0
    %2849 = vmatprep.subr.mxu0 0.0
    %2850 = vmatpush1.msra.mxu0 0.0
    %2851 = vmatprep.subr.mxu0 0.0
    %2852 = vmatpush1.msra.mxu0 0.0
    %2853 = vmatprep.subr.mxu0 0.0
    %2854 = vmatpush1.msra.mxu0 0.0
    %2855 = vmatprep.subr.mxu0 0.0
    %2856 = vmatpush1.msra.mxu0 0.0
    %2857 = vmatprep.subr.mxu0 0.0
    %2858 = vmatpush1.msra.mxu0 0.0
    %2859 = vmatprep.subr.mxu0 0.0
    %2860 = vmatpush1.msra.mxu0 0.0
    %2861 = vmatprep.subr.mxu0 0.0
    %2862 = vmatpush1.msra.mxu0 0.0
    %2863 = vmatprep.subr.mxu0 0.0
    %2864 = vmatpush1.msra.mxu0 0.0
    %2865 = vmatprep.subr.mxu0 0.0
    %2866 = vmatpush1.msra.mxu0 0.0
    %2867 = vmatprep.subr.mxu0 0.0
    %2868 = vmatpush1.msra.mxu0 0.0
    %2869 = vmatprep.subr.mxu0 0.0
    %2870 = vmatpush1.msra.mxu0 0.0
    %2871 = vmatprep.subr.mxu0 0.0
    %2872 = vmatpush1.msra.mxu0 0.0
    %2873 = vmatprep.subr.mxu0 0.0
    %2874 = vmatpush1.msra.mxu0 0.0
    %2875 = vmatprep.subr.mxu0 0.0
    %2876 = vmatpush1.msra.mxu0 0.0
    %2877 = vmatprep.subr.mxu0 0.0
    %2878 = vmatpush1.msra.mxu0 0.0
    %2879 = vmatprep.subr.mxu0 0.0
    %2880 = vmatpush1.msra.mxu0 0.0
    %2881 = vmatprep.subr.mxu0 0.0
    %2882 = vmatpush1.msra.mxu0 0.0
    %2883 = vmatprep.subr.mxu0 0.0
    %2884 = vmatpush1.msra.mxu0 0.0
    %2885 = vmatprep.subr.mxu0 0.0
    %2886 = vmatpush1.msra.mxu0 0.0
    %2887 = vmatprep.subr.mxu0 0.0
    %2888 = vmatpush1.msra.mxu0 0.0
    %2889 = vmatprep.subr.mxu0 0.0
    %2890 = vmatpush1.msra.mxu0 0.0
    %2891 = vmatprep.subr.mxu0 0.0
    %2892 = vmatpush1.msra.mxu0 0.0
    %2893 = vmatprep.mubr.f32.mxu0 0.0
    %v2894 = vand.u32 %v2728, 4294901760
    %2895 = vmatmul.mubr.f32.gmra.mrb[0].mxu0 %v2894
    %v2896 = vpop.f32.mrb[0].mxu0
    %v2897 = vadd.f32 %v2806, %v2896
    %v2898 = vpop.f32.mrb[0].mxu0
    %2899 = vdwg.mxu0
    %2900 = vmatprep.subr.mxu0 0.0
    %v2901 = vand.u32 %v27, 4294901760
    %v2902 = vsub.f32 %v27, %v2901
    %2903 = vmatpush1.msra.mxu0 %v2902
    %2904 = vmatprep.subr.mxu0 0.0
    %v2905 = vand.u32 %v28, 4294901760
    %v2906 = vsub.f32 %v28, %v2905
    %2907 = vmatpush1.msra.mxu0 %v2906
    %2908 = vmatprep.subr.mxu0 0.0
    %v2909 = vand.u32 %v29, 4294901760
    %v2910 = vsub.f32 %v29, %v2909
    %2911 = vmatpush1.msra.mxu0 %v2910
    %2912 = vmatprep.subr.mxu0 0.0
    %v2913 = vand.u32 %v30, 4294901760
    %v2914 = vsub.f32 %v30, %v2913
    %2915 = vmatpush1.msra.mxu0 %v2914
    %2916 = vmatprep.subr.mxu0 0.0
    %2917 = vmatpush1.msra.mxu0 0.0
    %2918 = vmatprep.subr.mxu0 0.0
    %2919 = vmatpush1.msra.mxu0 0.0
    %2920 = vmatprep.subr.mxu0 0.0
    %2921 = vmatpush1.msra.mxu0 0.0
    %2922 = vmatprep.subr.mxu0 0.0
    %2923 = vmatpush1.msra.mxu0 0.0
    %2924 = vmatprep.subr.mxu0 0.0
    %2925 = vmatpush1.msra.mxu0 0.0
    %2926 = vmatprep.subr.mxu0 0.0
    %2927 = vmatpush1.msra.mxu0 0.0
    %2928 = vmatprep.subr.mxu0 0.0
    %2929 = vmatpush1.msra.mxu0 0.0
    %2930 = vmatprep.subr.mxu0 0.0
    %2931 = vmatpush1.msra.mxu0 0.0
    %2932 = vmatprep.subr.mxu0 0.0
    %2933 = vmatpush1.msra.mxu0 0.0
    %2934 = vmatprep.subr.mxu0 0.0
    %2935 = vmatpush1.msra.mxu0 0.0
    %2936 = vmatprep.subr.mxu0 0.0
    %2937 = vmatpush1.msra.mxu0 0.0
    %2938 = vmatprep.subr.mxu0 0.0
    %2939 = vmatpush1.msra.mxu0 0.0
    %2940 = vmatprep.subr.mxu0 0.0
    %2941 = vmatpush1.msra.mxu0 0.0
    %2942 = vmatprep.subr.mxu0 0.0
    %2943 = vmatpush1.msra.mxu0 0.0
    %2944 = vmatprep.subr.mxu0 0.0
    %2945 = vmatpush1.msra.mxu0 0.0
    %2946 = vmatprep.subr.mxu0 0.0
    %2947 = vmatpush1.msra.mxu0 0.0
    %2948 = vmatprep.subr.mxu0 0.0
    %2949 = vmatpush1.msra.mxu0 0.0
    %2950 = vmatprep.subr.mxu0 0.0
    %2951 = vmatpush1.msra.mxu0 0.0
    %2952 = vmatprep.subr.mxu0 0.0
    %2953 = vmatpush1.msra.mxu0 0.0
    %2954 = vmatprep.subr.mxu0 0.0
    %2955 = vmatpush1.msra.mxu0 0.0
    %2956 = vmatprep.subr.mxu0 0.0
    %2957 = vmatpush1.msra.mxu0 0.0
    %2958 = vmatprep.subr.mxu0 0.0
    %2959 = vmatpush1.msra.mxu0 0.0
    %2960 = vmatprep.subr.mxu0 0.0
    %2961 = vmatpush1.msra.mxu0 0.0
    %2962 = vmatprep.subr.mxu0 0.0
    %2963 = vmatpush1.msra.mxu0 0.0
    %2964 = vmatprep.subr.mxu0 0.0
    %2965 = vmatpush1.msra.mxu0 0.0
    %2966 = vmatprep.subr.mxu0 0.0
    %2967 = vmatpush1.msra.mxu0 0.0
    %2968 = vmatprep.subr.mxu0 0.0
    %2969 = vmatpush1.msra.mxu0 0.0
    %2970 = vmatprep.subr.mxu0 0.0
    %2971 = vmatpush1.msra.mxu0 0.0
    %2972 = vmatprep.mubr.f32.mxu0 0.0
    %v2973 = vand.u32 %v2728, 4294901760
    %v2974 = vsub.f32 %v2728, %v2973
    %2975 = vmatmul.mubr.f32.gmra.mrb[0].mxu0 %v2974
    %v2976 = vpop.f32.mrb[0].mxu0
    %v2977 = vadd.f32 %v2897, %v2976
    %v2978 = vpop.f32.mrb[0].mxu0
    %2979 = vdwg.mxu0
    %2980 = vmatprep.subr.mxu0 0.0
    %v2981 = vand.u32 %v27, 4294901760
    %2982 = vmatpush1.msra.mxu0 %v2981
    %2983 = vmatprep.subr.mxu0 0.0
    %v2984 = vand.u32 %v28, 4294901760
    %2985 = vmatpush1.msra.mxu0 %v2984
    %2986 = vmatprep.subr.mxu0 0.0
    %v2987 = vand.u32 %v29, 4294901760
    %2988 = vmatpush1.msra.mxu0 %v2987
    %2989 = vmatprep.subr.mxu0 0.0
    %v2990 = vand.u32 %v30, 4294901760
    %2991 = vmatpush1.msra.mxu0 %v2990
    %2992 = vmatprep.subr.mxu0 0.0
    %2993 = vmatpush1.msra.mxu0 0.0
    %2994 = vmatprep.subr.mxu0 0.0
    %2995 = vmatpush1.msra.mxu0 0.0
    %2996 = vmatprep.subr.mxu0 0.0
    %2997 = vmatpush1.msra.mxu0 0.0
    %2998 = vmatprep.subr.mxu0 0.0
    %2999 = vmatpush1.msra.mxu0 0.0
    %3000 = vmatprep.subr.mxu0 0.0
    %3001 = vmatpush1.msra.mxu0 0.0
    %3002 = vmatprep.subr.mxu0 0.0
    %3003 = vmatpush1.msra.mxu0 0.0
    %3004 = vmatprep.subr.mxu0 0.0
    %3005 = vmatpush1.msra.mxu0 0.0
    %3006 = vmatprep.subr.mxu0 0.0
    %3007 = vmatpush1.msra.mxu0 0.0
    %3008 = vmatprep.subr.mxu0 0.0
    %3009 = vmatpush1.msra.mxu0 0.0
    %3010 = vmatprep.subr.mxu0 0.0
    %3011 = vmatpush1.msra.mxu0 0.0
    %3012 = vmatprep.subr.mxu0 0.0
    %3013 = vmatpush1.msra.mxu0 0.0
    %3014 = vmatprep.subr.mxu0 0.0
    %3015 = vmatpush1.msra.mxu0 0.0
    %3016 = vmatprep.subr.mxu0 0.0
    %3017 = vmatpush1.msra.mxu0 0.0
    %3018 = vmatprep.subr.mxu0 0.0
    %3019 = vmatpush1.msra.mxu0 0.0
    %3020 = vmatprep.subr.mxu0 0.0
    %3021 = vmatpush1.msra.mxu0 0.0
    %3022 = vmatprep.subr.mxu0 0.0
    %3023 = vmatpush1.msra.mxu0 0.0
    %3024 = vmatprep.subr.mxu0 0.0
    %3025 = vmatpush1.msra.mxu0 0.0
    %3026 = vmatprep.subr.mxu0 0.0
    %3027 = vmatpush1.msra.mxu0 0.0
    %3028 = vmatprep.subr.mxu0 0.0
    %3029 = vmatpush1.msra.mxu0 0.0
    %3030 = vmatprep.subr.mxu0 0.0
    %3031 = vmatpush1.msra.mxu0 0.0
    %3032 = vmatprep.subr.mxu0 0.0
    %3033 = vmatpush1.msra.mxu0 0.0
    %3034 = vmatprep.subr.mxu0 0.0
    %3035 = vmatpush1.msra.mxu0 0.0
    %3036 = vmatprep.subr.mxu0 0.0
    %3037 = vmatpush1.msra.mxu0 0.0
    %3038 = vmatprep.subr.mxu0 0.0
    %3039 = vmatpush1.msra.mxu0 0.0
    %3040 = vmatprep.subr.mxu0 0.0
    %3041 = vmatpush1.msra.mxu0 0.0
    %3042 = vmatprep.subr.mxu0 0.0
    %3043 = vmatpush1.msra.mxu0 0.0
    %3044 = vmatprep.subr.mxu0 0.0
    %3045 = vmatpush1.msra.mxu0 0.0
    %3046 = vmatprep.subr.mxu0 0.0
    %3047 = vmatpush1.msra.mxu0 0.0
    %3048 = vmatprep.mubr.f32.mxu0 0.0
    %v3049 = vand.u32 %v2728, 4294901760
    %v3050 = vsub.f32 %v2728, %v3049
    %v3051 = vand.u32 %v3050, 4294901760
    %3052 = vmatmul.mubr.f32.gmra.mrb[0].mxu0 %v3051
    %v3053 = vpop.f32.mrb[0].mxu0
    %v3054 = vadd.f32 %v2977, %v3053
    %v3055 = vpop.f32.mrb[0].mxu0
    %3056 = vdwg.mxu0
    %3057 = vmatprep.subr.mxu0 0.0
    %v3058 = vand.u32 %v27, 4294901760
    %v3059 = vsub.f32 %v27, %v3058
    %v3060 = vand.u32 %v3059, 4294901760
    %3061 = vmatpush1.msra.mxu0 %v3060
    %3062 = vmatprep.subr.mxu0 0.0
    %v3063 = vand.u32 %v28, 4294901760
    %v3064 = vsub.f32 %v28, %v3063
    %v3065 = vand.u32 %v3064, 4294901760
    %3066 = vmatpush1.msra.mxu0 %v3065
    %3067 = vmatprep.subr.mxu0 0.0
    %v3068 = vand.u32 %v29, 4294901760
    %v3069 = vsub.f32 %v29, %v3068
    %v3070 = vand.u32 %v3069, 4294901760
    %3071 = vmatpush1.msra.mxu0 %v3070
    %3072 = vmatprep.subr.mxu0 0.0
    %v3073 = vand.u32 %v30, 4294901760
    %v3074 = vsub.f32 %v30, %v3073
    %v3075 = vand.u32 %v3074, 4294901760
    %3076 = vmatpush1.msra.mxu0 %v3075
    %3077 = vmatprep.subr.mxu0 0.0
    %3078 = vmatpush1.msra.mxu0 0.0
    %3079 = vmatprep.subr.mxu0 0.0
    %3080 = vmatpush1.msra.mxu0 0.0
    %3081 = vmatprep.subr.mxu0 0.0
    %3082 = vmatpush1.msra.mxu0 0.0
    %3083 = vmatprep.subr.mxu0 0.0
    %3084 = vmatpush1.msra.mxu0 0.0
    %3085 = vmatprep.subr.mxu0 0.0
    %3086 = vmatpush1.msra.mxu0 0.0
    %3087 = vmatprep.subr.mxu0 0.0
    %3088 = vmatpush1.msra.mxu0 0.0
    %3089 = vmatprep.subr.mxu0 0.0
    %3090 = vmatpush1.msra.mxu0 0.0
    %3091 = vmatprep.subr.mxu0 0.0
    %3092 = vmatpush1.msra.mxu0 0.0
    %3093 = vmatprep.subr.mxu0 0.0
    %3094 = vmatpush1.msra.mxu0 0.0
    %3095 = vmatprep.subr.mxu0 0.0
    %3096 = vmatpush1.msra.mxu0 0.0
    %3097 = vmatprep.subr.mxu0 0.0
    %3098 = vmatpush1.msra.mxu0 0.0
    %3099 = vmatprep.subr.mxu0 0.0
    %3100 = vmatpush1.msra.mxu0 0.0
    %3101 = vmatprep.subr.mxu0 0.0
    %3102 = vmatpush1.msra.mxu0 0.0
    %3103 = vmatprep.subr.mxu0 0.0
    %3104 = vmatpush1.msra.mxu0 0.0
    %3105 = vmatprep.subr.mxu0 0.0
    %3106 = vmatpush1.msra.mxu0 0.0
    %3107 = vmatprep.subr.mxu0 0.0
    %3108 = vmatpush1.msra.mxu0 0.0
    %3109 = vmatprep.subr.mxu0 0.0
    %3110 = vmatpush1.msra.mxu0 0.0
    %3111 = vmatprep.subr.mxu0 0.0
    %3112 = vmatpush1.msra.mxu0 0.0
    %3113 = vmatprep.subr.mxu0 0.0
    %3114 = vmatpush1.msra.mxu0 0.0
    %3115 = vmatprep.subr.mxu0 0.0
    %3116 = vmatpush1.msra.mxu0 0.0
    %3117 = vmatprep.subr.mxu0 0.0
    %3118 = vmatpush1.msra.mxu0 0.0
    %3119 = vmatprep.subr.mxu0 0.0
    %3120 = vmatpush1.msra.mxu0 0.0
    %3121 = vmatprep.subr.mxu0 0.0
    %3122 = vmatpush1.msra.mxu0 0.0
    %3123 = vmatprep.subr.mxu0 0.0
    %3124 = vmatpush1.msra.mxu0 0.0
    %3125 = vmatprep.subr.mxu0 0.0
    %3126 = vmatpush1.msra.mxu0 0.0
    %3127 = vmatprep.subr.mxu0 0.0
    %3128 = vmatpush1.msra.mxu0 0.0
    %3129 = vmatprep.subr.mxu0 0.0
    %3130 = vmatpush1.msra.mxu0 0.0
    %3131 = vmatprep.subr.mxu0 0.0
    %3132 = vmatpush1.msra.mxu0 0.0
    %3133 = vmatprep.mubr.f32.mxu0 0.0
    %v3134 = vand.u32 %v2728, 4294901760
    %3135 = vmatmul.mubr.f32.gmra.mrb[0].mxu0 %v3134
    %v3136 = vpop.f32.mrb[0].mxu0
    %v3137 = vadd.f32 %v3054, %v3136
    %v3138 = vpop.f32.mrb[0].mxu0
    %3139 = vdwg.mxu0
    %3140 = vmatprep.subr.mxu0 0.0
    %v3141 = vand.u32 %v27, 4294901760
    %3142 = vmatpush1.msra.mxu0 %v3141
    %3143 = vmatprep.subr.mxu0 0.0
    %v3144 = vand.u32 %v28, 4294901760
    %3145 = vmatpush1.msra.mxu0 %v3144
    %3146 = vmatprep.subr.mxu0 0.0
    %v3147 = vand.u32 %v29, 4294901760
    %3148 = vmatpush1.msra.mxu0 %v3147
    %3149 = vmatprep.subr.mxu0 0.0
    %v3150 = vand.u32 %v30, 4294901760
    %3151 = vmatpush1.msra.mxu0 %v3150
    %3152 = vmatprep.subr.mxu0 0.0
    %3153 = vmatpush1.msra.mxu0 0.0
    %3154 = vmatprep.subr.mxu0 0.0
    %3155 = vmatpush1.msra.mxu0 0.0
    %3156 = vmatprep.subr.mxu0 0.0
    %3157 = vmatpush1.msra.mxu0 0.0
    %3158 = vmatprep.subr.mxu0 0.0
    %3159 = vmatpush1.msra.mxu0 0.0
    %3160 = vmatprep.subr.mxu0 0.0
    %3161 = vmatpush1.msra.mxu0 0.0
    %3162 = vmatprep.subr.mxu0 0.0
    %3163 = vmatpush1.msra.mxu0 0.0
    %3164 = vmatprep.subr.mxu0 0.0
    %3165 = vmatpush1.msra.mxu0 0.0
    %3166 = vmatprep.subr.mxu0 0.0
    %3167 = vmatpush1.msra.mxu0 0.0
    %3168 = vmatprep.subr.mxu0 0.0
    %3169 = vmatpush1.msra.mxu0 0.0
    %3170 = vmatprep.subr.mxu0 0.0
    %3171 = vmatpush1.msra.mxu0 0.0
    %3172 = vmatprep.subr.mxu0 0.0
    %3173 = vmatpush1.msra.mxu0 0.0
    %3174 = vmatprep.subr.mxu0 0.0
    %3175 = vmatpush1.msra.mxu0 0.0
    %3176 = vmatprep.subr.mxu0 0.0
    %3177 = vmatpush1.msra.mxu0 0.0
    %3178 = vmatprep.subr.mxu0 0.0
    %3179 = vmatpush1.msra.mxu0 0.0
    %3180 = vmatprep.subr.mxu0 0.0
    %3181 = vmatpush1.msra.mxu0 0.0
    %3182 = vmatprep.subr.mxu0 0.0
    %3183 = vmatpush1.msra.mxu0 0.0
    %3184 = vmatprep.subr.mxu0 0.0
    %3185 = vmatpush1.msra.mxu0 0.0
    %3186 = vmatprep.subr.mxu0 0.0
    %3187 = vmatpush1.msra.mxu0 0.0
    %3188 = vmatprep.subr.mxu0 0.0
    %3189 = vmatpush1.msra.mxu0 0.0
    %3190 = vmatprep.subr.mxu0 0.0
    %3191 = vmatpush1.msra.mxu0 0.0
    %3192 = vmatprep.subr.mxu0 0.0
    %3193 = vmatpush1.msra.mxu0 0.0
    %3194 = vmatprep.subr.mxu0 0.0
    %3195 = vmatpush1.msra.mxu0 0.0
    %3196 = vmatprep.subr.mxu0 0.0
    %3197 = vmatpush1.msra.mxu0 0.0
    %3198 = vmatprep.subr.mxu0 0.0
    %3199 = vmatpush1.msra.mxu0 0.0
    %3200 = vmatprep.subr.mxu0 0.0
    %3201 = vmatpush1.msra.mxu0 0.0
    %3202 = vmatprep.subr.mxu0 0.0
    %3203 = vmatpush1.msra.mxu0 0.0
    %3204 = vmatprep.subr.mxu0 0.0
    %3205 = vmatpush1.msra.mxu0 0.0
    %3206 = vmatprep.subr.mxu0 0.0
    %3207 = vmatpush1.msra.mxu0 0.0
    %3208 = vmatprep.mubr.f32.mxu0 0.0
    %v3209 = vand.u32 %v2728, 4294901760
    %3210 = vmatmul.mubr.f32.gmra.mrb[0].mxu0 %v3209
    %v3211 = vpop.f32.mrb[0].mxu0
    %v3212 = vadd.f32 %v3137, %v3211
    %v3213 = vpop.f32.mrb[0].mxu0
    %3214 = vdwg.mxu0
    %v3215 = vadd.f32 %v620, %v3212
    %v3216 = vxor.u32 %v3215, 2147483648
    %v3217 = vmul.f32 %v3216, 1.442695
    %v3218 = vpow.pop %v3217
    %v3219 = vadd.f32 %v3218, 1.0
    %v3220 = vrcp.pop %v3219
    %v3221 = vmul.f32 1.0, %v3220
    %v3222 = vtanh.pop %v3215
    %v3223 = vmul.f32 %v3221, %v2711
    %3225 = vrot.lane.b32.xlu0 %v3222, 64
    %v3226 = vpop.permute.xlu0 %3225
    %v3228 = vmul.f32 %v3221, %v3226
    %3230 = vrot.lane.b32.xlu0 %v3228, 32
    %v3231 = vpop.permute.xlu0 %3230
    %v3233 = vadd.f32 %v3223, %v3231
    %v3234 = vtanh.pop %v3233
    %3236 = vrot.lane.b32.xlu0 %v3234, 64
    %v3237 = vpop.permute.xlu0 %3236
    %v3239 = vmul.f32 %v3221, %v3237
    %v3242 = vunpack.c.l.s4 1983009808
    %v3243 = vunpack.c.0.s8 %v3242
    %v3244 = vlaneseq
    %v3245 = vshrl.u32 %v3244, 7
    %v3246 = vsub.s32 %v3243, %v3245
    %v3247 = vrot.slane %v3239, %v3246
    %3248 = vrot.lane.b32.xlu0 %v3247, 32
    %v3249 = vpop.permute.xlu0 %3248
    %v3250 = vsel %vm638, %v3249, 0
    %3252 = vmatprep.subr.mxu0 0.0
    %v3253 = vand.u32 %v27, 4294901760
    %3254 = vmatpush1.msra.mxu0 %v3253
    %3255 = vmatprep.subr.mxu0 0.0
    %v3256 = vand.u32 %v28, 4294901760
    %3257 = vmatpush1.msra.mxu0 %v3256
    %3258 = vmatprep.subr.mxu0 0.0
    %v3259 = vand.u32 %v29, 4294901760
    %3260 = vmatpush1.msra.mxu0 %v3259
    %3261 = vmatprep.subr.mxu0 0.0
    %v3262 = vand.u32 %v30, 4294901760
    %3263 = vmatpush1.msra.mxu0 %v3262
    %3264 = vmatprep.subr.mxu0 0.0
    %3265 = vmatpush1.msra.mxu0 0.0
    %3266 = vmatprep.subr.mxu0 0.0
    %3267 = vmatpush1.msra.mxu0 0.0
    %3268 = vmatprep.subr.mxu0 0.0
    %3269 = vmatpush1.msra.mxu0 0.0
    %3270 = vmatprep.subr.mxu0 0.0
    %3271 = vmatpush1.msra.mxu0 0.0
    %3272 = vmatprep.subr.mxu0 0.0
    %3273 = vmatpush1.msra.mxu0 0.0
    %3274 = vmatprep.subr.mxu0 0.0
    %3275 = vmatpush1.msra.mxu0 0.0
    %3276 = vmatprep.subr.mxu0 0.0
    %3277 = vmatpush1.msra.mxu0 0.0
    %3278 = vmatprep.subr.mxu0 0.0
    %3279 = vmatpush1.msra.mxu0 0.0
    %3280 = vmatprep.subr.mxu0 0.0
    %3281 = vmatpush1.msra.mxu0 0.0
    %3282 = vmatprep.subr.mxu0 0.0
    %3283 = vmatpush1.msra.mxu0 0.0
    %3284 = vmatprep.subr.mxu0 0.0
    %3285 = vmatpush1.msra.mxu0 0.0
    %3286 = vmatprep.subr.mxu0 0.0
    %3287 = vmatpush1.msra.mxu0 0.0
    %3288 = vmatprep.subr.mxu0 0.0
    %3289 = vmatpush1.msra.mxu0 0.0
    %3290 = vmatprep.subr.mxu0 0.0
    %3291 = vmatpush1.msra.mxu0 0.0
    %3292 = vmatprep.subr.mxu0 0.0
    %3293 = vmatpush1.msra.mxu0 0.0
    %3294 = vmatprep.subr.mxu0 0.0
    %3295 = vmatpush1.msra.mxu0 0.0
    %3296 = vmatprep.subr.mxu0 0.0
    %3297 = vmatpush1.msra.mxu0 0.0
    %3298 = vmatprep.subr.mxu0 0.0
    %3299 = vmatpush1.msra.mxu0 0.0
    %3300 = vmatprep.subr.mxu0 0.0
    %3301 = vmatpush1.msra.mxu0 0.0
    %3302 = vmatprep.subr.mxu0 0.0
    %3303 = vmatpush1.msra.mxu0 0.0
    %3304 = vmatprep.subr.mxu0 0.0
    %3305 = vmatpush1.msra.mxu0 0.0
    %3306 = vmatprep.subr.mxu0 0.0
    %3307 = vmatpush1.msra.mxu0 0.0
    %3308 = vmatprep.subr.mxu0 0.0
    %3309 = vmatpush1.msra.mxu0 0.0
    %3310 = vmatprep.subr.mxu0 0.0
    %3311 = vmatpush1.msra.mxu0 0.0
    %3312 = vmatprep.subr.mxu0 0.0
    %3313 = vmatpush1.msra.mxu0 0.0
    %3314 = vmatprep.subr.mxu0 0.0
    %3315 = vmatpush1.msra.mxu0 0.0
    %3316 = vmatprep.subr.mxu0 0.0
    %3317 = vmatpush1.msra.mxu0 0.0
    %3318 = vmatprep.subr.mxu0 0.0
    %3319 = vmatpush1.msra.mxu0 0.0
    %3320 = vmatprep.mubr.f32.mxu0 0.0
    %v3321 = vand.u32 %v3250, 4294901760
    %v3322 = vsub.f32 %v3250, %v3321
    %v3323 = vand.u32 %v3322, 4294901760
    %v3324 = vsub.f32 %v3322, %v3323
    %v3325 = vand.u32 %v3324, 4294901760
    %3326 = vmatmul.mubr.f32.gmra.mrb[0].mxu0 %v3325
    %v3327 = vpop.f32.mrb[0].mxu0
    %v3328 = vadd.f32 0.0, %v3327
    %v3329 = vpop.f32.mrb[0].mxu0
    %3330 = vdwg.mxu0
    %3331 = vmatprep.subr.mxu0 0.0
    %v3332 = vand.u32 %v27, 4294901760
    %v3333 = vsub.f32 %v27, %v3332
    %v3334 = vand.u32 %v3333, 4294901760
    %v3335 = vsub.f32 %v3333, %v3334
    %v3336 = vand.u32 %v3335, 4294901760
    %3337 = vmatpush1.msra.mxu0 %v3336
    %3338 = vmatprep.subr.mxu0 0.0
    %v3339 = vand.u32 %v28, 4294901760
    %v3340 = vsub.f32 %v28, %v3339
    %v3341 = vand.u32 %v3340, 4294901760
    %v3342 = vsub.f32 %v3340, %v3341
    %v3343 = vand.u32 %v3342, 4294901760
    %3344 = vmatpush1.msra.mxu0 %v3343
    %3345 = vmatprep.subr.mxu0 0.0
    %v3346 = vand.u32 %v29, 4294901760
    %v3347 = vsub.f32 %v29, %v3346
    %v3348 = vand.u32 %v3347, 4294901760
    %v3349 = vsub.f32 %v3347, %v3348
    %v3350 = vand.u32 %v3349, 4294901760
    %3351 = vmatpush1.msra.mxu0 %v3350
    %3352 = vmatprep.subr.mxu0 0.0
    %v3353 = vand.u32 %v30, 4294901760
    %v3354 = vsub.f32 %v30, %v3353
    %v3355 = vand.u32 %v3354, 4294901760
    %v3356 = vsub.f32 %v3354, %v3355
    %v3357 = vand.u32 %v3356, 4294901760
    %3358 = vmatpush1.msra.mxu0 %v3357
    %3359 = vmatprep.subr.mxu0 0.0
    %3360 = vmatpush1.msra.mxu0 0.0
    %3361 = vmatprep.subr.mxu0 0.0
    %3362 = vmatpush1.msra.mxu0 0.0
    %3363 = vmatprep.subr.mxu0 0.0
    %3364 = vmatpush1.msra.mxu0 0.0
    %3365 = vmatprep.subr.mxu0 0.0
    %3366 = vmatpush1.msra.mxu0 0.0
    %3367 = vmatprep.subr.mxu0 0.0
    %3368 = vmatpush1.msra.mxu0 0.0
    %3369 = vmatprep.subr.mxu0 0.0
    %3370 = vmatpush1.msra.mxu0 0.0
    %3371 = vmatprep.subr.mxu0 0.0
    %3372 = vmatpush1.msra.mxu0 0.0
    %3373 = vmatprep.subr.mxu0 0.0
    %3374 = vmatpush1.msra.mxu0 0.0
    %3375 = vmatprep.subr.mxu0 0.0
    %3376 = vmatpush1.msra.mxu0 0.0
    %3377 = vmatprep.subr.mxu0 0.0
    %3378 = vmatpush1.msra.mxu0 0.0
    %3379 = vmatprep.subr.mxu0 0.0
    %3380 = vmatpush1.msra.mxu0 0.0
    %3381 = vmatprep.subr.mxu0 0.0
    %3382 = vmatpush1.msra.mxu0 0.0
    %3383 = vmatprep.subr.mxu0 0.0
    %3384 = vmatpush1.msra.mxu0 0.0
    %3385 = vmatprep.subr.mxu0 0.0
    %3386 = vmatpush1.msra.mxu0 0.0
    %3387 = vmatprep.subr.mxu0 0.0
    %3388 = vmatpush1.msra.mxu0 0.0
    %3389 = vmatprep.subr.mxu0 0.0
    %3390 = vmatpush1.msra.mxu0 0.0
    %3391 = vmatprep.subr.mxu0 0.0
    %3392 = vmatpush1.msra.mxu0 0.0
    %3393 = vmatprep.subr.mxu0 0.0
    %3394 = vmatpush1.msra.mxu0 0.0
    %3395 = vmatprep.subr.mxu0 0.0
    %3396 = vmatpush1.msra.mxu0 0.0
    %3397 = vmatprep.subr.mxu0 0.0
    %3398 = vmatpush1.msra.mxu0 0.0
    %3399 = vmatprep.subr.mxu0 0.0
    %3400 = vmatpush1.msra.mxu0 0.0
    %3401 = vmatprep.subr.mxu0 0.0
    %3402 = vmatpush1.msra.mxu0 0.0
    %3403 = vmatprep.subr.mxu0 0.0
    %3404 = vmatpush1.msra.mxu0 0.0
    %3405 = vmatprep.subr.mxu0 0.0
    %3406 = vmatpush1.msra.mxu0 0.0
    %3407 = vmatprep.subr.mxu0 0.0
    %3408 = vmatpush1.msra.mxu0 0.0
    %3409 = vmatprep.subr.mxu0 0.0
    %3410 = vmatpush1.msra.mxu0 0.0
    %3411 = vmatprep.subr.mxu0 0.0
    %3412 = vmatpush1.msra.mxu0 0.0
    %3413 = vmatprep.subr.mxu0 0.0
    %3414 = vmatpush1.msra.mxu0 0.0
    %3415 = vmatprep.mubr.f32.mxu0 0.0
    %v3416 = vand.u32 %v3250, 4294901760
    %3417 = vmatmul.mubr.f32.gmra.mrb[0].mxu0 %v3416
    %v3418 = vpop.f32.mrb[0].mxu0
    %v3419 = vadd.f32 %v3328, %v3418
    %v3420 = vpop.f32.mrb[0].mxu0
    %3421 = vdwg.mxu0
    %3422 = vmatprep.subr.mxu0 0.0
    %v3423 = vand.u32 %v27, 4294901760
    %v3424 = vsub.f32 %v27, %v3423
    %3425 = vmatpush1.msra.mxu0 %v3424
    %3426 = vmatprep.subr.mxu0 0.0
    %v3427 = vand.u32 %v28, 4294901760
    %v3428 = vsub.f32 %v28, %v3427
    %3429 = vmatpush1.msra.mxu0 %v3428
    %3430 = vmatprep.subr.mxu0 0.0
    %v3431 = vand.u32 %v29, 4294901760
    %v3432 = vsub.f32 %v29, %v3431
    %3433 = vmatpush1.msra.mxu0 %v3432
    %3434 = vmatprep.subr.mxu0 0.0
    %v3435 = vand.u32 %v30, 4294901760
    %v3436 = vsub.f32 %v30, %v3435
    %3437 = vmatpush1.msra.mxu0 %v3436
    %3438 = vmatprep.subr.mxu0 0.0
    %3439 = vmatpush1.msra.mxu0 0.0
    %3440 = vmatprep.subr.mxu0 0.0
    %3441 = vmatpush1.msra.mxu0 0.0
    %3442 = vmatprep.subr.mxu0 0.0
    %3443 = vmatpush1.msra.mxu0 0.0
    %3444 = vmatprep.subr.mxu0 0.0
    %3445 = vmatpush1.msra.mxu0 0.0
    %3446 = vmatprep.subr.mxu0 0.0
    %3447 = vmatpush1.msra.mxu0 0.0
    %3448 = vmatprep.subr.mxu0 0.0
    %3449 = vmatpush1.msra.mxu0 0.0
    %3450 = vmatprep.subr.mxu0 0.0
    %3451 = vmatpush1.msra.mxu0 0.0
    %3452 = vmatprep.subr.mxu0 0.0
    %3453 = vmatpush1.msra.mxu0 0.0
    %3454 = vmatprep.subr.mxu0 0.0
    %3455 = vmatpush1.msra.mxu0 0.0
    %3456 = vmatprep.subr.mxu0 0.0
    %3457 = vmatpush1.msra.mxu0 0.0
    %3458 = vmatprep.subr.mxu0 0.0
    %3459 = vmatpush1.msra.mxu0 0.0
    %3460 = vmatprep.subr.mxu0 0.0
    %3461 = vmatpush1.msra.mxu0 0.0
    %3462 = vmatprep.subr.mxu0 0.0
    %3463 = vmatpush1.msra.mxu0 0.0
    %3464 = vmatprep.subr.mxu0 0.0
    %3465 = vmatpush1.msra.mxu0 0.0
    %3466 = vmatprep.subr.mxu0 0.0
    %3467 = vmatpush1.msra.mxu0 0.0
    %3468 = vmatprep.subr.mxu0 0.0
    %3469 = vmatpush1.msra.mxu0 0.0
    %3470 = vmatprep.subr.mxu0 0.0
    %3471 = vmatpush1.msra.mxu0 0.0
    %3472 = vmatprep.subr.mxu0 0.0
    %3473 = vmatpush1.msra.mxu0 0.0
    %3474 = vmatprep.subr.mxu0 0.0
    %3475 = vmatpush1.msra.mxu0 0.0
    %3476 = vmatprep.subr.mxu0 0.0
    %3477 = vmatpush1.msra.mxu0 0.0
    %3478 = vmatprep.subr.mxu0 0.0
    %3479 = vmatpush1.msra.mxu0 0.0
    %3480 = vmatprep.subr.mxu0 0.0
    %3481 = vmatpush1.msra.mxu0 0.0
    %3482 = vmatprep.subr.mxu0 0.0
    %3483 = vmatpush1.msra.mxu0 0.0
    %3484 = vmatprep.subr.mxu0 0.0
    %3485 = vmatpush1.msra.mxu0 0.0
    %3486 = vmatprep.subr.mxu0 0.0
    %3487 = vmatpush1.msra.mxu0 0.0
    %3488 = vmatprep.subr.mxu0 0.0
    %3489 = vmatpush1.msra.mxu0 0.0
    %3490 = vmatprep.subr.mxu0 0.0
    %3491 = vmatpush1.msra.mxu0 0.0
    %3492 = vmatprep.subr.mxu0 0.0
    %3493 = vmatpush1.msra.mxu0 0.0
    %3494 = vmatprep.mubr.f32.mxu0 0.0
    %v3495 = vand.u32 %v3250, 4294901760
    %v3496 = vsub.f32 %v3250, %v3495
    %3497 = vmatmul.mubr.f32.gmra.mrb[0].mxu0 %v3496
    %v3498 = vpop.f32.mrb[0].mxu0
    %v3499 = vadd.f32 %v3419, %v3498
    %v3500 = vpop.f32.mrb[0].mxu0
    %3501 = vdwg.mxu0
    %3502 = vmatprep.subr.mxu0 0.0
    %v3503 = vand.u32 %v27, 4294901760
    %3504 = vmatpush1.msra.mxu0 %v3503
    %3505 = vmatprep.subr.mxu0 0.0
    %v3506 = vand.u32 %v28, 4294901760
    %3507 = vmatpush1.msra.mxu0 %v3506
    %3508 = vmatprep.subr.mxu0 0.0
    %v3509 = vand.u32 %v29, 4294901760
    %3510 = vmatpush1.msra.mxu0 %v3509
    %3511 = vmatprep.subr.mxu0 0.0
    %v3512 = vand.u32 %v30, 4294901760
    %3513 = vmatpush1.msra.mxu0 %v3512
    %3514 = vmatprep.subr.mxu0 0.0
    %3515 = vmatpush1.msra.mxu0 0.0
    %3516 = vmatprep.subr.mxu0 0.0
    %3517 = vmatpush1.msra.mxu0 0.0
    %3518 = vmatprep.subr.mxu0 0.0
    %3519 = vmatpush1.msra.mxu0 0.0
    %3520 = vmatprep.subr.mxu0 0.0
    %3521 = vmatpush1.msra.mxu0 0.0
    %3522 = vmatprep.subr.mxu0 0.0
    %3523 = vmatpush1.msra.mxu0 0.0
    %3524 = vmatprep.subr.mxu0 0.0
    %3525 = vmatpush1.msra.mxu0 0.0
    %3526 = vmatprep.subr.mxu0 0.0
    %3527 = vmatpush1.msra.mxu0 0.0
    %3528 = vmatprep.subr.mxu0 0.0
    %3529 = vmatpush1.msra.mxu0 0.0
    %3530 = vmatprep.subr.mxu0 0.0
    %3531 = vmatpush1.msra.mxu0 0.0
    %3532 = vmatprep.subr.mxu0 0.0
    %3533 = vmatpush1.msra.mxu0 0.0
    %3534 = vmatprep.subr.mxu0 0.0
    %3535 = vmatpush1.msra.mxu0 0.0
    %3536 = vmatprep.subr.mxu0 0.0
    %3537 = vmatpush1.msra.mxu0 0.0
    %3538 = vmatprep.subr.mxu0 0.0
    %3539 = vmatpush1.msra.mxu0 0.0
    %3540 = vmatprep.subr.mxu0 0.0
    %3541 = vmatpush1.msra.mxu0 0.0
    %3542 = vmatprep.subr.mxu0 0.0
    %3543 = vmatpush1.msra.mxu0 0.0
    %3544 = vmatprep.subr.mxu0 0.0
    %3545 = vmatpush1.msra.mxu0 0.0
    %3546 = vmatprep.subr.mxu0 0.0
    %3547 = vmatpush1.msra.mxu0 0.0
    %3548 = vmatprep.subr.mxu0 0.0
    %3549 = vmatpush1.msra.mxu0 0.0
    %3550 = vmatprep.subr.mxu0 0.0
    %3551 = vmatpush1.msra.mxu0 0.0
    %3552 = vmatprep.subr.mxu0 0.0
    %3553 = vmatpush1.msra.mxu0 0.0
    %3554 = vmatprep.subr.mxu0 0.0
    %3555 = vmatpush1.msra.mxu0 0.0
    %3556 = vmatprep.subr.mxu0 0.0
    %3557 = vmatpush1.msra.mxu0 0.0
    %3558 = vmatprep.subr.mxu0 0.0
    %3559 = vmatpush1.msra.mxu0 0.0
    %3560 = vmatprep.subr.mxu0 0.0
    %3561 = vmatpush1.msra.mxu0 0.0
    %3562 = vmatprep.subr.mxu0 0.0
    %3563 = vmatpush1.msra.mxu0 0.0
    %3564 = vmatprep.subr.mxu0 0.0
    %3565 = vmatpush1.msra.mxu0 0.0
    %3566 = vmatprep.subr.mxu0 0.0
    %3567 = vmatpush1.msra.mxu0 0.0
    %3568 = vmatprep.subr.mxu0 0.0
    %3569 = vmatpush1.msra.mxu0 0.0
    %3570 = vmatprep.mubr.f32.mxu0 0.0
    %v3571 = vand.u32 %v3250, 4294901760
    %v3572 = vsub.f32 %v3250, %v3571
    %v3573 = vand.u32 %v3572, 4294901760
    %3574 = vmatmul.mubr.f32.gmra.mrb[0].mxu0 %v3573
    %v3575 = vpop.f32.mrb[0].mxu0
    %v3576 = vadd.f32 %v3499, %v3575
    %v3577 = vpop.f32.mrb[0].mxu0
    %3578 = vdwg.mxu0
    %3579 = vmatprep.subr.mxu0 0.0
    %v3580 = vand.u32 %v27, 4294901760
    %v3581 = vsub.f32 %v27, %v3580
    %v3582 = vand.u32 %v3581, 4294901760
    %3583 = vmatpush1.msra.mxu0 %v3582
    %3584 = vmatprep.subr.mxu0 0.0
    %v3585 = vand.u32 %v28, 4294901760
    %v3586 = vsub.f32 %v28, %v3585
    %v3587 = vand.u32 %v3586, 4294901760
    %3588 = vmatpush1.msra.mxu0 %v3587
    %3589 = vmatprep.subr.mxu0 0.0
    %v3590 = vand.u32 %v29, 4294901760
    %v3591 = vsub.f32 %v29, %v3590
    %v3592 = vand.u32 %v3591, 4294901760
    %3593 = vmatpush1.msra.mxu0 %v3592
    %3594 = vmatprep.subr.mxu0 0.0
    %v3595 = vand.u32 %v30, 4294901760
    %v3596 = vsub.f32 %v30, %v3595
    %v3597 = vand.u32 %v3596, 4294901760
    %3598 = vmatpush1.msra.mxu0 %v3597
    %3599 = vmatprep.subr.mxu0 0.0
    %3600 = vmatpush1.msra.mxu0 0.0
    %3601 = vmatprep.subr.mxu0 0.0
    %3602 = vmatpush1.msra.mxu0 0.0
    %3603 = vmatprep.subr.mxu0 0.0
    %3604 = vmatpush1.msra.mxu0 0.0
    %3605 = vmatprep.subr.mxu0 0.0
    %3606 = vmatpush1.msra.mxu0 0.0
    %3607 = vmatprep.subr.mxu0 0.0
    %3608 = vmatpush1.msra.mxu0 0.0
    %3609 = vmatprep.subr.mxu0 0.0
    %3610 = vmatpush1.msra.mxu0 0.0
    %3611 = vmatprep.subr.mxu0 0.0
    %3612 = vmatpush1.msra.mxu0 0.0
    %3613 = vmatprep.subr.mxu0 0.0
    %3614 = vmatpush1.msra.mxu0 0.0
    %3615 = vmatprep.subr.mxu0 0.0
    %3616 = vmatpush1.msra.mxu0 0.0
    %3617 = vmatprep.subr.mxu0 0.0
    %3618 = vmatpush1.msra.mxu0 0.0
    %3619 = vmatprep.subr.mxu0 0.0
    %3620 = vmatpush1.msra.mxu0 0.0
    %3621 = vmatprep.subr.mxu0 0.0
    %3622 = vmatpush1.msra.mxu0 0.0
    %3623 = vmatprep.subr.mxu0 0.0
    %3624 = vmatpush1.msra.mxu0 0.0
    %3625 = vmatprep.subr.mxu0 0.0
    %3626 = vmatpush1.msra.mxu0 0.0
    %3627 = vmatprep.subr.mxu0 0.0
    %3628 = vmatpush1.msra.mxu0 0.0
    %3629 = vmatprep.subr.mxu0 0.0
    %3630 = vmatpush1.msra.mxu0 0.0
    %3631 = vmatprep.subr.mxu0 0.0
    %3632 = vmatpush1.msra.mxu0 0.0
    %3633 = vmatprep.subr.mxu0 0.0
    %3634 = vmatpush1.msra.mxu0 0.0
    %3635 = vmatprep.subr.mxu0 0.0
    %3636 = vmatpush1.msra.mxu0 0.0
    %3637 = vmatprep.subr.mxu0 0.0
    %3638 = vmatpush1.msra.mxu0 0.0
    %3639 = vmatprep.subr.mxu0 0.0
    %3640 = vmatpush1.msra.mxu0 0.0
    %3641 = vmatprep.subr.mxu0 0.0
    %3642 = vmatpush1.msra.mxu0 0.0
    %3643 = vmatprep.subr.mxu0 0.0
    %3644 = vmatpush1.msra.mxu0 0.0
    %3645 = vmatprep.subr.mxu0 0.0
    %3646 = vmatpush1.msra.mxu0 0.0
    %3647 = vmatprep.subr.mxu0 0.0
    %3648 = vmatpush1.msra.mxu0 0.0
    %3649 = vmatprep.subr.mxu0 0.0
    %3650 = vmatpush1.msra.mxu0 0.0
    %3651 = vmatprep.subr.mxu0 0.0
    %3652 = vmatpush1.msra.mxu0 0.0
    %3653 = vmatprep.subr.mxu0 0.0
    %3654 = vmatpush1.msra.mxu0 0.0
    %3655 = vmatprep.mubr.f32.mxu0 0.0
    %v3656 = vand.u32 %v3250, 4294901760
    %3657 = vmatmul.mubr.f32.gmra.mrb[0].mxu0 %v3656
    %v3658 = vpop.f32.mrb[0].mxu0
    %v3659 = vadd.f32 %v3576, %v3658
    %v3660 = vpop.f32.mrb[0].mxu0
    %3661 = vdwg.mxu0
    %3662 = vmatprep.subr.mxu0 0.0
    %v3663 = vand.u32 %v27, 4294901760
    %3664 = vmatpush1.msra.mxu0 %v3663
    %3665 = vmatprep.subr.mxu0 0.0
    %v3666 = vand.u32 %v28, 4294901760
    %3667 = vmatpush1.msra.mxu0 %v3666
    %3668 = vmatprep.subr.mxu0 0.0
    %v3669 = vand.u32 %v29, 4294901760
    %3670 = vmatpush1.msra.mxu0 %v3669
    %3671 = vmatprep.subr.mxu0 0.0
    %v3672 = vand.u32 %v30, 4294901760
    %3673 = vmatpush1.msra.mxu0 %v3672
    %3674 = vmatprep.subr.mxu0 0.0
    %3675 = vmatpush1.msra.mxu0 0.0
    %3676 = vmatprep.subr.mxu0 0.0
    %3677 = vmatpush1.msra.mxu0 0.0
    %3678 = vmatprep.subr.mxu0 0.0
    %3679 = vmatpush1.msra.mxu0 0.0
    %3680 = vmatprep.subr.mxu0 0.0
    %3681 = vmatpush1.msra.mxu0 0.0
    %3682 = vmatprep.subr.mxu0 0.0
    %3683 = vmatpush1.msra.mxu0 0.0
    %3684 = vmatprep.subr.mxu0 0.0
    %3685 = vmatpush1.msra.mxu0 0.0
    %3686 = vmatprep.subr.mxu0 0.0
    %3687 = vmatpush1.msra.mxu0 0.0
    %3688 = vmatprep.subr.mxu0 0.0
    %3689 = vmatpush1.msra.mxu0 0.0
    %3690 = vmatprep.subr.mxu0 0.0
    %3691 = vmatpush1.msra.mxu0 0.0
    %3692 = vmatprep.subr.mxu0 0.0
    %3693 = vmatpush1.msra.mxu0 0.0
    %3694 = vmatprep.subr.mxu0 0.0
    %3695 = vmatpush1.msra.mxu0 0.0
    %3696 = vmatprep.subr.mxu0 0.0
    %3697 = vmatpush1.msra.mxu0 0.0
    %3698 = vmatprep.subr.mxu0 0.0
    %3699 = vmatpush1.msra.mxu0 0.0
    %3700 = vmatprep.subr.mxu0 0.0
    %3701 = vmatpush1.msra.mxu0 0.0
    %3702 = vmatprep.subr.mxu0 0.0
    %3703 = vmatpush1.msra.mxu0 0.0
    %3704 = vmatprep.subr.mxu0 0.0
    %3705 = vmatpush1.msra.mxu0 0.0
    %3706 = vmatprep.subr.mxu0 0.0
    %3707 = vmatpush1.msra.mxu0 0.0
    %3708 = vmatprep.subr.mxu0 0.0
    %3709 = vmatpush1.msra.mxu0 0.0
    %3710 = vmatprep.subr.mxu0 0.0
    %3711 = vmatpush1.msra.mxu0 0.0
    %3712 = vmatprep.subr.mxu0 0.0
    %3713 = vmatpush1.msra.mxu0 0.0
    %3714 = vmatprep.subr.mxu0 0.0
    %3715 = vmatpush1.msra.mxu0 0.0
    %3716 = vmatprep.subr.mxu0 0.0
    %3717 = vmatpush1.msra.mxu0 0.0
    %3718 = vmatprep.subr.mxu0 0.0
    %3719 = vmatpush1.msra.mxu0 0.0
    %3720 = vmatprep.subr.mxu0 0.0
    %3721 = vmatpush1.msra.mxu0 0.0
    %3722 = vmatprep.subr.mxu0 0.0
    %3723 = vmatpush1.msra.mxu0 0.0
    %3724 = vmatprep.subr.mxu0 0.0
    %3725 = vmatpush1.msra.mxu0 0.0
    %3726 = vmatprep.subr.mxu0 0.0
    %3727 = vmatpush1.msra.mxu0 0.0
    %3728 = vmatprep.subr.mxu0 0.0
    %3729 = vmatpush1.msra.mxu0 0.0
    %3730 = vmatprep.mubr.f32.mxu0 0.0
    %v3731 = vand.u32 %v3250, 4294901760
    %3732 = vmatmul.mubr.f32.gmra.mrb[0].mxu0 %v3731
    %v3733 = vpop.f32.mrb[0].mxu0
    %v3734 = vadd.f32 %v3659, %v3733
    %v3735 = vpop.f32.mrb[0].mxu0
    %3736 = vdwg.mxu0
    %v3737 = vadd.f32 %v628, %v3734
    %v3738 = vxor.u32 %v3737, 2147483648
    %v3739 = vmul.f32 %v3738, 1.442695
    %v3740 = vpow.pop %v3739
    %v3741 = vadd.f32 %v3740, 1.0
    %v3742 = vrcp.pop %v3741
    %v3743 = vmul.f32 1.0, %v3742
    %v3744 = vtanh.pop %v3737
    %v3745 = vmul.f32 %v3743, %v3233
    %3747 = vrot.lane.b32.xlu0 %v3744, 64
    %v3748 = vpop.permute.xlu0 %3747
    %v3750 = vmul.f32 %v3743, %v3748
    %3752 = vrot.lane.b32.xlu0 %v3750, 32
    %v3753 = vpop.permute.xlu0 %3752
    %v3755 = vadd.f32 %v3745, %v3753
    %v3756 = vtanh.pop %v3755
    %3758 = vrot.lane.b32.xlu0 %v3756, 64
    %v3759 = vpop.permute.xlu0 %3758
    %v3761 = vmul.f32 %v3743, %v3759
    %v3764 = vunpack.c.l.s4 1983009808
    %v3765 = vunpack.c.0.s8 %v3764
    %v3766 = vlaneseq
    %v3767 = vshrl.u32 %v3766, 7
    %v3768 = vsub.s32 %v3765, %v3767
    %v3769 = vrot.slane %v3761, %v3768
    %3770 = vrot.lane.b32.xlu0 %v3769, 32
    %v3771 = vpop.permute.xlu0 %3770
    %v3772 = vsel %vm638, %v3771, 0
    %3774 = vmatprep.subr.mxu0 0.0
    %v3775 = vand.u32 %v27, 4294901760
    %3776 = vmatpush1.msra.mxu0 %v3775
    %3777 = vmatprep.subr.mxu0 0.0
    %v3778 = vand.u32 %v28, 4294901760
    %3779 = vmatpush1.msra.mxu0 %v3778
    %3780 = vmatprep.subr.mxu0 0.0
    %v3781 = vand.u32 %v29, 4294901760
    %3782 = vmatpush1.msra.mxu0 %v3781
    %3783 = vmatprep.subr.mxu0 0.0
    %v3784 = vand.u32 %v30, 4294901760
    %3785 = vmatpush1.msra.mxu0 %v3784
    %3786 = vmatprep.subr.mxu0 0.0
    %3787 = vmatpush1.msra.mxu0 0.0
    %3788 = vmatprep.subr.mxu0 0.0
    %3789 = vmatpush1.msra.mxu0 0.0
    %3790 = vmatprep.subr.mxu0 0.0
    %3791 = vmatpush1.msra.mxu0 0.0
    %3792 = vmatprep.subr.mxu0 0.0
    %3793 = vmatpush1.msra.mxu0 0.0
    %3794 = vmatprep.subr.mxu0 0.0
    %3795 = vmatpush1.msra.mxu0 0.0
    %3796 = vmatprep.subr.mxu0 0.0
    %3797 = vmatpush1.msra.mxu0 0.0
    %3798 = vmatprep.subr.mxu0 0.0
    %3799 = vmatpush1.msra.mxu0 0.0
    %3800 = vmatprep.subr.mxu0 0.0
    %3801 = vmatpush1.msra.mxu0 0.0
    %3802 = vmatprep.subr.mxu0 0.0
    %3803 = vmatpush1.msra.mxu0 0.0
    %3804 = vmatprep.subr.mxu0 0.0
    %3805 = vmatpush1.msra.mxu0 0.0
    %3806 = vmatprep.subr.mxu0 0.0
    %3807 = vmatpush1.msra.mxu0 0.0
    %3808 = vmatprep.subr.mxu0 0.0
    %3809 = vmatpush1.msra.mxu0 0.0
    %3810 = vmatprep.subr.mxu0 0.0
    %3811 = vmatpush1.msra.mxu0 0.0
    %3812 = vmatprep.subr.mxu0 0.0
    %3813 = vmatpush1.msra.mxu0 0.0
    %3814 = vmatprep.subr.mxu0 0.0
    %3815 = vmatpush1.msra.mxu0 0.0
    %3816 = vmatprep.subr.mxu0 0.0
    %3817 = vmatpush1.msra.mxu0 0.0
    %3818 = vmatprep.subr.mxu0 0.0
    %3819 = vmatpush1.msra.mxu0 0.0
    %3820 = vmatprep.subr.mxu0 0.0
    %3821 = vmatpush1.msra.mxu0 0.0
    %3822 = vmatprep.subr.mxu0 0.0
    %3823 = vmatpush1.msra.mxu0 0.0
    %3824 = vmatprep.subr.mxu0 0.0
    %3825 = vmatpush1.msra.mxu0 0.0
    %3826 = vmatprep.subr.mxu0 0.0
    %3827 = vmatpush1.msra.mxu0 0.0
    %3828 = vmatprep.subr.mxu0 0.0
    %3829 = vmatpush1.msra.mxu0 0.0
    %3830 = vmatprep.subr.mxu0 0.0
    %3831 = vmatpush1.msra.mxu0 0.0
    %3832 = vmatprep.subr.mxu0 0.0
    %3833 = vmatpush1.msra.mxu0 0.0
    %3834 = vmatprep.subr.mxu0 0.0
    %3835 = vmatpush1.msra.mxu0 0.0
    %3836 = vmatprep.subr.mxu0 0.0
    %3837 = vmatpush1.msra.mxu0 0.0
    %3838 = vmatprep.subr.mxu0 0.0
    %3839 = vmatpush1.msra.mxu0 0.0
    %3840 = vmatprep.subr.mxu0 0.0
    %3841 = vmatpush1.msra.mxu0 0.0
    %3842 = vmatprep.mubr.f32.mxu0 0.0
    %v3843 = vand.u32 %v3772, 4294901760
    %v3844 = vsub.f32 %v3772, %v3843
    %v3845 = vand.u32 %v3844, 4294901760
    %v3846 = vsub.f32 %v3844, %v3845
    %v3847 = vand.u32 %v3846, 4294901760
    %3848 = vmatmul.mubr.f32.gmra.mrb[0].mxu0 %v3847
    %v3849 = vpop.f32.mrb[0].mxu0
    %v3850 = vadd.f32 0.0, %v3849
    %v3851 = vpop.f32.mrb[0].mxu0
    %3852 = vdwg.mxu0
    %3853 = vmatprep.subr.mxu0 0.0
    %v3854 = vand.u32 %v27, 4294901760
    %v3855 = vsub.f32 %v27, %v3854
    %v3856 = vand.u32 %v3855, 4294901760
    %v3857 = vsub.f32 %v3855, %v3856
    %v3858 = vand.u32 %v3857, 4294901760
    %3859 = vmatpush1.msra.mxu0 %v3858
    %3860 = vmatprep.subr.mxu0 0.0
    %v3861 = vand.u32 %v28, 4294901760
    %v3862 = vsub.f32 %v28, %v3861
    %v3863 = vand.u32 %v3862, 4294901760
    %v3864 = vsub.f32 %v3862, %v3863
    %v3865 = vand.u32 %v3864, 4294901760
    %3866 = vmatpush1.msra.mxu0 %v3865
    %3867 = vmatprep.subr.mxu0 0.0
    %v3868 = vand.u32 %v29, 4294901760
    %v3869 = vsub.f32 %v29, %v3868
    %v3870 = vand.u32 %v3869, 4294901760
    %v3871 = vsub.f32 %v3869, %v3870
    %v3872 = vand.u32 %v3871, 4294901760
    %3873 = vmatpush1.msra.mxu0 %v3872
    %3874 = vmatprep.subr.mxu0 0.0
    %v3875 = vand.u32 %v30, 4294901760
    %v3876 = vsub.f32 %v30, %v3875
    %v3877 = vand.u32 %v3876, 4294901760
    %v3878 = vsub.f32 %v3876, %v3877
    %v3879 = vand.u32 %v3878, 4294901760
    %3880 = vmatpush1.msra.mxu0 %v3879
    %3881 = vmatprep.subr.mxu0 0.0
    %3882 = vmatpush1.msra.mxu0 0.0
    %3883 = vmatprep.subr.mxu0 0.0
    %3884 = vmatpush1.msra.mxu0 0.0
    %3885 = vmatprep.subr.mxu0 0.0
    %3886 = vmatpush1.msra.mxu0 0.0
    %3887 = vmatprep.subr.mxu0 0.0
    %3888 = vmatpush1.msra.mxu0 0.0
    %3889 = vmatprep.subr.mxu0 0.0
    %3890 = vmatpush1.msra.mxu0 0.0
    %3891 = vmatprep.subr.mxu0 0.0
    %3892 = vmatpush1.msra.mxu0 0.0
    %3893 = vmatprep.subr.mxu0 0.0
    %3894 = vmatpush1.msra.mxu0 0.0
    %3895 = vmatprep.subr.mxu0 0.0
    %3896 = vmatpush1.msra.mxu0 0.0
    %3897 = vmatprep.subr.mxu0 0.0
    %3898 = vmatpush1.msra.mxu0 0.0
    %3899 = vmatprep.subr.mxu0 0.0
    %3900 = vmatpush1.msra.mxu0 0.0
    %3901 = vmatprep.subr.mxu0 0.0
    %3902 = vmatpush1.msra.mxu0 0.0
    %3903 = vmatprep.subr.mxu0 0.0
    %3904 = vmatpush1.msra.mxu0 0.0
    %3905 = vmatprep.subr.mxu0 0.0
    %3906 = vmatpush1.msra.mxu0 0.0
    %3907 = vmatprep.subr.mxu0 0.0
    %3908 = vmatpush1.msra.mxu0 0.0
    %3909 = vmatprep.subr.mxu0 0.0
    %3910 = vmatpush1.msra.mxu0 0.0
    %3911 = vmatprep.subr.mxu0 0.0
    %3912 = vmatpush1.msra.mxu0 0.0
    %3913 = vmatprep.subr.mxu0 0.0
    %3914 = vmatpush1.msra.mxu0 0.0
    %3915 = vmatprep.subr.mxu0 0.0
    %3916 = vmatpush1.msra.mxu0 0.0
    %3917 = vmatprep.subr.mxu0 0.0
    %3918 = vmatpush1.msra.mxu0 0.0
    %3919 = vmatprep.subr.mxu0 0.0
    %3920 = vmatpush1.msra.mxu0 0.0
    %3921 = vmatprep.subr.mxu0 0.0
    %3922 = vmatpush1.msra.mxu0 0.0
    %3923 = vmatprep.subr.mxu0 0.0
    %3924 = vmatpush1.msra.mxu0 0.0
    %3925 = vmatprep.subr.mxu0 0.0
    %3926 = vmatpush1.msra.mxu0 0.0
    %3927 = vmatprep.subr.mxu0 0.0
    %3928 = vmatpush1.msra.mxu0 0.0
    %3929 = vmatprep.subr.mxu0 0.0
    %3930 = vmatpush1.msra.mxu0 0.0
    %3931 = vmatprep.subr.mxu0 0.0
    %3932 = vmatpush1.msra.mxu0 0.0
    %3933 = vmatprep.subr.mxu0 0.0
    %3934 = vmatpush1.msra.mxu0 0.0
    %3935 = vmatprep.subr.mxu0 0.0
    %3936 = vmatpush1.msra.mxu0 0.0
    %3937 = vmatprep.mubr.f32.mxu0 0.0
    %v3938 = vand.u32 %v3772, 4294901760
    %3939 = vmatmul.mubr.f32.gmra.mrb[0].mxu0 %v3938
    %v3940 = vpop.f32.mrb[0].mxu0
    %v3941 = vadd.f32 %v3850, %v3940
    %v3942 = vpop.f32.mrb[0].mxu0
    %3943 = vdwg.mxu0
    %3944 = vmatprep.subr.mxu0 0.0
    %v3945 = vand.u32 %v27, 4294901760
    %v3946 = vsub.f32 %v27, %v3945
    %3947 = vmatpush1.msra.mxu0 %v3946
    %3948 = vmatprep.subr.mxu0 0.0
    %v3949 = vand.u32 %v28, 4294901760
    %v3950 = vsub.f32 %v28, %v3949
    %3951 = vmatpush1.msra.mxu0 %v3950
    %3952 = vmatprep.subr.mxu0 0.0
    %v3953 = vand.u32 %v29, 4294901760
    %v3954 = vsub.f32 %v29, %v3953
    %3955 = vmatpush1.msra.mxu0 %v3954
    %3956 = vmatprep.subr.mxu0 0.0
    %v3957 = vand.u32 %v30, 4294901760
    %v3958 = vsub.f32 %v30, %v3957
    %3959 = vmatpush1.msra.mxu0 %v3958
    %3960 = vmatprep.subr.mxu0 0.0
    %3961 = vmatpush1.msra.mxu0 0.0
    %3962 = vmatprep.subr.mxu0 0.0
    %3963 = vmatpush1.msra.mxu0 0.0
    %3964 = vmatprep.subr.mxu0 0.0
    %3965 = vmatpush1.msra.mxu0 0.0
    %3966 = vmatprep.subr.mxu0 0.0
    %3967 = vmatpush1.msra.mxu0 0.0
    %3968 = vmatprep.subr.mxu0 0.0
    %3969 = vmatpush1.msra.mxu0 0.0
    %3970 = vmatprep.subr.mxu0 0.0
    %3971 = vmatpush1.msra.mxu0 0.0
    %3972 = vmatprep.subr.mxu0 0.0
    %3973 = vmatpush1.msra.mxu0 0.0
    %3974 = vmatprep.subr.mxu0 0.0
    %3975 = vmatpush1.msra.mxu0 0.0
    %3976 = vmatprep.subr.mxu0 0.0
    %3977 = vmatpush1.msra.mxu0 0.0
    %3978 = vmatprep.subr.mxu0 0.0
    %3979 = vmatpush1.msra.mxu0 0.0
    %3980 = vmatprep.subr.mxu0 0.0
    %3981 = vmatpush1.msra.mxu0 0.0
    %3982 = vmatprep.subr.mxu0 0.0
    %3983 = vmatpush1.msra.mxu0 0.0
    %3984 = vmatprep.subr.mxu0 0.0
    %3985 = vmatpush1.msra.mxu0 0.0
    %3986 = vmatprep.subr.mxu0 0.0
    %3987 = vmatpush1.msra.mxu0 0.0
    %3988 = vmatprep.subr.mxu0 0.0
    %3989 = vmatpush1.msra.mxu0 0.0
    %3990 = vmatprep.subr.mxu0 0.0
    %3991 = vmatpush1.msra.mxu0 0.0
    %3992 = vmatprep.subr.mxu0 0.0
    %3993 = vmatpush1.msra.mxu0 0.0
    %3994 = vmatprep.subr.mxu0 0.0
    %3995 = vmatpush1.msra.mxu0 0.0
    %3996 = vmatprep.subr.mxu0 0.0
    %3997 = vmatpush1.msra.mxu0 0.0
    %3998 = vmatprep.subr.mxu0 0.0
    %3999 = vmatpush1.msra.mxu0 0.0
    %4000 = vmatprep.subr.mxu0 0.0
    %4001 = vmatpush1.msra.mxu0 0.0
    %4002 = vmatprep.subr.mxu0 0.0
    %4003 = vmatpush1.msra.mxu0 0.0
    %4004 = vmatprep.subr.mxu0 0.0
    %4005 = vmatpush1.msra.mxu0 0.0
    %4006 = vmatprep.subr.mxu0 0.0
    %4007 = vmatpush1.msra.mxu0 0.0
    %4008 = vmatprep.subr.mxu0 0.0
    %4009 = vmatpush1.msra.mxu0 0.0
    %4010 = vmatprep.subr.mxu0 0.0
    %4011 = vmatpush1.msra.mxu0 0.0
    %4012 = vmatprep.subr.mxu0 0.0
    %4013 = vmatpush1.msra.mxu0 0.0
    %4014 = vmatprep.subr.mxu0 0.0
    %4015 = vmatpush1.msra.mxu0 0.0
    %4016 = vmatprep.mubr.f32.mxu0 0.0
    %v4017 = vand.u32 %v3772, 4294901760
    %v4018 = vsub.f32 %v3772, %v4017
    %4019 = vmatmul.mubr.f32.gmra.mrb[0].mxu0 %v4018
    %v4020 = vpop.f32.mrb[0].mxu0
    %v4021 = vadd.f32 %v3941, %v4020
    %v4022 = vpop.f32.mrb[0].mxu0
    %4023 = vdwg.mxu0
    %4024 = vmatprep.subr.mxu0 0.0
    %v4025 = vand.u32 %v27, 4294901760
    %4026 = vmatpush1.msra.mxu0 %v4025
    %4027 = vmatprep.subr.mxu0 0.0
    %v4028 = vand.u32 %v28, 4294901760
    %4029 = vmatpush1.msra.mxu0 %v4028
    %4030 = vmatprep.subr.mxu0 0.0
    %v4031 = vand.u32 %v29, 4294901760
    %4032 = vmatpush1.msra.mxu0 %v4031
    %4033 = vmatprep.subr.mxu0 0.0
    %v4034 = vand.u32 %v30, 4294901760
    %4035 = vmatpush1.msra.mxu0 %v4034
    %4036 = vmatprep.subr.mxu0 0.0
    %4037 = vmatpush1.msra.mxu0 0.0
    %4038 = vmatprep.subr.mxu0 0.0
    %4039 = vmatpush1.msra.mxu0 0.0
    %4040 = vmatprep.subr.mxu0 0.0
    %4041 = vmatpush1.msra.mxu0 0.0
    %4042 = vmatprep.subr.mxu0 0.0
    %4043 = vmatpush1.msra.mxu0 0.0
    %4044 = vmatprep.subr.mxu0 0.0
    %4045 = vmatpush1.msra.mxu0 0.0
    %4046 = vmatprep.subr.mxu0 0.0
    %4047 = vmatpush1.msra.mxu0 0.0
    %4048 = vmatprep.subr.mxu0 0.0
    %4049 = vmatpush1.msra.mxu0 0.0
    %4050 = vmatprep.subr.mxu0 0.0
    %4051 = vmatpush1.msra.mxu0 0.0
    %4052 = vmatprep.subr.mxu0 0.0
    %4053 = vmatpush1.msra.mxu0 0.0
    %4054 = vmatprep.subr.mxu0 0.0
    %4055 = vmatpush1.msra.mxu0 0.0
    %4056 = vmatprep.subr.mxu0 0.0
    %4057 = vmatpush1.msra.mxu0 0.0
    %4058 = vmatprep.subr.mxu0 0.0
    %4059 = vmatpush1.msra.mxu0 0.0
    %4060 = vmatprep.subr.mxu0 0.0
    %4061 = vmatpush1.msra.mxu0 0.0
    %4062 = vmatprep.subr.mxu0 0.0
    %4063 = vmatpush1.msra.mxu0 0.0
    %4064 = vmatprep.subr.mxu0 0.0
    %4065 = vmatpush1.msra.mxu0 0.0
    %4066 = vmatprep.subr.mxu0 0.0
    %4067 = vmatpush1.msra.mxu0 0.0
    %4068 = vmatprep.subr.mxu0 0.0
    %4069 = vmatpush1.msra.mxu0 0.0
    %4070 = vmatprep.subr.mxu0 0.0
    %4071 = vmatpush1.msra.mxu0 0.0
    %4072 = vmatprep.subr.mxu0 0.0
    %4073 = vmatpush1.msra.mxu0 0.0
    %4074 = vmatprep.subr.mxu0 0.0
    %4075 = vmatpush1.msra.mxu0 0.0
    %4076 = vmatprep.subr.mxu0 0.0
    %4077 = vmatpush1.msra.mxu0 0.0
    %4078 = vmatprep.subr.mxu0 0.0
    %4079 = vmatpush1.msra.mxu0 0.0
    %4080 = vmatprep.subr.mxu0 0.0
    %4081 = vmatpush1.msra.mxu0 0.0
    %4082 = vmatprep.subr.mxu0 0.0
    %4083 = vmatpush1.msra.mxu0 0.0
    %4084 = vmatprep.subr.mxu0 0.0
    %4085 = vmatpush1.msra.mxu0 0.0
    %4086 = vmatprep.subr.mxu0 0.0
    %4087 = vmatpush1.msra.mxu0 0.0
    %4088 = vmatprep.subr.mxu0 0.0
    %4089 = vmatpush1.msra.mxu0 0.0
    %4090 = vmatprep.subr.mxu0 0.0
    %4091 = vmatpush1.msra.mxu0 0.0
    %4092 = vmatprep.mubr.f32.mxu0 0.0
    %v4093 = vand.u32 %v3772, 4294901760
    %v4094 = vsub.f32 %v3772, %v4093
    %v4095 = vand.u32 %v4094, 4294901760
    %4096 = vmatmul.mubr.f32.gmra.mrb[0].mxu0 %v4095
    %v4097 = vpop.f32.mrb[0].mxu0
    %v4098 = vadd.f32 %v4021, %v4097
    %v4099 = vpop.f32.mrb[0].mxu0
    %4100 = vdwg.mxu0
    %4101 = vmatprep.subr.mxu0 0.0
    %v4102 = vand.u32 %v27, 4294901760
    %v4103 = vsub.f32 %v27, %v4102
    %v4104 = vand.u32 %v4103, 4294901760
    %4105 = vmatpush1.msra.mxu0 %v4104
    %4106 = vmatprep.subr.mxu0 0.0
    %v4107 = vand.u32 %v28, 4294901760
    %v4108 = vsub.f32 %v28, %v4107
    %v4109 = vand.u32 %v4108, 4294901760
    %4110 = vmatpush1.msra.mxu0 %v4109
    %4111 = vmatprep.subr.mxu0 0.0
    %v4112 = vand.u32 %v29, 4294901760
    %v4113 = vsub.f32 %v29, %v4112
    %v4114 = vand.u32 %v4113, 4294901760
    %4115 = vmatpush1.msra.mxu0 %v4114
    %4116 = vmatprep.subr.mxu0 0.0
    %v4117 = vand.u32 %v30, 4294901760
    %v4118 = vsub.f32 %v30, %v4117
    %v4119 = vand.u32 %v4118, 4294901760
    %4120 = vmatpush1.msra.mxu0 %v4119
    %4121 = vmatprep.subr.mxu0 0.0
    %4122 = vmatpush1.msra.mxu0 0.0
    %4123 = vmatprep.subr.mxu0 0.0
    %4124 = vmatpush1.msra.mxu0 0.0
    %4125 = vmatprep.subr.mxu0 0.0
    %4126 = vmatpush1.msra.mxu0 0.0
    %4127 = vmatprep.subr.mxu0 0.0
    %4128 = vmatpush1.msra.mxu0 0.0
    %4129 = vmatprep.subr.mxu0 0.0
    %4130 = vmatpush1.msra.mxu0 0.0
    %4131 = vmatprep.subr.mxu0 0.0
    %4132 = vmatpush1.msra.mxu0 0.0
    %4133 = vmatprep.subr.mxu0 0.0
    %4134 = vmatpush1.msra.mxu0 0.0
    %4135 = vmatprep.subr.mxu0 0.0
    %4136 = vmatpush1.msra.mxu0 0.0
    %4137 = vmatprep.subr.mxu0 0.0
    %4138 = vmatpush1.msra.mxu0 0.0
    %4139 = vmatprep.subr.mxu0 0.0
    %4140 = vmatpush1.msra.mxu0 0.0
    %4141 = vmatprep.subr.mxu0 0.0
    %4142 = vmatpush1.msra.mxu0 0.0
    %4143 = vmatprep.subr.mxu0 0.0
    %4144 = vmatpush1.msra.mxu0 0.0
    %4145 = vmatprep.subr.mxu0 0.0
    %4146 = vmatpush1.msra.mxu0 0.0
    %4147 = vmatprep.subr.mxu0 0.0
    %4148 = vmatpush1.msra.mxu0 0.0
    %4149 = vmatprep.subr.mxu0 0.0
    %4150 = vmatpush1.msra.mxu0 0.0
    %4151 = vmatprep.subr.mxu0 0.0
    %4152 = vmatpush1.msra.mxu0 0.0
    %4153 = vmatprep.subr.mxu0 0.0
    %4154 = vmatpush1.msra.mxu0 0.0
    %4155 = vmatprep.subr.mxu0 0.0
    %4156 = vmatpush1.msra.mxu0 0.0
    %4157 = vmatprep.subr.mxu0 0.0
    %4158 = vmatpush1.msra.mxu0 0.0
    %4159 = vmatprep.subr.mxu0 0.0
    %4160 = vmatpush1.msra.mxu0 0.0
    %4161 = vmatprep.subr.mxu0 0.0
    %4162 = vmatpush1.msra.mxu0 0.0
    %4163 = vmatprep.subr.mxu0 0.0
    %4164 = vmatpush1.msra.mxu0 0.0
    %4165 = vmatprep.subr.mxu0 0.0
    %4166 = vmatpush1.msra.mxu0 0.0
    %4167 = vmatprep.subr.mxu0 0.0
    %4168 = vmatpush1.msra.mxu0 0.0
    %4169 = vmatprep.subr.mxu0 0.0
    %4170 = vmatpush1.msra.mxu0 0.0
    %4171 = vmatprep.subr.mxu0 0.0
    %4172 = vmatpush1.msra.mxu0 0.0
    %4173 = vmatprep.subr.mxu0 0.0
    %4174 = vmatpush1.msra.mxu0 0.0
    %4175 = vmatprep.subr.mxu0 0.0
    %4176 = vmatpush1.msra.mxu0 0.0
    %4177 = vmatprep.mubr.f32.mxu0 0.0
    %v4178 = vand.u32 %v3772, 4294901760
    %4179 = vmatmul.mubr.f32.gmra.mrb[0].mxu0 %v4178
    %v4180 = vpop.f32.mrb[0].mxu0
    %v4181 = vadd.f32 %v4098, %v4180
    %v4182 = vpop.f32.mrb[0].mxu0
    %4183 = vdwg.mxu0
    %4184 = vmatprep.subr.mxu0 0.0
    %v4185 = vand.u32 %v27, 4294901760
    %4186 = vmatpush1.msra.mxu0 %v4185
    %4187 = vmatprep.subr.mxu0 0.0
    %v4188 = vand.u32 %v28, 4294901760
    %4189 = vmatpush1.msra.mxu0 %v4188
    %4190 = vmatprep.subr.mxu0 0.0
    %v4191 = vand.u32 %v29, 4294901760
    %4192 = vmatpush1.msra.mxu0 %v4191
    %4193 = vmatprep.subr.mxu0 0.0
    %v4194 = vand.u32 %v30, 4294901760
    %4195 = vmatpush1.msra.mxu0 %v4194
    %4196 = vmatprep.subr.mxu0 0.0
    %4197 = vmatpush1.msra.mxu0 0.0
    %4198 = vmatprep.subr.mxu0 0.0
    %4199 = vmatpush1.msra.mxu0 0.0
    %4200 = vmatprep.subr.mxu0 0.0
    %4201 = vmatpush1.msra.mxu0 0.0
    %4202 = vmatprep.subr.mxu0 0.0
    %4203 = vmatpush1.msra.mxu0 0.0
    %4204 = vmatprep.subr.mxu0 0.0
    %4205 = vmatpush1.msra.mxu0 0.0
    %4206 = vmatprep.subr.mxu0 0.0
    %4207 = vmatpush1.msra.mxu0 0.0
    %4208 = vmatprep.subr.mxu0 0.0
    %4209 = vmatpush1.msra.mxu0 0.0
    %4210 = vmatprep.subr.mxu0 0.0
    %4211 = vmatpush1.msra.mxu0 0.0
    %4212 = vmatprep.subr.mxu0 0.0
    %4213 = vmatpush1.msra.mxu0 0.0
    %4214 = vmatprep.subr.mxu0 0.0
    %4215 = vmatpush1.msra.mxu0 0.0
    %4216 = vmatprep.subr.mxu0 0.0
    %4217 = vmatpush1.msra.mxu0 0.0
    %4218 = vmatprep.subr.mxu0 0.0
    %4219 = vmatpush1.msra.mxu0 0.0
    %4220 = vmatprep.subr.mxu0 0.0
    %4221 = vmatpush1.msra.mxu0 0.0
    %4222 = vmatprep.subr.mxu0 0.0
    %4223 = vmatpush1.msra.mxu0 0.0
    %4224 = vmatprep.subr.mxu0 0.0
    %4225 = vmatpush1.msra.mxu0 0.0
    %4226 = vmatprep.subr.mxu0 0.0
    %4227 = vmatpush1.msra.mxu0 0.0
    %4228 = vmatprep.subr.mxu0 0.0
    %4229 = vmatpush1.msra.mxu0 0.0
    %4230 = vmatprep.subr.mxu0 0.0
    %4231 = vmatpush1.msra.mxu0 0.0
    %4232 = vmatprep.subr.mxu0 0.0
    %4233 = vmatpush1.msra.mxu0 0.0
    %4234 = vmatprep.subr.mxu0 0.0
    %4235 = vmatpush1.msra.mxu0 0.0
    %4236 = vmatprep.subr.mxu0 0.0
    %4237 = vmatpush1.msra.mxu0 0.0
    %4238 = vmatprep.subr.mxu0 0.0
    %4239 = vmatpush1.msra.mxu0 0.0
    %4240 = vmatprep.subr.mxu0 0.0
    %4241 = vmatpush1.msra.mxu0 0.0
    %4242 = vmatprep.subr.mxu0 0.0
    %4243 = vmatpush1.msra.mxu0 0.0
    %4244 = vmatprep.subr.mxu0 0.0
    %4245 = vmatpush1.msra.mxu0 0.0
    %4246 = vmatprep.subr.mxu0 0.0
    %4247 = vmatpush1.msra.mxu0 0.0
    %4248 = vmatprep.subr.mxu0 0.0
    %4249 = vmatpush1.msra.mxu0 0.0
    %4250 = vmatprep.subr.mxu0 0.0
    %4251 = vmatpush1.msra.mxu0 0.0
    %4252 = vmatprep.mubr.f32.mxu0 0.0
    %v4253 = vand.u32 %v3772, 4294901760
    %4254 = vmatmul.mubr.f32.gmra.mrb[0].mxu0 %v4253
    %v4255 = vpop.f32.mrb[0].mxu0
    %v4256 = vadd.f32 %v4181, %v4255
    %v4257 = vpop.f32.mrb[0].mxu0
    %4258 = vdwg.mxu0
    %v4259 = vadd.f32 %v627, %v4256
    %v4260 = vxor.u32 %v4259, 2147483648
    %v4261 = vmul.f32 %v4260, 1.442695
    %v4262 = vpow.pop %v4261
    %v4263 = vadd.f32 %v4262, 1.0
    %v4264 = vrcp.pop %v4263
    %v4265 = vmul.f32 1.0, %v4264
    %v4266 = vtanh.pop %v4259
    %v4267 = vmul.f32 %v4265, %v3755
    %4269 = vrot.lane.b32.xlu0 %v4266, 64
    %v4270 = vpop.permute.xlu0 %4269
    %v4272 = vmul.f32 %v4265, %v4270
    %4274 = vrot.lane.b32.xlu0 %v4272, 32
    %v4275 = vpop.permute.xlu0 %4274
    %v4277 = vadd.f32 %v4267, %v4275
    %v4278 = vtanh.pop %v4277
    %4280 = vrot.lane.b32.xlu0 %v4278, 64
    %v4281 = vpop.permute.xlu0 %4280
    %v4283 = vmul.f32 %v4265, %v4281
    %v4286 = vunpack.c.l.s4 1983009808
    %v4287 = vunpack.c.0.s8 %v4286
    %v4288 = vlaneseq
    %v4289 = vshrl.u32 %v4288, 7
    %v4290 = vsub.s32 %v4287, %v4289
    %v4291 = vrot.slane %v4283, %v4290
    %4292 = vrot.lane.b32.xlu0 %v4291, 32
    %v4293 = vpop.permute.xlu0 %4292
    %v4294 = vsel %vm638, %v4293, 0
    %4296 = vmatprep.subr.mxu0 0.0
    %v4297 = vand.u32 %v27, 4294901760
    %4298 = vmatpush1.msra.mxu0 %v4297
    %4299 = vmatprep.subr.mxu0 0.0
    %v4300 = vand.u32 %v28, 4294901760
    %4301 = vmatpush1.msra.mxu0 %v4300
    %4302 = vmatprep.subr.mxu0 0.0
    %v4303 = vand.u32 %v29, 4294901760
    %4304 = vmatpush1.msra.mxu0 %v4303
    %4305 = vmatprep.subr.mxu0 0.0
    %v4306 = vand.u32 %v30, 4294901760
    %4307 = vmatpush1.msra.mxu0 %v4306
    %4308 = vmatprep.subr.mxu0 0.0
    %4309 = vmatpush1.msra.mxu0 0.0
    %4310 = vmatprep.subr.mxu0 0.0
    %4311 = vmatpush1.msra.mxu0 0.0
    %4312 = vmatprep.subr.mxu0 0.0
    %4313 = vmatpush1.msra.mxu0 0.0
    %4314 = vmatprep.subr.mxu0 0.0
    %4315 = vmatpush1.msra.mxu0 0.0
    %4316 = vmatprep.subr.mxu0 0.0
    %4317 = vmatpush1.msra.mxu0 0.0
    %4318 = vmatprep.subr.mxu0 0.0
    %4319 = vmatpush1.msra.mxu0 0.0
    %4320 = vmatprep.subr.mxu0 0.0
    %4321 = vmatpush1.msra.mxu0 0.0
    %4322 = vmatprep.subr.mxu0 0.0
    %4323 = vmatpush1.msra.mxu0 0.0
    %4324 = vmatprep.subr.mxu0 0.0
    %4325 = vmatpush1.msra.mxu0 0.0
    %4326 = vmatprep.subr.mxu0 0.0
    %4327 = vmatpush1.msra.mxu0 0.0
    %4328 = vmatprep.subr.mxu0 0.0
    %4329 = vmatpush1.msra.mxu0 0.0
    %4330 = vmatprep.subr.mxu0 0.0
    %4331 = vmatpush1.msra.mxu0 0.0
    %4332 = vmatprep.subr.mxu0 0.0
    %4333 = vmatpush1.msra.mxu0 0.0
    %4334 = vmatprep.subr.mxu0 0.0
    %4335 = vmatpush1.msra.mxu0 0.0
    %4336 = vmatprep.subr.mxu0 0.0
    %4337 = vmatpush1.msra.mxu0 0.0
    %4338 = vmatprep.subr.mxu0 0.0
    %4339 = vmatpush1.msra.mxu0 0.0
    %4340 = vmatprep.subr.mxu0 0.0
    %4341 = vmatpush1.msra.mxu0 0.0
    %4342 = vmatprep.subr.mxu0 0.0
    %4343 = vmatpush1.msra.mxu0 0.0
    %4344 = vmatprep.subr.mxu0 0.0
    %4345 = vmatpush1.msra.mxu0 0.0
    %4346 = vmatprep.subr.mxu0 0.0
    %4347 = vmatpush1.msra.mxu0 0.0
    %4348 = vmatprep.subr.mxu0 0.0
    %4349 = vmatpush1.msra.mxu0 0.0
    %4350 = vmatprep.subr.mxu0 0.0
    %4351 = vmatpush1.msra.mxu0 0.0
    %4352 = vmatprep.subr.mxu0 0.0
    %4353 = vmatpush1.msra.mxu0 0.0
    %4354 = vmatprep.subr.mxu0 0.0
    %4355 = vmatpush1.msra.mxu0 0.0
    %4356 = vmatprep.subr.mxu0 0.0
    %4357 = vmatpush1.msra.mxu0 0.0
    %4358 = vmatprep.subr.mxu0 0.0
    %4359 = vmatpush1.msra.mxu0 0.0
    %4360 = vmatprep.subr.mxu0 0.0
    %4361 = vmatpush1.msra.mxu0 0.0
    %4362 = vmatprep.subr.mxu0 0.0
    %4363 = vmatpush1.msra.mxu0 0.0
    %4364 = vmatprep.mubr.f32.mxu0 0.0
    %v4365 = vand.u32 %v4294, 4294901760
    %v4366 = vsub.f32 %v4294, %v4365
    %v4367 = vand.u32 %v4366, 4294901760
    %v4368 = vsub.f32 %v4366, %v4367
    %v4369 = vand.u32 %v4368, 4294901760
    %4370 = vmatmul.mubr.f32.gmra.mrb[0].mxu0 %v4369
    %v4371 = vpop.f32.mrb[0].mxu0
    %v4372 = vadd.f32 0.0, %v4371
    %v4373 = vpop.f32.mrb[0].mxu0
    %4374 = vdwg.mxu0
    %4375 = vmatprep.subr.mxu0 0.0
    %v4376 = vand.u32 %v27, 4294901760
    %v4377 = vsub.f32 %v27, %v4376
    %v4378 = vand.u32 %v4377, 4294901760
    %v4379 = vsub.f32 %v4377, %v4378
    %v4380 = vand.u32 %v4379, 4294901760
    %4381 = vmatpush1.msra.mxu0 %v4380
    %4382 = vmatprep.subr.mxu0 0.0
    %v4383 = vand.u32 %v28, 4294901760
    %v4384 = vsub.f32 %v28, %v4383
    %v4385 = vand.u32 %v4384, 4294901760
    %v4386 = vsub.f32 %v4384, %v4385
    %v4387 = vand.u32 %v4386, 4294901760
    %4388 = vmatpush1.msra.mxu0 %v4387
    %4389 = vmatprep.subr.mxu0 0.0
    %v4390 = vand.u32 %v29, 4294901760
    %v4391 = vsub.f32 %v29, %v4390
    %v4392 = vand.u32 %v4391, 4294901760
    %v4393 = vsub.f32 %v4391, %v4392
    %v4394 = vand.u32 %v4393, 4294901760
    %4395 = vmatpush1.msra.mxu0 %v4394
    %4396 = vmatprep.subr.mxu0 0.0
    %v4397 = vand.u32 %v30, 4294901760
    %v4398 = vsub.f32 %v30, %v4397
    %v4399 = vand.u32 %v4398, 4294901760
    %v4400 = vsub.f32 %v4398, %v4399
    %v4401 = vand.u32 %v4400, 4294901760
    %4402 = vmatpush1.msra.mxu0 %v4401
    %4403 = vmatprep.subr.mxu0 0.0
    %4404 = vmatpush1.msra.mxu0 0.0
    %4405 = vmatprep.subr.mxu0 0.0
    %4406 = vmatpush1.msra.mxu0 0.0
    %4407 = vmatprep.subr.mxu0 0.0
    %4408 = vmatpush1.msra.mxu0 0.0
    %4409 = vmatprep.subr.mxu0 0.0
    %4410 = vmatpush1.msra.mxu0 0.0
    %4411 = vmatprep.subr.mxu0 0.0
    %4412 = vmatpush1.msra.mxu0 0.0
    %4413 = vmatprep.subr.mxu0 0.0
    %4414 = vmatpush1.msra.mxu0 0.0
    %4415 = vmatprep.subr.mxu0 0.0
    %4416 = vmatpush1.msra.mxu0 0.0
    %4417 = vmatprep.subr.mxu0 0.0
    %4418 = vmatpush1.msra.mxu0 0.0
    %4419 = vmatprep.subr.mxu0 0.0
    %4420 = vmatpush1.msra.mxu0 0.0
    %4421 = vmatprep.subr.mxu0 0.0
    %4422 = vmatpush1.msra.mxu0 0.0
    %4423 = vmatprep.subr.mxu0 0.0
    %4424 = vmatpush1.msra.mxu0 0.0
    %4425 = vmatprep.subr.mxu0 0.0
    %4426 = vmatpush1.msra.mxu0 0.0
    %4427 = vmatprep.subr.mxu0 0.0
    %4428 = vmatpush1.msra.mxu0 0.0
    %4429 = vmatprep.subr.mxu0 0.0
    %4430 = vmatpush1.msra.mxu0 0.0
    %4431 = vmatprep.subr.mxu0 0.0
    %4432 = vmatpush1.msra.mxu0 0.0
    %4433 = vmatprep.subr.mxu0 0.0
    %4434 = vmatpush1.msra.mxu0 0.0
    %4435 = vmatprep.subr.mxu0 0.0
    %4436 = vmatpush1.msra.mxu0 0.0
    %4437 = vmatprep.subr.mxu0 0.0
    %4438 = vmatpush1.msra.mxu0 0.0
    %4439 = vmatprep.subr.mxu0 0.0
    %4440 = vmatpush1.msra.mxu0 0.0
    %4441 = vmatprep.subr.mxu0 0.0
    %4442 = vmatpush1.msra.mxu0 0.0
    %4443 = vmatprep.subr.mxu0 0.0
    %4444 = vmatpush1.msra.mxu0 0.0
    %4445 = vmatprep.subr.mxu0 0.0
    %4446 = vmatpush1.msra.mxu0 0.0
    %4447 = vmatprep.subr.mxu0 0.0
    %4448 = vmatpush1.msra.mxu0 0.0
    %4449 = vmatprep.subr.mxu0 0.0
    %4450 = vmatpush1.msra.mxu0 0.0
    %4451 = vmatprep.subr.mxu0 0.0
    %4452 = vmatpush1.msra.mxu0 0.0
    %4453 = vmatprep.subr.mxu0 0.0
    %4454 = vmatpush1.msra.mxu0 0.0
    %4455 = vmatprep.subr.mxu0 0.0
    %4456 = vmatpush1.msra.mxu0 0.0
    %4457 = vmatprep.subr.mxu0 0.0
    %4458 = vmatpush1.msra.mxu0 0.0
    %4459 = vmatprep.mubr.f32.mxu0 0.0
    %v4460 = vand.u32 %v4294, 4294901760
    %4461 = vmatmul.mubr.f32.gmra.mrb[0].mxu0 %v4460
    %v4462 = vpop.f32.mrb[0].mxu0
    %v4463 = vadd.f32 %v4372, %v4462
    %v4464 = vpop.f32.mrb[0].mxu0
    %4465 = vdwg.mxu0
    %4466 = vmatprep.subr.mxu0 0.0
    %v4467 = vand.u32 %v27, 4294901760
    %v4468 = vsub.f32 %v27, %v4467
    %4469 = vmatpush1.msra.mxu0 %v4468
    %4470 = vmatprep.subr.mxu0 0.0
    %v4471 = vand.u32 %v28, 4294901760
    %v4472 = vsub.f32 %v28, %v4471
    %4473 = vmatpush1.msra.mxu0 %v4472
    %4474 = vmatprep.subr.mxu0 0.0
    %v4475 = vand.u32 %v29, 4294901760
    %v4476 = vsub.f32 %v29, %v4475
    %4477 = vmatpush1.msra.mxu0 %v4476
    %4478 = vmatprep.subr.mxu0 0.0
    %v4479 = vand.u32 %v30, 4294901760
    %v4480 = vsub.f32 %v30, %v4479
    %4481 = vmatpush1.msra.mxu0 %v4480
    %4482 = vmatprep.subr.mxu0 0.0
    %4483 = vmatpush1.msra.mxu0 0.0
    %4484 = vmatprep.subr.mxu0 0.0
    %4485 = vmatpush1.msra.mxu0 0.0
    %4486 = vmatprep.subr.mxu0 0.0
    %4487 = vmatpush1.msra.mxu0 0.0
    %4488 = vmatprep.subr.mxu0 0.0
    %4489 = vmatpush1.msra.mxu0 0.0
    %4490 = vmatprep.subr.mxu0 0.0
    %4491 = vmatpush1.msra.mxu0 0.0
    %4492 = vmatprep.subr.mxu0 0.0
    %4493 = vmatpush1.msra.mxu0 0.0
    %4494 = vmatprep.subr.mxu0 0.0
    %4495 = vmatpush1.msra.mxu0 0.0
    %4496 = vmatprep.subr.mxu0 0.0
    %4497 = vmatpush1.msra.mxu0 0.0
    %4498 = vmatprep.subr.mxu0 0.0
    %4499 = vmatpush1.msra.mxu0 0.0
    %4500 = vmatprep.subr.mxu0 0.0
    %4501 = vmatpush1.msra.mxu0 0.0
    %4502 = vmatprep.subr.mxu0 0.0
    %4503 = vmatpush1.msra.mxu0 0.0
    %4504 = vmatprep.subr.mxu0 0.0
    %4505 = vmatpush1.msra.mxu0 0.0
    %4506 = vmatprep.subr.mxu0 0.0
    %4507 = vmatpush1.msra.mxu0 0.0
    %4508 = vmatprep.subr.mxu0 0.0
    %4509 = vmatpush1.msra.mxu0 0.0
    %4510 = vmatprep.subr.mxu0 0.0
    %4511 = vmatpush1.msra.mxu0 0.0
    %4512 = vmatprep.subr.mxu0 0.0
    %4513 = vmatpush1.msra.mxu0 0.0
    %4514 = vmatprep.subr.mxu0 0.0
    %4515 = vmatpush1.msra.mxu0 0.0
    %4516 = vmatprep.subr.mxu0 0.0
    %4517 = vmatpush1.msra.mxu0 0.0
    %4518 = vmatprep.subr.mxu0 0.0
    %4519 = vmatpush1.msra.mxu0 0.0
    %4520 = vmatprep.subr.mxu0 0.0
    %4521 = vmatpush1.msra.mxu0 0.0
    %4522 = vmatprep.subr.mxu0 0.0
    %4523 = vmatpush1.msra.mxu0 0.0
    %4524 = vmatprep.subr.mxu0 0.0
    %4525 = vmatpush1.msra.mxu0 0.0
    %4526 = vmatprep.subr.mxu0 0.0
    %4527 = vmatpush1.msra.mxu0 0.0
    %4528 = vmatprep.subr.mxu0 0.0
    %4529 = vmatpush1.msra.mxu0 0.0
    %4530 = vmatprep.subr.mxu0 0.0
    %4531 = vmatpush1.msra.mxu0 0.0
    %4532 = vmatprep.subr.mxu0 0.0
    %4533 = vmatpush1.msra.mxu0 0.0
    %4534 = vmatprep.subr.mxu0 0.0
    %4535 = vmatpush1.msra.mxu0 0.0
    %4536 = vmatprep.subr.mxu0 0.0
    %4537 = vmatpush1.msra.mxu0 0.0
    %4538 = vmatprep.mubr.f32.mxu0 0.0
    %v4539 = vand.u32 %v4294, 4294901760
    %v4540 = vsub.f32 %v4294, %v4539
    %4541 = vmatmul.mubr.f32.gmra.mrb[0].mxu0 %v4540
    %v4542 = vpop.f32.mrb[0].mxu0
    %v4543 = vadd.f32 %v4463, %v4542
    %v4544 = vpop.f32.mrb[0].mxu0
    %4545 = vdwg.mxu0
    %4546 = vmatprep.subr.mxu0 0.0
    %v4547 = vand.u32 %v27, 4294901760
    %4548 = vmatpush1.msra.mxu0 %v4547
    %4549 = vmatprep.subr.mxu0 0.0
    %v4550 = vand.u32 %v28, 4294901760
    %4551 = vmatpush1.msra.mxu0 %v4550
    %4552 = vmatprep.subr.mxu0 0.0
    %v4553 = vand.u32 %v29, 4294901760
    %4554 = vmatpush1.msra.mxu0 %v4553
    %4555 = vmatprep.subr.mxu0 0.0
    %v4556 = vand.u32 %v30, 4294901760
    %4557 = vmatpush1.msra.mxu0 %v4556
    %4558 = vmatprep.subr.mxu0 0.0
    %4559 = vmatpush1.msra.mxu0 0.0
    %4560 = vmatprep.subr.mxu0 0.0
    %4561 = vmatpush1.msra.mxu0 0.0
    %4562 = vmatprep.subr.mxu0 0.0
    %4563 = vmatpush1.msra.mxu0 0.0
    %4564 = vmatprep.subr.mxu0 0.0
    %4565 = vmatpush1.msra.mxu0 0.0
    %4566 = vmatprep.subr.mxu0 0.0
    %4567 = vmatpush1.msra.mxu0 0.0
    %4568 = vmatprep.subr.mxu0 0.0
    %4569 = vmatpush1.msra.mxu0 0.0
    %4570 = vmatprep.subr.mxu0 0.0
    %4571 = vmatpush1.msra.mxu0 0.0
    %4572 = vmatprep.subr.mxu0 0.0
    %4573 = vmatpush1.msra.mxu0 0.0
    %4574 = vmatprep.subr.mxu0 0.0
    %4575 = vmatpush1.msra.mxu0 0.0
    %4576 = vmatprep.subr.mxu0 0.0
    %4577 = vmatpush1.msra.mxu0 0.0
    %4578 = vmatprep.subr.mxu0 0.0
    %4579 = vmatpush1.msra.mxu0 0.0
    %4580 = vmatprep.subr.mxu0 0.0
    %4581 = vmatpush1.msra.mxu0 0.0
    %4582 = vmatprep.subr.mxu0 0.0
    %4583 = vmatpush1.msra.mxu0 0.0
    %4584 = vmatprep.subr.mxu0 0.0
    %4585 = vmatpush1.msra.mxu0 0.0
    %4586 = vmatprep.subr.mxu0 0.0
    %4587 = vmatpush1.msra.mxu0 0.0
    %4588 = vmatprep.subr.mxu0 0.0
    %4589 = vmatpush1.msra.mxu0 0.0
    %4590 = vmatprep.subr.mxu0 0.0
    %4591 = vmatpush1.msra.mxu0 0.0
    %4592 = vmatprep.subr.mxu0 0.0
    %4593 = vmatpush1.msra.mxu0 0.0
    %4594 = vmatprep.subr.mxu0 0.0
    %4595 = vmatpush1.msra.mxu0 0.0
    %4596 = vmatprep.subr.mxu0 0.0
    %4597 = vmatpush1.msra.mxu0 0.0
    %4598 = vmatprep.subr.mxu0 0.0
    %4599 = vmatpush1.msra.mxu0 0.0
    %4600 = vmatprep.subr.mxu0 0.0
    %4601 = vmatpush1.msra.mxu0 0.0
    %4602 = vmatprep.subr.mxu0 0.0
    %4603 = vmatpush1.msra.mxu0 0.0
    %4604 = vmatprep.subr.mxu0 0.0
    %4605 = vmatpush1.msra.mxu0 0.0
    %4606 = vmatprep.subr.mxu0 0.0
    %4607 = vmatpush1.msra.mxu0 0.0
    %4608 = vmatprep.subr.mxu0 0.0
    %4609 = vmatpush1.msra.mxu0 0.0
    %4610 = vmatprep.subr.mxu0 0.0
    %4611 = vmatpush1.msra.mxu0 0.0
    %4612 = vmatprep.subr.mxu0 0.0
    %4613 = vmatpush1.msra.mxu0 0.0
    %4614 = vmatprep.mubr.f32.mxu0 0.0
    %v4615 = vand.u32 %v4294, 4294901760
    %v4616 = vsub.f32 %v4294, %v4615
    %v4617 = vand.u32 %v4616, 4294901760
    %4618 = vmatmul.mubr.f32.gmra.mrb[0].mxu0 %v4617
    %v4619 = vpop.f32.mrb[0].mxu0
    %v4620 = vadd.f32 %v4543, %v4619
    %v4621 = vpop.f32.mrb[0].mxu0
    %4622 = vdwg.mxu0
    %4623 = vmatprep.subr.mxu0 0.0
    %v4624 = vand.u32 %v27, 4294901760
    %v4625 = vsub.f32 %v27, %v4624
    %v4626 = vand.u32 %v4625, 4294901760
    %4627 = vmatpush1.msra.mxu0 %v4626
    %4628 = vmatprep.subr.mxu0 0.0
    %v4629 = vand.u32 %v28, 4294901760
    %v4630 = vsub.f32 %v28, %v4629
    %v4631 = vand.u32 %v4630, 4294901760
    %4632 = vmatpush1.msra.mxu0 %v4631
    %4633 = vmatprep.subr.mxu0 0.0
    %v4634 = vand.u32 %v29, 4294901760
    %v4635 = vsub.f32 %v29, %v4634
    %v4636 = vand.u32 %v4635, 4294901760
    %4637 = vmatpush1.msra.mxu0 %v4636
    %4638 = vmatprep.subr.mxu0 0.0
    %v4639 = vand.u32 %v30, 4294901760
    %v4640 = vsub.f32 %v30, %v4639
    %v4641 = vand.u32 %v4640, 4294901760
    %4642 = vmatpush1.msra.mxu0 %v4641
    %4643 = vmatprep.subr.mxu0 0.0
    %4644 = vmatpush1.msra.mxu0 0.0
    %4645 = vmatprep.subr.mxu0 0.0
    %4646 = vmatpush1.msra.mxu0 0.0
    %4647 = vmatprep.subr.mxu0 0.0
    %4648 = vmatpush1.msra.mxu0 0.0
    %4649 = vmatprep.subr.mxu0 0.0
    %4650 = vmatpush1.msra.mxu0 0.0
    %4651 = vmatprep.subr.mxu0 0.0
    %4652 = vmatpush1.msra.mxu0 0.0
    %4653 = vmatprep.subr.mxu0 0.0
    %4654 = vmatpush1.msra.mxu0 0.0
    %4655 = vmatprep.subr.mxu0 0.0
    %4656 = vmatpush1.msra.mxu0 0.0
    %4657 = vmatprep.subr.mxu0 0.0
    %4658 = vmatpush1.msra.mxu0 0.0
    %4659 = vmatprep.subr.mxu0 0.0
    %4660 = vmatpush1.msra.mxu0 0.0
    %4661 = vmatprep.subr.mxu0 0.0
    %4662 = vmatpush1.msra.mxu0 0.0
    %4663 = vmatprep.subr.mxu0 0.0
    %4664 = vmatpush1.msra.mxu0 0.0
    %4665 = vmatprep.subr.mxu0 0.0
    %4666 = vmatpush1.msra.mxu0 0.0
    %4667 = vmatprep.subr.mxu0 0.0
    %4668 = vmatpush1.msra.mxu0 0.0
    %4669 = vmatprep.subr.mxu0 0.0
    %4670 = vmatpush1.msra.mxu0 0.0
    %4671 = vmatprep.subr.mxu0 0.0
    %4672 = vmatpush1.msra.mxu0 0.0
    %4673 = vmatprep.subr.mxu0 0.0
    %4674 = vmatpush1.msra.mxu0 0.0
    %4675 = vmatprep.subr.mxu0 0.0
    %4676 = vmatpush1.msra.mxu0 0.0
    %4677 = vmatprep.subr.mxu0 0.0
    %4678 = vmatpush1.msra.mxu0 0.0
    %4679 = vmatprep.subr.mxu0 0.0
    %4680 = vmatpush1.msra.mxu0 0.0
    %4681 = vmatprep.subr.mxu0 0.0
    %4682 = vmatpush1.msra.mxu0 0.0
    %4683 = vmatprep.subr.mxu0 0.0
    %4684 = vmatpush1.msra.mxu0 0.0
    %4685 = vmatprep.subr.mxu0 0.0
    %4686 = vmatpush1.msra.mxu0 0.0
    %4687 = vmatprep.subr.mxu0 0.0
    %4688 = vmatpush1.msra.mxu0 0.0
    %4689 = vmatprep.subr.mxu0 0.0
    %4690 = vmatpush1.msra.mxu0 0.0
    %4691 = vmatprep.subr.mxu0 0.0
    %4692 = vmatpush1.msra.mxu0 0.0
    %4693 = vmatprep.subr.mxu0 0.0
    %4694 = vmatpush1.msra.mxu0 0.0
    %4695 = vmatprep.subr.mxu0 0.0
    %4696 = vmatpush1.msra.mxu0 0.0
    %4697 = vmatprep.subr.mxu0 0.0
    %4698 = vmatpush1.msra.mxu0 0.0
    %4699 = vmatprep.mubr.f32.mxu0 0.0
    %v4700 = vand.u32 %v4294, 4294901760
    %4701 = vmatmul.mubr.f32.gmra.mrb[0].mxu0 %v4700
    %v4702 = vpop.f32.mrb[0].mxu0
    %v4703 = vadd.f32 %v4620, %v4702
    %v4704 = vpop.f32.mrb[0].mxu0
    %4705 = vdwg.mxu0
    %4706 = vmatprep.subr.mxu0 0.0
    %v4707 = vand.u32 %v27, 4294901760
    %4708 = vmatpush1.msra.mxu0 %v4707
    %4709 = vmatprep.subr.mxu0 0.0
    %v4710 = vand.u32 %v28, 4294901760
    %4711 = vmatpush1.msra.mxu0 %v4710
    %4712 = vmatprep.subr.mxu0 0.0
    %v4713 = vand.u32 %v29, 4294901760
    %4714 = vmatpush1.msra.mxu0 %v4713
    %4715 = vmatprep.subr.mxu0 0.0
    %v4716 = vand.u32 %v30, 4294901760
    %4717 = vmatpush1.msra.mxu0 %v4716
    %4718 = vmatprep.subr.mxu0 0.0
    %4719 = vmatpush1.msra.mxu0 0.0
    %4720 = vmatprep.subr.mxu0 0.0
    %4721 = vmatpush1.msra.mxu0 0.0
    %4722 = vmatprep.subr.mxu0 0.0
    %4723 = vmatpush1.msra.mxu0 0.0
    %4724 = vmatprep.subr.mxu0 0.0
    %4725 = vmatpush1.msra.mxu0 0.0
    %4726 = vmatprep.subr.mxu0 0.0
    %4727 = vmatpush1.msra.mxu0 0.0
    %4728 = vmatprep.subr.mxu0 0.0
    %4729 = vmatpush1.msra.mxu0 0.0
    %4730 = vmatprep.subr.mxu0 0.0
    %4731 = vmatpush1.msra.mxu0 0.0
    %4732 = vmatprep.subr.mxu0 0.0
    %4733 = vmatpush1.msra.mxu0 0.0
    %4734 = vmatprep.subr.mxu0 0.0
    %4735 = vmatpush1.msra.mxu0 0.0
    %4736 = vmatprep.subr.mxu0 0.0
    %4737 = vmatpush1.msra.mxu0 0.0
    %4738 = vmatprep.subr.mxu0 0.0
    %4739 = vmatpush1.msra.mxu0 0.0
    %4740 = vmatprep.subr.mxu0 0.0
    %4741 = vmatpush1.msra.mxu0 0.0
    %4742 = vmatprep.subr.mxu0 0.0
    %4743 = vmatpush1.msra.mxu0 0.0
    %4744 = vmatprep.subr.mxu0 0.0
    %4745 = vmatpush1.msra.mxu0 0.0
    %4746 = vmatprep.subr.mxu0 0.0
    %4747 = vmatpush1.msra.mxu0 0.0
    %4748 = vmatprep.subr.mxu0 0.0
    %4749 = vmatpush1.msra.mxu0 0.0
    %4750 = vmatprep.subr.mxu0 0.0
    %4751 = vmatpush1.msra.mxu0 0.0
    %4752 = vmatprep.subr.mxu0 0.0
    %4753 = vmatpush1.msra.mxu0 0.0
    %4754 = vmatprep.subr.mxu0 0.0
    %4755 = vmatpush1.msra.mxu0 0.0
    %4756 = vmatprep.subr.mxu0 0.0
    %4757 = vmatpush1.msra.mxu0 0.0
    %4758 = vmatprep.subr.mxu0 0.0
    %4759 = vmatpush1.msra.mxu0 0.0
    %4760 = vmatprep.subr.mxu0 0.0
    %4761 = vmatpush1.msra.mxu0 0.0
    %4762 = vmatprep.subr.mxu0 0.0
    %4763 = vmatpush1.msra.mxu0 0.0
    %4764 = vmatprep.subr.mxu0 0.0
    %4765 = vmatpush1.msra.mxu0 0.0
    %4766 = vmatprep.subr.mxu0 0.0
    %4767 = vmatpush1.msra.mxu0 0.0
    %4768 = vmatprep.subr.mxu0 0.0
    %4769 = vmatpush1.msra.mxu0 0.0
    %4770 = vmatprep.subr.mxu0 0.0
    %4771 = vmatpush1.msra.mxu0 0.0
    %4772 = vmatprep.subr.mxu0 0.0
    %4773 = vmatpush1.msra.mxu0 0.0
    %4774 = vmatprep.mubr.f32.mxu0 0.0
    %v4775 = vand.u32 %v4294, 4294901760
    %4776 = vmatmul.mubr.f32.gmra.mrb[0].mxu0 %v4775
    %v4777 = vpop.f32.mrb[0].mxu0
    %v4778 = vadd.f32 %v4703, %v4777
    %v4779 = vpop.f32.mrb[0].mxu0
    %4780 = vdwg.mxu0
    %v4781 = vadd.f32 %v629, %v4778
    %v4782 = vxor.u32 %v4781, 2147483648
    %v4783 = vmul.f32 %v4782, 1.442695
    %v4784 = vpow.pop %v4783
    %v4785 = vadd.f32 %v4784, 1.0
    %v4786 = vrcp.pop %v4785
    %v4787 = vmul.f32 1.0, %v4786
    %v4788 = vtanh.pop %v4781
    %v4789 = vmul.f32 %v4787, %v4277
    %4791 = vrot.lane.b32.xlu0 %v4788, 64
    %v4792 = vpop.permute.xlu0 %4791
    %v4794 = vmul.f32 %v4787, %v4792
    %4796 = vrot.lane.b32.xlu0 %v4794, 32
    %v4797 = vpop.permute.xlu0 %4796
    %v4799 = vadd.f32 %v4789, %v4797
    %v4800 = vtanh.pop %v4799
    %4802 = vrot.lane.b32.xlu0 %v4800, 64
    %v4803 = vpop.permute.xlu0 %4802
    %v4805 = vmul.f32 %v4787, %v4803
    %v4806 = vlaneseq
    %v4807 = vshrl.u32 %v4806, 7
    %v4808 = vsub.s32 0, %v4807
    %v4809 = vrot.slane %v32, %v4808
    %v4812 = vunpack.c.l.s4 1983009808
    %v4813 = vunpack.c.0.s8 %v4812
    %v4814 = vlaneseq
    %v4815 = vshrl.u32 %v4814, 7
    %v4816 = vsub.s32 %v4813, %v4815
    %v4817 = vrot.slane %v4809, %v4816
    %4818 = vrot.lane.b32.xlu0 %v4817, 96
    %v4819 = vpop.permute.xlu0 %4818
    %v4821 = vmul.f32 %v4805, %v4819
    %v4824 = vunpack.c.l.s4 1983009808
    %v4825 = vunpack.c.0.s8 %v4824
    %v4826 = vlaneseq
    %v4827 = vshrl.u32 %v4826, 7
    %v4828 = vsub.s32 %v4825, %v4827
    %v4829 = vrot.slane %v4821, %v4828
    %4830 = vrot.lane.b32.xlu0 %v4829, 32
    %v4831 = vpop.permute.xlu0 %4830
    %vm4833 = vcmask 254976
    %v4834 = vsel %vm4833, %v4831, 0.0
    %4835 = vadd.xlane.f32.xlu0 %v4834
    %v4836 = vpop.xlane.xlu0 %4835
    %v4837 = vadd.f32 %v4836, %v4809
    %4839 = vrot.lane.b32.xlu0 %v4837, 96
    %v4840 = vpop.permute.xlu0 %4839
    %vm4842 = vcmask 1024
    %4843 = vst.msk [vmem:[%s2] sm:$0x3] %vm4842, %v4840
    // Predicated region
    $region14: #{lstm_model_forward.1} parent=1 // pred_check
      _
    $region15: #{lstm_model_forward.1} parent=1 // pred_check_branch
      %4845 = sbr.rel (0) target = $region17
    $region16: #{lstm_model_forward.1} parent=1 // pred_region
      _
    $region17: #{lstm_model_forward.1} parent=1 // pred_fallthru
      _
    // Predicated region
    $region18: #{lstm_model_forward.1} parent=1 // pred_check
      _
    $region19: #{lstm_model_forward.1} parent=1 // pred_check_branch
      %4847 = sbr.rel (0) target = $region21
    $region20: #{lstm_model_forward.1} parent=1 // pred_region
      _
    $region21: #{lstm_model_forward.1} parent=1 // pred_fallthru
      _
    %4848 = vsyncpa [#allocation3], 1

</llo_original>
